<compile_context>
chip_gen: v7x
topology: tpu7x:2x2x1
jax: 0.10.0
libtpu: 0.0.40
codegen_flags: <defaults>
</compile_context>

<pallas_src>
import math
import numpy as np
import jax
import jax.numpy as jnp
from jax.experimental import pallas as pl
from jax.experimental.pallas import tpu as pltpu

# ---------------- config (small, consistent with the module) ----------------
B, S = 2, 8            # batch, sequence length
INPUT_SIZE = 16        # keypoint feature size
D_MODEL = 32
NHEAD = 4
NUM_LAYERS = 2
NUM_CLASSES = 5
DH = D_MODEL // NHEAD
DFF = 4 * D_MODEL
EPS = 1e-5             # nn.LayerNorm default
NC_PAD = 128           # lane-dense (padded) classifier output width
OUT_ROWS = 8           # sublane-padded output rows
F32 = jnp.float32


def _layernorm_ref(x, w, b):
    mu = jnp.mean(x, axis=-1, keepdims=True)
    var = jnp.mean((x - mu) ** 2, axis=-1, keepdims=True)
    return (x - mu) * jax.lax.rsqrt(var + EPS) * w + b


def _layernorm_1pass(x, w, b):
    # single-pass stats: the two reductions are independent -> back-to-back XLU
    mu = jnp.mean(x, axis=-1, keepdims=True)
    msq = jnp.mean(x * x, axis=-1, keepdims=True)
    var = msq - mu * mu
    return (x - mu) * jax.lax.rsqrt(var + EPS) * w + b


# ------------------------------- Pallas kernel -------------------------------
def transformer_kernel(src_ref, add_ref, w_in_ref, wqkv_ref, bqkv_ref,
                       wo_ref, vecs_ref, w1_ref, b1_ref, w2_ref, wcb_ref,
                       out_ref):
    R = B * S

    # input projection (sqrt(d_model) pre-folded) + per-batch positional row
    h = jnp.dot(src_ref[...], w_in_ref[...], preferred_element_type=F32)
    h = h + add_ref[...]                                   # (R, D)

    def split_heads(qkv, off):
        # take the D_MODEL-wide block at lane offset `off`, head-major leading dim
        t = jnp.stack([qkv[:, off + n * DH: off + (n + 1) * DH]
                       for n in range(NHEAD)], axis=0)     # (NHEAD, R, DH)
        return t.reshape(NHEAD * B, S, DH)                 # leading-dim reshape only

    for l in range(NUM_LAYERS):
        # ---- multi-head self attention (post-LN encoder layer) ----
        # fused QKV: one lane-dense (R,32)x(32,96) MXU push
        qkv = jnp.dot(h, wqkv_ref[l], preferred_element_type=F32) + bqkv_ref[l]

        qh = split_heads(qkv, 0)                           # (NHEAD*B, S, DH)
        kh = split_heads(qkv, D_MODEL)
        vh = split_heads(qkv, 2 * D_MODEL)

        # scores (scaling 1/sqrt(DH) pre-folded into Wq/bq)
        s = jnp.einsum('bqd,bkd->bqk', qh, kh, preferred_element_type=F32)
        m = jnp.max(s, axis=-1, keepdims=True)
        e = jnp.exp(s - m)
        denom = jnp.sum(e, axis=-1, keepdims=True)
        p = e * pl.reciprocal(denom, approx=True)          # EUP approx reciprocal
        ctx = jnp.einsum('bqk,bkd->bqd', p, vh, preferred_element_type=F32)

        # concat heads back into lanes -> single (R,32)x(32,32) output projection
        ctx = ctx.reshape(NHEAD, R, DH)
        ctx_cat = jnp.concatenate([ctx[n] for n in range(NHEAD)], axis=-1)
        attn = jnp.dot(ctx_cat, wo_ref[l], preferred_element_type=F32)
        attn = attn + vecs_ref[l, 0:1, :]                  # + bo

        h = _layernorm_1pass(h + attn, vecs_ref[l, 1:2, :], vecs_ref[l, 2:3, :])

        # ---- feed forward (relu) ----
        ff = jnp.dot(h, w1_ref[l], preferred_element_type=F32) + b1_ref[l:l + 1, :]
        ff = jnp.maximum(ff, 0.0)
        ff = jnp.dot(ff, w2_ref[l], preferred_element_type=F32) + vecs_ref[l, 5:6, :]
        h = _layernorm_1pass(h + ff, vecs_ref[l, 3:4, :], vecs_ref[l, 4:5, :])

    # ---- seq-sum pool (1/S folded into classifier) + classifier, full (8,128) tile ----
    pooled = jnp.sum(h.reshape(B, S, D_MODEL), axis=1)      # (B, D)
    pooled = jnp.concatenate(
        [pooled, jnp.zeros((OUT_ROWS - B, D_MODEL), F32)], axis=0)   # (8, D)
    logits = jnp.dot(pooled, wcb_ref[0:D_MODEL, :], preferred_element_type=F32)
    logits = logits + wcb_ref[D_MODEL:D_MODEL + 1, :]
    out_ref[...] = logits                                   # (8, 128) unmasked store


# ------------------------------- host wrapper --------------------------------
def sign_language_transformer(src, kp):
    src2d = src.reshape(B * S, INPUT_SIZE)
    args = (src2d, kp["add"], kp["w_in"], kp["wqkv"], kp["bqkv"], kp["wo"],
            kp["vecs"], kp["w1"], kp["b1"], kp["w2"], kp["wcb"])
    out = pl.pallas_call(
        transformer_kernel,
        out_shape=jax.ShapeDtypeStruct((OUT_ROWS, NC_PAD), jnp.float32),
        in_specs=[pl.BlockSpec(memory_space=pltpu.MemorySpace.VMEM)
                  for _ in args],
        out_specs=pl.BlockSpec(memory_space=pltpu.MemorySpace.VMEM),
    )(*args)
    return out[:B, :NUM_CLASSES]                            # (B, num_classes)


# ---------------------- param prep (folding & packing) -----------------------
def prepare_kernel_params(p, pe_full):
    sq = math.sqrt(D_MODEL)
    sc = 1.0 / math.sqrt(DH)

    # per-token additive row: b_in*sqrt(d) + pe[batch index] (module's quirk)
    add = p["b_in"][None, :] * sq + pe_full[:B]             # (B, D)
    add = jnp.repeat(add, S, axis=0)                        # (B*S, D)

    # fused, lane-dense QKV weights/biases: columns = [Wq*sc | Wk | Wv]
    wqkv = jnp.stack(
        [jnp.concatenate([p["wq"][l] * sc, p["wk"][l], p["wv"][l]], axis=-1)
         for l in range(NUM_LAYERS)], axis=0)               # (L, D, 3D)
    bqkv = jnp.stack(
        [jnp.concatenate([p["bq"][l] * sc, p["bk"][l], p["bv"][l]], axis=-1)[None, :]
         for l in range(NUM_LAYERS)], axis=0)               # (L, 1, 3D)

    # packed small per-layer vectors: [bo, ln1w, ln1b, ln2w, ln2b, b2]
    vecs = jnp.stack(
        [jnp.stack([p["bo"][l], p["ln1w"][l], p["ln1b"][l],
                    p["ln2w"][l], p["ln2b"][l], p["b2"][l]], axis=0)
         for l in range(NUM_LAYERS)], axis=0)               # (L, 6, D)

    # classifier weight (with mean-pool 1/S folded in) + bias, padded to 128 lanes
    wcb = jnp.zeros((D_MODEL + 1, NC_PAD), jnp.float32)
    wcb = wcb.at[:D_MODEL, :NUM_CLASSES].set(p["wc"] / S)
    wcb = wcb.at[D_MODEL, :NUM_CLASSES].set(p["bc"])

    return {
        "add": add,
        "w_in": p["w_in"] * sq,
        "wqkv": wqkv, "bqkv": bqkv,
        "wo": p["wo"],                                      # (L, D, D) lane-dense
        "vecs": vecs,
        "w1": p["w1"], "b1": p["b1"], "w2": p["w2"],
        "wcb": wcb,
    }


# ----------------------------- reference (plain JAX) --------------------------
def ref_forward(src, pe_full, p):
    h = src @ p["w_in"] + p["b_in"]
    h = h * math.sqrt(D_MODEL)
    h = h + pe_full[:B][:, None, :]                         # pe row per batch element
    for l in range(NUM_LAYERS):
        q = h @ p["wq"][l] + p["bq"][l]
        k = h @ p["wk"][l] + p["bk"][l]
        v = h @ p["wv"][l] + p["bv"][l]

        def heads(t):
            return t.reshape(B, S, NHEAD, DH).transpose(0, 2, 1, 3)

        qh, kh, vh = heads(q), heads(k), heads(v)
        s = (qh @ kh.transpose(0, 1, 3, 2)) / math.sqrt(DH)
        a = jax.nn.softmax(s, axis=-1)
        ctx = (a @ vh).transpose(0, 2, 1, 3).reshape(B, S, D_MODEL)
        attn = ctx @ p["wo"][l] + p["bo"][l]
        h = _layernorm_ref(h + attn, p["ln1w"][l], p["ln1b"][l])
        ff = jax.nn.relu(h @ p["w1"][l] + p["b1"][l]) @ p["w2"][l] + p["b2"][l]
        h = _layernorm_ref(h + ff, p["ln2w"][l], p["ln2b"][l])
    pooled = h.mean(axis=1)
    return pooled @ p["wc"] + p["bc"]


def make_positional_encoding(max_len, d_model):
    position = np.arange(max_len, dtype=np.float32)[:, None]
    div_term = np.exp(np.arange(0, d_model, 2, dtype=np.float32) *
                      (-math.log(10000.0) / d_model))
    pe = np.zeros((max_len, d_model), dtype=np.float32)
    pe[:, 0::2] = np.sin(position * div_term)
    pe[:, 1::2] = np.cos(position * div_term)
    return jnp.asarray(pe)


def init_params(key):
    ks = jax.random.split(key, 16)
    s = 0.08

    def rnd(k, shape):
        return jax.random.normal(k, shape, jnp.float32) * s

    return {
        "w_in": rnd(ks[0], (INPUT_SIZE, D_MODEL)),
        "b_in": rnd(ks[1], (D_MODEL,)),
        "wq": rnd(ks[2], (NUM_LAYERS, D_MODEL, D_MODEL)),
        "wk": rnd(ks[3], (NUM_LAYERS, D_MODEL, D_MODEL)),
        "wv": rnd(ks[4], (NUM_LAYERS, D_MODEL, D_MODEL)),
        "bq": rnd(ks[5], (NUM_LAYERS, D_MODEL)),
        "bk": rnd(ks[6], (NUM_LAYERS, D_MODEL)),
        "bv": rnd(ks[7], (NUM_LAYERS, D_MODEL)),
        "wo": rnd(ks[8], (NUM_LAYERS, D_MODEL, D_MODEL)),
        "bo": rnd(ks[9], (NUM_LAYERS, D_MODEL)),
        "ln1w": jnp.ones((NUM_LAYERS, D_MODEL), jnp.float32),
        "ln1b": jnp.zeros((NUM_LAYERS, D_MODEL), jnp.float32),
        "ln2w": jnp.ones((NUM_LAYERS, D_MODEL), jnp.float32),
        "ln2b": jnp.zeros((NUM_LAYERS, D_MODEL), jnp.float32),
        "w1": rnd(ks[10], (NUM_LAYERS, D_MODEL, DFF)),
        "b1": rnd(ks[11], (NUM_LAYERS, DFF)),
        "w2": rnd(ks[12], (NUM_LAYERS, DFF, D_MODEL)),
        "b2": rnd(ks[13], (NUM_LAYERS, D_MODEL)),
        "wc": rnd(ks[14], (D_MODEL, NUM_CLASSES)),
        "bc": rnd(ks[15], (NUM_CLASSES,)),
    }


if __name__ == "__main__":
    key = jax.random.PRNGKey(0)
    kx, kp = jax.random.split(key)

    src = jax.random.normal(kx, (B, S, INPUT_SIZE), jnp.float32)
    params = init_params(kp)
    pe_full = make_positional_encoding(5000, D_MODEL)

    kernel_params = prepare_kernel_params(params, pe_full)

    out = sign_language_transformer(src, kernel_params)
    out = jax.block_until_ready(out)

    ref = jax.block_until_ready(ref_forward(src, pe_full, params))
    assert out.shape == (B, NUM_CLASSES)
    assert np.all(np.isfinite(np.asarray(out)))
    np.testing.assert_allclose(np.asarray(out), np.asarray(ref), rtol=5e-3, atol=5e-3)

    print("KERNEL_OK")
</pallas_src>

<mosaic_0001>
module attributes {stable_mosaic.version = 11 : i64} {
  func.func @transformer_kernel(%arg0: memref<16x16xf32, #tpu.memory_space<vmem>>, %arg1: memref<16x32xf32, #tpu.memory_space<vmem>>, %arg2: memref<16x32xf32, #tpu.memory_space<vmem>>, %arg3: memref<2x32x96xf32, #tpu.memory_space<vmem>>, %arg4: memref<2x1x96xf32, #tpu.memory_space<vmem>>, %arg5: memref<2x32x32xf32, #tpu.memory_space<vmem>>, %arg6: memref<2x6x32xf32, #tpu.memory_space<vmem>>, %arg7: memref<2x32x128xf32, #tpu.memory_space<vmem>>, %arg8: memref<2x128xf32, #tpu.memory_space<vmem>>, %arg9: memref<2x128x32xf32, #tpu.memory_space<vmem>>, %arg10: memref<33x128xf32, #tpu.memory_space<vmem>>, %arg11: memref<8x128xf32, #tpu.memory_space<vmem>>) attributes {dimension_semantics = [], scalar_prefetch = 0 : i64, scratch_operands = 0 : i64, tpu.core_type = #tpu.core_type<tc>} {
    %c0 = arith.constant 0 : index
    %c0_0 = arith.constant 0 : index
    %0 = vector.load %arg0[%c0, %c0_0] : memref<16x16xf32, #tpu.memory_space<vmem>>, vector<16x16xf32>
    %c0_1 = arith.constant 0 : index
    %c0_2 = arith.constant 0 : index
    %1 = vector.load %arg2[%c0_1, %c0_2] : memref<16x32xf32, #tpu.memory_space<vmem>>, vector<16x32xf32>
    %cst = arith.constant dense<0.000000e+00> : vector<16x32xf32>
    %2 = tpu.matmul %0, %1, %cst {dimension_numbers = #tpu.dot_dimension_numbers<[1], [0], [0], [1], [0, 0, 1, 1], [], []>} : vector<16x16xf32>, vector<16x32xf32>, vector<16x32xf32> -> vector<16x32xf32>
    %c0_3 = arith.constant 0 : index
    %c0_4 = arith.constant 0 : index
    %3 = vector.load %arg1[%c0_3, %c0_4] : memref<16x32xf32, #tpu.memory_space<vmem>>, vector<16x32xf32>
    %4 = arith.addf %2, %3 : vector<16x32xf32>
    %c0_5 = arith.constant 0 : index
    %c0_6 = arith.constant 0 : index
    %c0_7 = arith.constant 0 : index
    %5 = vector.load %arg3[%c0_5, %c0_6, %c0_7] : memref<2x32x96xf32, #tpu.memory_space<vmem>>, vector<1x32x96xf32>
    %6 = vector.shape_cast %5 : vector<1x32x96xf32> to vector<32x96xf32>
    %cst_8 = arith.constant dense<0.000000e+00> : vector<16x96xf32>
    %7 = tpu.matmul %4, %6, %cst_8 {dimension_numbers = #tpu.dot_dimension_numbers<[1], [0], [0], [1], [0, 0, 1, 1], [], []>} : vector<16x32xf32>, vector<32x96xf32>, vector<16x96xf32> -> vector<16x96xf32>
    %c0_9 = arith.constant 0 : index
    %c0_10 = arith.constant 0 : index
    %c0_11 = arith.constant 0 : index
    %8 = vector.load %arg4[%c0_9, %c0_10, %c0_11] : memref<2x1x96xf32, #tpu.memory_space<vmem>>, vector<1x1x96xf32>
    %9 = vector.shape_cast %8 : vector<1x1x96xf32> to vector<1x96xf32>
    %10 = vector.broadcast %9 : vector<1x96xf32> to vector<16x96xf32>
    %11 = arith.addf %7, %10 : vector<16x96xf32>
    %12 = vector.extract_strided_slice %11 {offsets = [0, 0], sizes = [16, 8], strides = [1, 1]} : vector<16x96xf32> to vector<16x8xf32>
    %13 = vector.extract_strided_slice %11 {offsets = [0, 8], sizes = [16, 8], strides = [1, 1]} : vector<16x96xf32> to vector<16x8xf32>
    %14 = vector.extract_strided_slice %11 {offsets = [0, 16], sizes = [16, 8], strides = [1, 1]} : vector<16x96xf32> to vector<16x8xf32>
    %15 = vector.extract_strided_slice %11 {offsets = [0, 24], sizes = [16, 8], strides = [1, 1]} : vector<16x96xf32> to vector<16x8xf32>
    %16 = vector.shape_cast %12 : vector<16x8xf32> to vector<1x16x8xf32>
    %17 = vector.shape_cast %13 : vector<16x8xf32> to vector<1x16x8xf32>
    %18 = vector.shape_cast %14 : vector<16x8xf32> to vector<1x16x8xf32>
    %19 = vector.shape_cast %15 : vector<16x8xf32> to vector<1x16x8xf32>
    %20 = tpu.concatenate %16, %17, %18, %19 in 0 : vector<1x16x8xf32>, vector<1x16x8xf32>, vector<1x16x8xf32>, vector<1x16x8xf32> -> vector<4x16x8xf32>
    %21 = vector.shape_cast %20 : vector<4x16x8xf32> to vector<8x8x8xf32>
    %22 = vector.extract_strided_slice %11 {offsets = [0, 32], sizes = [16, 8], strides = [1, 1]} : vector<16x96xf32> to vector<16x8xf32>
    %23 = vector.extract_strided_slice %11 {offsets = [0, 40], sizes = [16, 8], strides = [1, 1]} : vector<16x96xf32> to vector<16x8xf32>
    %24 = vector.extract_strided_slice %11 {offsets = [0, 48], sizes = [16, 8], strides = [1, 1]} : vector<16x96xf32> to vector<16x8xf32>
    %25 = vector.extract_strided_slice %11 {offsets = [0, 56], sizes = [16, 8], strides = [1, 1]} : vector<16x96xf32> to vector<16x8xf32>
    %26 = vector.shape_cast %22 : vector<16x8xf32> to vector<1x16x8xf32>
    %27 = vector.shape_cast %23 : vector<16x8xf32> to vector<1x16x8xf32>
    %28 = vector.shape_cast %24 : vector<16x8xf32> to vector<1x16x8xf32>
    %29 = vector.shape_cast %25 : vector<16x8xf32> to vector<1x16x8xf32>
    %30 = tpu.concatenate %26, %27, %28, %29 in 0 : vector<1x16x8xf32>, vector<1x16x8xf32>, vector<1x16x8xf32>, vector<1x16x8xf32> -> vector<4x16x8xf32>
    %31 = vector.shape_cast %30 : vector<4x16x8xf32> to vector<8x8x8xf32>
    %32 = vector.extract_strided_slice %11 {offsets = [0, 64], sizes = [16, 8], strides = [1, 1]} : vector<16x96xf32> to vector<16x8xf32>
    %33 = vector.extract_strided_slice %11 {offsets = [0, 72], sizes = [16, 8], strides = [1, 1]} : vector<16x96xf32> to vector<16x8xf32>
    %34 = vector.extract_strided_slice %11 {offsets = [0, 80], sizes = [16, 8], strides = [1, 1]} : vector<16x96xf32> to vector<16x8xf32>
    %35 = vector.extract_strided_slice %11 {offsets = [0, 88], sizes = [16, 8], strides = [1, 1]} : vector<16x96xf32> to vector<16x8xf32>
    %36 = vector.shape_cast %32 : vector<16x8xf32> to vector<1x16x8xf32>
    %37 = vector.shape_cast %33 : vector<16x8xf32> to vector<1x16x8xf32>
    %38 = vector.shape_cast %34 : vector<16x8xf32> to vector<1x16x8xf32>
    %39 = vector.shape_cast %35 : vector<16x8xf32> to vector<1x16x8xf32>
    %40 = tpu.concatenate %36, %37, %38, %39 in 0 : vector<1x16x8xf32>, vector<1x16x8xf32>, vector<1x16x8xf32>, vector<1x16x8xf32> -> vector<4x16x8xf32>
    %41 = vector.shape_cast %40 : vector<4x16x8xf32> to vector<8x8x8xf32>
    "tpu.trace_start"() <{level = 10 : i32, message = "bqd,bkd->bqk"}> : () -> ()
    %cst_12 = arith.constant dense<0.000000e+00> : vector<8x8x8xf32>
    %42 = tpu.matmul %21, %31, %cst_12 {dimension_numbers = #tpu.dot_dimension_numbers<[2], [2], [1], [1], [0, 0, 0, 1, 1, 1], [0], [0]>} : vector<8x8x8xf32>, vector<8x8x8xf32>, vector<8x8x8xf32> -> vector<8x8x8xf32>
    "tpu.trace_stop"() : () -> ()
    %cst_13 = arith.constant dense<0xFF800000> : vector<8x8xf32>
    %43 = vector.multi_reduction <maximumf>, %42, %cst_13 [2] : vector<8x8x8xf32> to vector<8x8xf32>
    %44 = vector.shape_cast %43 : vector<8x8xf32> to vector<8x8x1xf32>
    %45 = vector.broadcast %44 : vector<8x8x1xf32> to vector<8x8x8xf32>
    %46 = arith.subf %42, %45 : vector<8x8x8xf32>
    %47 = math.exp %46 : vector<8x8x8xf32>
    %cst_14 = arith.constant dense<0.000000e+00> : vector<8x8xf32>
    %48 = vector.multi_reduction <add>, %47, %cst_14 [2] : vector<8x8x8xf32> to vector<8x8xf32>
    %49 = vector.shape_cast %48 : vector<8x8xf32> to vector<8x8x1xf32>
    %50 = tpu.reciprocal %49 {approx = true} : vector<8x8x1xf32> -> vector<8x8x1xf32>
    %51 = vector.broadcast %50 : vector<8x8x1xf32> to vector<8x8x8xf32>
    %52 = arith.mulf %47, %51 : vector<8x8x8xf32>
    "tpu.trace_start"() <{level = 10 : i32, message = "bqk,bkd->bqd"}> : () -> ()
    %cst_15 = arith.constant dense<0.000000e+00> : vector<8x8x8xf32>
    %53 = tpu.matmul %52, %41, %cst_15 {dimension_numbers = #tpu.dot_dimension_numbers<[2], [1], [1], [2], [0, 0, 0, 1, 1, 2], [0], [0]>} : vector<8x8x8xf32>, vector<8x8x8xf32>, vector<8x8x8xf32> -> vector<8x8x8xf32>
    "tpu.trace_stop"() : () -> ()
    %54 = vector.shape_cast %53 : vector<8x8x8xf32> to vector<4x16x8xf32>
    %55 = vector.extract_strided_slice %54 {offsets = [0, 0, 0], sizes = [1, 16, 8], strides = [1, 1, 1]} : vector<4x16x8xf32> to vector<1x16x8xf32>
    %56 = vector.shape_cast %55 : vector<1x16x8xf32> to vector<16x8xf32>
    %57 = vector.extract_strided_slice %54 {offsets = [1, 0, 0], sizes = [1, 16, 8], strides = [1, 1, 1]} : vector<4x16x8xf32> to vector<1x16x8xf32>
    %58 = vector.shape_cast %57 : vector<1x16x8xf32> to vector<16x8xf32>
    %59 = vector.extract_strided_slice %54 {offsets = [2, 0, 0], sizes = [1, 16, 8], strides = [1, 1, 1]} : vector<4x16x8xf32> to vector<1x16x8xf32>
    %60 = vector.shape_cast %59 : vector<1x16x8xf32> to vector<16x8xf32>
    %61 = vector.extract_strided_slice %54 {offsets = [3, 0, 0], sizes = [1, 16, 8], strides = [1, 1, 1]} : vector<4x16x8xf32> to vector<1x16x8xf32>
    %62 = vector.shape_cast %61 : vector<1x16x8xf32> to vector<16x8xf32>
    %63 = tpu.concatenate %56, %58, %60, %62 in 1 : vector<16x8xf32>, vector<16x8xf32>, vector<16x8xf32>, vector<16x8xf32> -> vector<16x32xf32>
    %c0_16 = arith.constant 0 : index
    %c0_17 = arith.constant 0 : index
    %c0_18 = arith.constant 0 : index
    %64 = vector.load %arg5[%c0_16, %c0_17, %c0_18] : memref<2x32x32xf32, #tpu.memory_space<vmem>>, vector<1x32x32xf32>
    %65 = vector.shape_cast %64 : vector<1x32x32xf32> to vector<32x32xf32>
    %cst_19 = arith.constant dense<0.000000e+00> : vector<16x32xf32>
    %66 = tpu.matmul %63, %65, %cst_19 {dimension_numbers = #tpu.dot_dimension_numbers<[1], [0], [0], [1], [0, 0, 1, 1], [], []>} : vector<16x32xf32>, vector<32x32xf32>, vector<16x32xf32> -> vector<16x32xf32>
    %c0_20 = arith.constant 0 : index
    %c0_21 = arith.constant 0 : index
    %c0_22 = arith.constant 0 : index
    %67 = vector.load %arg6[%c0_20, %c0_21, %c0_22] : memref<2x6x32xf32, #tpu.memory_space<vmem>>, vector<1x1x32xf32>
    %68 = vector.shape_cast %67 : vector<1x1x32xf32> to vector<1x32xf32>
    %69 = vector.broadcast %68 : vector<1x32xf32> to vector<16x32xf32>
    %70 = arith.addf %66, %69 : vector<16x32xf32>
    %71 = arith.addf %4, %70 : vector<16x32xf32>
    %c0_23 = arith.constant 0 : index
    %c1 = arith.constant 1 : index
    %c0_24 = arith.constant 0 : index
    %72 = vector.load %arg6[%c0_23, %c1, %c0_24] : memref<2x6x32xf32, #tpu.memory_space<vmem>>, vector<1x1x32xf32>
    %73 = vector.shape_cast %72 : vector<1x1x32xf32> to vector<1x32xf32>
    %c0_25 = arith.constant 0 : index
    %c2 = arith.constant 2 : index
    %c0_26 = arith.constant 0 : index
    %74 = vector.load %arg6[%c0_25, %c2, %c0_26] : memref<2x6x32xf32, #tpu.memory_space<vmem>>, vector<1x1x32xf32>
    %75 = vector.shape_cast %74 : vector<1x1x32xf32> to vector<1x32xf32>
    %cst_27 = arith.constant dense<0.000000e+00> : vector<16xf32>
    %76 = vector.multi_reduction <add>, %71, %cst_27 [1] : vector<16x32xf32> to vector<16xf32>
    %77 = vector.shape_cast %76 : vector<16xf32> to vector<16x1xf32>
    %cst_28 = arith.constant 3.200000e+01 : f32
    %78 = vector.broadcast %cst_28 : f32 to vector<16x1xf32>
    %79 = arith.divf %77, %78 : vector<16x1xf32>
    %80 = arith.mulf %71, %71 : vector<16x32xf32>
    %cst_29 = arith.constant dense<0.000000e+00> : vector<16xf32>
    %81 = vector.multi_reduction <add>, %80, %cst_29 [1] : vector<16x32xf32> to vector<16xf32>
    %82 = vector.shape_cast %81 : vector<16xf32> to vector<16x1xf32>
    %cst_30 = arith.constant 3.200000e+01 : f32
    %83 = vector.broadcast %cst_30 : f32 to vector<16x1xf32>
    %84 = arith.divf %82, %83 : vector<16x1xf32>
    %85 = arith.mulf %79, %79 : vector<16x1xf32>
    %86 = arith.subf %84, %85 : vector<16x1xf32>
    %87 = vector.broadcast %79 : vector<16x1xf32> to vector<16x32xf32>
    %88 = arith.subf %71, %87 : vector<16x32xf32>
    %cst_31 = arith.constant 9.99999974E-6 : f32
    %89 = vector.broadcast %cst_31 : f32 to vector<16x1xf32>
    %90 = arith.addf %86, %89 : vector<16x1xf32>
    %91 = math.rsqrt %90 : vector<16x1xf32>
    %92 = vector.broadcast %91 : vector<16x1xf32> to vector<16x32xf32>
    %93 = arith.mulf %88, %92 : vector<16x32xf32>
    %94 = vector.broadcast %73 : vector<1x32xf32> to vector<16x32xf32>
    %95 = arith.mulf %93, %94 : vector<16x32xf32>
    %96 = vector.broadcast %75 : vector<1x32xf32> to vector<16x32xf32>
    %97 = arith.addf %95, %96 : vector<16x32xf32>
    %c0_32 = arith.constant 0 : index
    %c0_33 = arith.constant 0 : index
    %c0_34 = arith.constant 0 : index
    %98 = vector.load %arg7[%c0_32, %c0_33, %c0_34] : memref<2x32x128xf32, #tpu.memory_space<vmem>>, vector<1x32x128xf32>
    %99 = vector.shape_cast %98 : vector<1x32x128xf32> to vector<32x128xf32>
    %cst_35 = arith.constant dense<0.000000e+00> : vector<16x128xf32>
    %100 = tpu.matmul %97, %99, %cst_35 {dimension_numbers = #tpu.dot_dimension_numbers<[1], [0], [0], [1], [0, 0, 1, 1], [], []>} : vector<16x32xf32>, vector<32x128xf32>, vector<16x128xf32> -> vector<16x128xf32>
    %c0_36 = arith.constant 0 : index
    %c0_37 = arith.constant 0 : index
    %101 = vector.load %arg8[%c0_36, %c0_37] : memref<2x128xf32, #tpu.memory_space<vmem>>, vector<1x128xf32>
    %102 = vector.broadcast %101 : vector<1x128xf32> to vector<16x128xf32>
    %103 = arith.addf %100, %102 : vector<16x128xf32>
    %cst_38 = arith.constant 0.000000e+00 : f32
    %104 = vector.broadcast %cst_38 : f32 to vector<16x128xf32>
    %105 = arith.maximumf %103, %104 : vector<16x128xf32>
    %c0_39 = arith.constant 0 : index
    %c0_40 = arith.constant 0 : index
    %c0_41 = arith.constant 0 : index
    %106 = vector.load %arg9[%c0_39, %c0_40, %c0_41] : memref<2x128x32xf32, #tpu.memory_space<vmem>>, vector<1x128x32xf32>
    %107 = vector.shape_cast %106 : vector<1x128x32xf32> to vector<128x32xf32>
    %cst_42 = arith.constant dense<0.000000e+00> : vector<16x32xf32>
    %108 = tpu.matmul %105, %107, %cst_42 {dimension_numbers = #tpu.dot_dimension_numbers<[1], [0], [0], [1], [0, 0, 1, 1], [], []>} : vector<16x128xf32>, vector<128x32xf32>, vector<16x32xf32> -> vector<16x32xf32>
    %c0_43 = arith.constant 0 : index
    %c5 = arith.constant 5 : index
    %c0_44 = arith.constant 0 : index
    %109 = vector.load %arg6[%c0_43, %c5, %c0_44] : memref<2x6x32xf32, #tpu.memory_space<vmem>>, vector<1x1x32xf32>
    %110 = vector.shape_cast %109 : vector<1x1x32xf32> to vector<1x32xf32>
    %111 = vector.broadcast %110 : vector<1x32xf32> to vector<16x32xf32>
    %112 = arith.addf %108, %111 : vector<16x32xf32>
    %113 = arith.addf %97, %112 : vector<16x32xf32>
    %c0_45 = arith.constant 0 : index
    %c3 = arith.constant 3 : index
    %c0_46 = arith.constant 0 : index
    %114 = vector.load %arg6[%c0_45, %c3, %c0_46] : memref<2x6x32xf32, #tpu.memory_space<vmem>>, vector<1x1x32xf32>
    %115 = vector.shape_cast %114 : vector<1x1x32xf32> to vector<1x32xf32>
    %c0_47 = arith.constant 0 : index
    %c4 = arith.constant 4 : index
    %c0_48 = arith.constant 0 : index
    %116 = vector.load %arg6[%c0_47, %c4, %c0_48] : memref<2x6x32xf32, #tpu.memory_space<vmem>>, vector<1x1x32xf32>
    %117 = vector.shape_cast %116 : vector<1x1x32xf32> to vector<1x32xf32>
    %cst_49 = arith.constant dense<0.000000e+00> : vector<16xf32>
    %118 = vector.multi_reduction <add>, %113, %cst_49 [1] : vector<16x32xf32> to vector<16xf32>
    %119 = vector.shape_cast %118 : vector<16xf32> to vector<16x1xf32>
    %cst_50 = arith.constant 3.200000e+01 : f32
    %120 = vector.broadcast %cst_50 : f32 to vector<16x1xf32>
    %121 = arith.divf %119, %120 : vector<16x1xf32>
    %122 = arith.mulf %113, %113 : vector<16x32xf32>
    %cst_51 = arith.constant dense<0.000000e+00> : vector<16xf32>
    %123 = vector.multi_reduction <add>, %122, %cst_51 [1] : vector<16x32xf32> to vector<16xf32>
    %124 = vector.shape_cast %123 : vector<16xf32> to vector<16x1xf32>
    %cst_52 = arith.constant 3.200000e+01 : f32
    %125 = vector.broadcast %cst_52 : f32 to vector<16x1xf32>
    %126 = arith.divf %124, %125 : vector<16x1xf32>
    %127 = arith.mulf %121, %121 : vector<16x1xf32>
    %128 = arith.subf %126, %127 : vector<16x1xf32>
    %129 = vector.broadcast %121 : vector<16x1xf32> to vector<16x32xf32>
    %130 = arith.subf %113, %129 : vector<16x32xf32>
    %cst_53 = arith.constant 9.99999974E-6 : f32
    %131 = vector.broadcast %cst_53 : f32 to vector<16x1xf32>
    %132 = arith.addf %128, %131 : vector<16x1xf32>
    %133 = math.rsqrt %132 : vector<16x1xf32>
    %134 = vector.broadcast %133 : vector<16x1xf32> to vector<16x32xf32>
    %135 = arith.mulf %130, %134 : vector<16x32xf32>
    %136 = vector.broadcast %115 : vector<1x32xf32> to vector<16x32xf32>
    %137 = arith.mulf %135, %136 : vector<16x32xf32>
    %138 = vector.broadcast %117 : vector<1x32xf32> to vector<16x32xf32>
    %139 = arith.addf %137, %138 : vector<16x32xf32>
    %c1_54 = arith.constant 1 : index
    %c0_55 = arith.constant 0 : index
    %c0_56 = arith.constant 0 : index
    %140 = vector.load %arg3[%c1_54, %c0_55, %c0_56] : memref<2x32x96xf32, #tpu.memory_space<vmem>>, vector<1x32x96xf32>
    %141 = vector.shape_cast %140 : vector<1x32x96xf32> to vector<32x96xf32>
    %cst_57 = arith.constant dense<0.000000e+00> : vector<16x96xf32>
    %142 = tpu.matmul %139, %141, %cst_57 {dimension_numbers = #tpu.dot_dimension_numbers<[1], [0], [0], [1], [0, 0, 1, 1], [], []>} : vector<16x32xf32>, vector<32x96xf32>, vector<16x96xf32> -> vector<16x96xf32>
    %c1_58 = arith.constant 1 : index
    %c0_59 = arith.constant 0 : index
    %c0_60 = arith.constant 0 : index
    %143 = vector.load %arg4[%c1_58, %c0_59, %c0_60] : memref<2x1x96xf32, #tpu.memory_space<vmem>>, vector<1x1x96xf32>
    %144 = vector.shape_cast %143 : vector<1x1x96xf32> to vector<1x96xf32>
    %145 = vector.broadcast %144 : vector<1x96xf32> to vector<16x96xf32>
    %146 = arith.addf %142, %145 : vector<16x96xf32>
    %147 = vector.extract_strided_slice %146 {offsets = [0, 0], sizes = [16, 8], strides = [1, 1]} : vector<16x96xf32> to vector<16x8xf32>
    %148 = vector.extract_strided_slice %146 {offsets = [0, 8], sizes = [16, 8], strides = [1, 1]} : vector<16x96xf32> to vector<16x8xf32>
    %149 = vector.extract_strided_slice %146 {offsets = [0, 16], sizes = [16, 8], strides = [1, 1]} : vector<16x96xf32> to vector<16x8xf32>
    %150 = vector.extract_strided_slice %146 {offsets = [0, 24], sizes = [16, 8], strides = [1, 1]} : vector<16x96xf32> to vector<16x8xf32>
    %151 = vector.shape_cast %147 : vector<16x8xf32> to vector<1x16x8xf32>
    %152 = vector.shape_cast %148 : vector<16x8xf32> to vector<1x16x8xf32>
    %153 = vector.shape_cast %149 : vector<16x8xf32> to vector<1x16x8xf32>
    %154 = vector.shape_cast %150 : vector<16x8xf32> to vector<1x16x8xf32>
    %155 = tpu.concatenate %151, %152, %153, %154 in 0 : vector<1x16x8xf32>, vector<1x16x8xf32>, vector<1x16x8xf32>, vector<1x16x8xf32> -> vector<4x16x8xf32>
    %156 = vector.shape_cast %155 : vector<4x16x8xf32> to vector<8x8x8xf32>
    %157 = vector.extract_strided_slice %146 {offsets = [0, 32], sizes = [16, 8], strides = [1, 1]} : vector<16x96xf32> to vector<16x8xf32>
    %158 = vector.extract_strided_slice %146 {offsets = [0, 40], sizes = [16, 8], strides = [1, 1]} : vector<16x96xf32> to vector<16x8xf32>
    %159 = vector.extract_strided_slice %146 {offsets = [0, 48], sizes = [16, 8], strides = [1, 1]} : vector<16x96xf32> to vector<16x8xf32>
    %160 = vector.extract_strided_slice %146 {offsets = [0, 56], sizes = [16, 8], strides = [1, 1]} : vector<16x96xf32> to vector<16x8xf32>
    %161 = vector.shape_cast %157 : vector<16x8xf32> to vector<1x16x8xf32>
    %162 = vector.shape_cast %158 : vector<16x8xf32> to vector<1x16x8xf32>
    %163 = vector.shape_cast %159 : vector<16x8xf32> to vector<1x16x8xf32>
    %164 = vector.shape_cast %160 : vector<16x8xf32> to vector<1x16x8xf32>
    %165 = tpu.concatenate %161, %162, %163, %164 in 0 : vector<1x16x8xf32>, vector<1x16x8xf32>, vector<1x16x8xf32>, vector<1x16x8xf32> -> vector<4x16x8xf32>
    %166 = vector.shape_cast %165 : vector<4x16x8xf32> to vector<8x8x8xf32>
    %167 = vector.extract_strided_slice %146 {offsets = [0, 64], sizes = [16, 8], strides = [1, 1]} : vector<16x96xf32> to vector<16x8xf32>
    %168 = vector.extract_strided_slice %146 {offsets = [0, 72], sizes = [16, 8], strides = [1, 1]} : vector<16x96xf32> to vector<16x8xf32>
    %169 = vector.extract_strided_slice %146 {offsets = [0, 80], sizes = [16, 8], strides = [1, 1]} : vector<16x96xf32> to vector<16x8xf32>
    %170 = vector.extract_strided_slice %146 {offsets = [0, 88], sizes = [16, 8], strides = [1, 1]} : vector<16x96xf32> to vector<16x8xf32>
    %171 = vector.shape_cast %167 : vector<16x8xf32> to vector<1x16x8xf32>
    %172 = vector.shape_cast %168 : vector<16x8xf32> to vector<1x16x8xf32>
    %173 = vector.shape_cast %169 : vector<16x8xf32> to vector<1x16x8xf32>
    %174 = vector.shape_cast %170 : vector<16x8xf32> to vector<1x16x8xf32>
    %175 = tpu.concatenate %171, %172, %173, %174 in 0 : vector<1x16x8xf32>, vector<1x16x8xf32>, vector<1x16x8xf32>, vector<1x16x8xf32> -> vector<4x16x8xf32>
    %176 = vector.shape_cast %175 : vector<4x16x8xf32> to vector<8x8x8xf32>
    "tpu.trace_start"() <{level = 10 : i32, message = "bqd,bkd->bqk"}> : () -> ()
    %cst_61 = arith.constant dense<0.000000e+00> : vector<8x8x8xf32>
    %177 = tpu.matmul %156, %166, %cst_61 {dimension_numbers = #tpu.dot_dimension_numbers<[2], [2], [1], [1], [0, 0, 0, 1, 1, 1], [0], [0]>} : vector<8x8x8xf32>, vector<8x8x8xf32>, vector<8x8x8xf32> -> vector<8x8x8xf32>
    "tpu.trace_stop"() : () -> ()
    %cst_62 = arith.constant dense<0xFF800000> : vector<8x8xf32>
    %178 = vector.multi_reduction <maximumf>, %177, %cst_62 [2] : vector<8x8x8xf32> to vector<8x8xf32>
    %179 = vector.shape_cast %178 : vector<8x8xf32> to vector<8x8x1xf32>
    %180 = vector.broadcast %179 : vector<8x8x1xf32> to vector<8x8x8xf32>
    %181 = arith.subf %177, %180 : vector<8x8x8xf32>
    %182 = math.exp %181 : vector<8x8x8xf32>
    %cst_63 = arith.constant dense<0.000000e+00> : vector<8x8xf32>
    %183 = vector.multi_reduction <add>, %182, %cst_63 [2] : vector<8x8x8xf32> to vector<8x8xf32>
    %184 = vector.shape_cast %183 : vector<8x8xf32> to vector<8x8x1xf32>
    %185 = tpu.reciprocal %184 {approx = true} : vector<8x8x1xf32> -> vector<8x8x1xf32>
    %186 = vector.broadcast %185 : vector<8x8x1xf32> to vector<8x8x8xf32>
    %187 = arith.mulf %182, %186 : vector<8x8x8xf32>
    "tpu.trace_start"() <{level = 10 : i32, message = "bqk,bkd->bqd"}> : () -> ()
    %cst_64 = arith.constant dense<0.000000e+00> : vector<8x8x8xf32>
    %188 = tpu.matmul %187, %176, %cst_64 {dimension_numbers = #tpu.dot_dimension_numbers<[2], [1], [1], [2], [0, 0, 0, 1, 1, 2], [0], [0]>} : vector<8x8x8xf32>, vector<8x8x8xf32>, vector<8x8x8xf32> -> vector<8x8x8xf32>
    "tpu.trace_stop"() : () -> ()
    %189 = vector.shape_cast %188 : vector<8x8x8xf32> to vector<4x16x8xf32>
    %190 = vector.extract_strided_slice %189 {offsets = [0, 0, 0], sizes = [1, 16, 8], strides = [1, 1, 1]} : vector<4x16x8xf32> to vector<1x16x8xf32>
    %191 = vector.shape_cast %190 : vector<1x16x8xf32> to vector<16x8xf32>
    %192 = vector.extract_strided_slice %189 {offsets = [1, 0, 0], sizes = [1, 16, 8], strides = [1, 1, 1]} : vector<4x16x8xf32> to vector<1x16x8xf32>
    %193 = vector.shape_cast %192 : vector<1x16x8xf32> to vector<16x8xf32>
    %194 = vector.extract_strided_slice %189 {offsets = [2, 0, 0], sizes = [1, 16, 8], strides = [1, 1, 1]} : vector<4x16x8xf32> to vector<1x16x8xf32>
    %195 = vector.shape_cast %194 : vector<1x16x8xf32> to vector<16x8xf32>
    %196 = vector.extract_strided_slice %189 {offsets = [3, 0, 0], sizes = [1, 16, 8], strides = [1, 1, 1]} : vector<4x16x8xf32> to vector<1x16x8xf32>
    %197 = vector.shape_cast %196 : vector<1x16x8xf32> to vector<16x8xf32>
    %198 = tpu.concatenate %191, %193, %195, %197 in 1 : vector<16x8xf32>, vector<16x8xf32>, vector<16x8xf32>, vector<16x8xf32> -> vector<16x32xf32>
    %c1_65 = arith.constant 1 : index
    %c0_66 = arith.constant 0 : index
    %c0_67 = arith.constant 0 : index
    %199 = vector.load %arg5[%c1_65, %c0_66, %c0_67] : memref<2x32x32xf32, #tpu.memory_space<vmem>>, vector<1x32x32xf32>
    %200 = vector.shape_cast %199 : vector<1x32x32xf32> to vector<32x32xf32>
    %cst_68 = arith.constant dense<0.000000e+00> : vector<16x32xf32>
    %201 = tpu.matmul %198, %200, %cst_68 {dimension_numbers = #tpu.dot_dimension_numbers<[1], [0], [0], [1], [0, 0, 1, 1], [], []>} : vector<16x32xf32>, vector<32x32xf32>, vector<16x32xf32> -> vector<16x32xf32>
    %c1_69 = arith.constant 1 : index
    %c0_70 = arith.constant 0 : index
    %c0_71 = arith.constant 0 : index
    %202 = vector.load %arg6[%c1_69, %c0_70, %c0_71] : memref<2x6x32xf32, #tpu.memory_space<vmem>>, vector<1x1x32xf32>
    %203 = vector.shape_cast %202 : vector<1x1x32xf32> to vector<1x32xf32>
    %204 = vector.broadcast %203 : vector<1x32xf32> to vector<16x32xf32>
    %205 = arith.addf %201, %204 : vector<16x32xf32>
    %206 = arith.addf %139, %205 : vector<16x32xf32>
    %c1_72 = arith.constant 1 : index
    %c1_73 = arith.constant 1 : index
    %c0_74 = arith.constant 0 : index
    %207 = vector.load %arg6[%c1_72, %c1_73, %c0_74] : memref<2x6x32xf32, #tpu.memory_space<vmem>>, vector<1x1x32xf32>
    %208 = vector.shape_cast %207 : vector<1x1x32xf32> to vector<1x32xf32>
    %c1_75 = arith.constant 1 : index
    %c2_76 = arith.constant 2 : index
    %c0_77 = arith.constant 0 : index
    %209 = vector.load %arg6[%c1_75, %c2_76, %c0_77] : memref<2x6x32xf32, #tpu.memory_space<vmem>>, vector<1x1x32xf32>
    %210 = vector.shape_cast %209 : vector<1x1x32xf32> to vector<1x32xf32>
    %cst_78 = arith.constant dense<0.000000e+00> : vector<16xf32>
    %211 = vector.multi_reduction <add>, %206, %cst_78 [1] : vector<16x32xf32> to vector<16xf32>
    %212 = vector.shape_cast %211 : vector<16xf32> to vector<16x1xf32>
    %cst_79 = arith.constant 3.200000e+01 : f32
    %213 = vector.broadcast %cst_79 : f32 to vector<16x1xf32>
    %214 = arith.divf %212, %213 : vector<16x1xf32>
    %215 = arith.mulf %206, %206 : vector<16x32xf32>
    %cst_80 = arith.constant dense<0.000000e+00> : vector<16xf32>
    %216 = vector.multi_reduction <add>, %215, %cst_80 [1] : vector<16x32xf32> to vector<16xf32>
    %217 = vector.shape_cast %216 : vector<16xf32> to vector<16x1xf32>
    %cst_81 = arith.constant 3.200000e+01 : f32
    %218 = vector.broadcast %cst_81 : f32 to vector<16x1xf32>
    %219 = arith.divf %217, %218 : vector<16x1xf32>
    %220 = arith.mulf %214, %214 : vector<16x1xf32>
    %221 = arith.subf %219, %220 : vector<16x1xf32>
    %222 = vector.broadcast %214 : vector<16x1xf32> to vector<16x32xf32>
    %223 = arith.subf %206, %222 : vector<16x32xf32>
    %cst_82 = arith.constant 9.99999974E-6 : f32
    %224 = vector.broadcast %cst_82 : f32 to vector<16x1xf32>
    %225 = arith.addf %221, %224 : vector<16x1xf32>
    %226 = math.rsqrt %225 : vector<16x1xf32>
    %227 = vector.broadcast %226 : vector<16x1xf32> to vector<16x32xf32>
    %228 = arith.mulf %223, %227 : vector<16x32xf32>
    %229 = vector.broadcast %208 : vector<1x32xf32> to vector<16x32xf32>
    %230 = arith.mulf %228, %229 : vector<16x32xf32>
    %231 = vector.broadcast %210 : vector<1x32xf32> to vector<16x32xf32>
    %232 = arith.addf %230, %231 : vector<16x32xf32>
    %c1_83 = arith.constant 1 : index
    %c0_84 = arith.constant 0 : index
    %c0_85 = arith.constant 0 : index
    %233 = vector.load %arg7[%c1_83, %c0_84, %c0_85] : memref<2x32x128xf32, #tpu.memory_space<vmem>>, vector<1x32x128xf32>
    %234 = vector.shape_cast %233 : vector<1x32x128xf32> to vector<32x128xf32>
    %cst_86 = arith.constant dense<0.000000e+00> : vector<16x128xf32>
    %235 = tpu.matmul %232, %234, %cst_86 {dimension_numbers = #tpu.dot_dimension_numbers<[1], [0], [0], [1], [0, 0, 1, 1], [], []>} : vector<16x32xf32>, vector<32x128xf32>, vector<16x128xf32> -> vector<16x128xf32>
    %c1_87 = arith.constant 1 : index
    %c0_88 = arith.constant 0 : index
    %236 = vector.load %arg8[%c1_87, %c0_88] : memref<2x128xf32, #tpu.memory_space<vmem>>, vector<1x128xf32>
    %237 = vector.broadcast %236 : vector<1x128xf32> to vector<16x128xf32>
    %238 = arith.addf %235, %237 : vector<16x128xf32>
    %cst_89 = arith.constant 0.000000e+00 : f32
    %239 = vector.broadcast %cst_89 : f32 to vector<16x128xf32>
    %240 = arith.maximumf %238, %239 : vector<16x128xf32>
    %c1_90 = arith.constant 1 : index
    %c0_91 = arith.constant 0 : index
    %c0_92 = arith.constant 0 : index
    %241 = vector.load %arg9[%c1_90, %c0_91, %c0_92] : memref<2x128x32xf32, #tpu.memory_space<vmem>>, vector<1x128x32xf32>
    %242 = vector.shape_cast %241 : vector<1x128x32xf32> to vector<128x32xf32>
    %cst_93 = arith.constant dense<0.000000e+00> : vector<16x32xf32>
    %243 = tpu.matmul %240, %242, %cst_93 {dimension_numbers = #tpu.dot_dimension_numbers<[1], [0], [0], [1], [0, 0, 1, 1], [], []>} : vector<16x128xf32>, vector<128x32xf32>, vector<16x32xf32> -> vector<16x32xf32>
    %c1_94 = arith.constant 1 : index
    %c5_95 = arith.constant 5 : index
    %c0_96 = arith.constant 0 : index
    %244 = vector.load %arg6[%c1_94, %c5_95, %c0_96] : memref<2x6x32xf32, #tpu.memory_space<vmem>>, vector<1x1x32xf32>
    %245 = vector.shape_cast %244 : vector<1x1x32xf32> to vector<1x32xf32>
    %246 = vector.broadcast %245 : vector<1x32xf32> to vector<16x32xf32>
    %247 = arith.addf %243, %246 : vector<16x32xf32>
    %248 = arith.addf %232, %247 : vector<16x32xf32>
    %c1_97 = arith.constant 1 : index
    %c3_98 = arith.constant 3 : index
    %c0_99 = arith.constant 0 : index
    %249 = vector.load %arg6[%c1_97, %c3_98, %c0_99] : memref<2x6x32xf32, #tpu.memory_space<vmem>>, vector<1x1x32xf32>
    %250 = vector.shape_cast %249 : vector<1x1x32xf32> to vector<1x32xf32>
    %c1_100 = arith.constant 1 : index
    %c4_101 = arith.constant 4 : index
    %c0_102 = arith.constant 0 : index
    %251 = vector.load %arg6[%c1_100, %c4_101, %c0_102] : memref<2x6x32xf32, #tpu.memory_space<vmem>>, vector<1x1x32xf32>
    %252 = vector.shape_cast %251 : vector<1x1x32xf32> to vector<1x32xf32>
    %cst_103 = arith.constant dense<0.000000e+00> : vector<16xf32>
    %253 = vector.multi_reduction <add>, %248, %cst_103 [1] : vector<16x32xf32> to vector<16xf32>
    %254 = vector.shape_cast %253 : vector<16xf32> to vector<16x1xf32>
    %cst_104 = arith.constant 3.200000e+01 : f32
    %255 = vector.broadcast %cst_104 : f32 to vector<16x1xf32>
    %256 = arith.divf %254, %255 : vector<16x1xf32>
    %257 = arith.mulf %248, %248 : vector<16x32xf32>
    %cst_105 = arith.constant dense<0.000000e+00> : vector<16xf32>
    %258 = vector.multi_reduction <add>, %257, %cst_105 [1] : vector<16x32xf32> to vector<16xf32>
    %259 = vector.shape_cast %258 : vector<16xf32> to vector<16x1xf32>
    %cst_106 = arith.constant 3.200000e+01 : f32
    %260 = vector.broadcast %cst_106 : f32 to vector<16x1xf32>
    %261 = arith.divf %259, %260 : vector<16x1xf32>
    %262 = arith.mulf %256, %256 : vector<16x1xf32>
    %263 = arith.subf %261, %262 : vector<16x1xf32>
    %264 = vector.broadcast %256 : vector<16x1xf32> to vector<16x32xf32>
    %265 = arith.subf %248, %264 : vector<16x32xf32>
    %cst_107 = arith.constant 9.99999974E-6 : f32
    %266 = vector.broadcast %cst_107 : f32 to vector<16x1xf32>
    %267 = arith.addf %263, %266 : vector<16x1xf32>
    %268 = math.rsqrt %267 : vector<16x1xf32>
    %269 = vector.broadcast %268 : vector<16x1xf32> to vector<16x32xf32>
    %270 = arith.mulf %265, %269 : vector<16x32xf32>
    %271 = vector.broadcast %250 : vector<1x32xf32> to vector<16x32xf32>
    %272 = arith.mulf %270, %271 : vector<16x32xf32>
    %273 = vector.broadcast %252 : vector<1x32xf32> to vector<16x32xf32>
    %274 = arith.addf %272, %273 : vector<16x32xf32>
    %275 = vector.shape_cast %274 : vector<16x32xf32> to vector<2x8x32xf32>
    %cst_108 = arith.constant dense<0.000000e+00> : vector<2x32xf32>
    %276 = vector.multi_reduction <add>, %275, %cst_108 [1] : vector<2x8x32xf32> to vector<2x32xf32>
    %cst_109 = arith.constant 0.000000e+00 : f32
    %277 = vector.broadcast %cst_109 : f32 to vector<6x32xf32>
    %278 = tpu.concatenate %276, %277 in 0 : vector<2x32xf32>, vector<6x32xf32> -> vector<8x32xf32>
    %c0_110 = arith.constant 0 : index
    %c0_111 = arith.constant 0 : index
    %279 = vector.load %arg10[%c0_110, %c0_111] : memref<33x128xf32, #tpu.memory_space<vmem>>, vector<32x128xf32>
    %cst_112 = arith.constant dense<0.000000e+00> : vector<8x128xf32>
    %280 = tpu.matmul %278, %279, %cst_112 {dimension_numbers = #tpu.dot_dimension_numbers<[1], [0], [0], [1], [0, 0, 1, 1], [], []>} : vector<8x32xf32>, vector<32x128xf32>, vector<8x128xf32> -> vector<8x128xf32>
    %c32 = arith.constant 32 : index
    %c0_113 = arith.constant 0 : index
    %281 = vector.load %arg10[%c32, %c0_113] : memref<33x128xf32, #tpu.memory_space<vmem>>, vector<1x128xf32>
    %282 = vector.broadcast %281 : vector<1x128xf32> to vector<8x128xf32>
    %283 = arith.addf %280, %282 : vector<8x128xf32>
    %c0_114 = arith.constant 0 : index
    %c0_115 = arith.constant 0 : index
    %284 = vector.load %arg11[%c0_114, %c0_115] : memref<8x128xf32, #tpu.memory_space<vmem>>, vector<8x128xf32>
    tpu.vector_store %arg11[%c0_114, %c0_115], %283 {strides = array<i32>} : memref<8x128xf32, #tpu.memory_space<vmem>>, vector<8x128xf32>,
    return
  }
}

</mosaic_0001>

<llo_original>
// kernel: tpu_custom_call.1
$region0: #{tpu_custom_call.1}
  #allocation0 [shape = 'u32[]', space=smem, size = 0x4, offset = 0x4, fixed_abs, tag = 'smem constant byte address 0x4 - core index']
  #allocation1 [shape = 'u32[144,128]{1,0:T(1,128)}', space=vmem, size = 0x12000, scoped, tag = 'internal scratch']
  %s0 = inlined_call_operand.vmem [shape: f32[16,16], index: 0, kind: input, shape index: {}]
  %s1 = inlined_call_operand.vmem [shape: f32[16,32], index: 1, kind: input, shape index: {}]
  %s2 = inlined_call_operand.vmem [shape: f32[16,32], index: 2, kind: input, shape index: {}]
  %s3 = inlined_call_operand.vmem [shape: f32[2,32,96], index: 3, kind: input, shape index: {}]
  %s4 = inlined_call_operand.vmem [shape: f32[2,1,96], index: 4, kind: input, shape index: {}]
  %s5 = inlined_call_operand.vmem [shape: f32[2,32,32], index: 5, kind: input, shape index: {}]
  %s6 = inlined_call_operand.vmem [shape: f32[2,6,32], index: 6, kind: input, shape index: {}]
  %s7 = inlined_call_operand.vmem [shape: f32[2,32,128], index: 7, kind: input, shape index: {}]
  %s8 = inlined_call_operand.vmem [shape: f32[2,128], index: 8, kind: input, shape index: {}]
  %s9 = inlined_call_operand.vmem [shape: f32[2,128,32], index: 9, kind: input, shape index: {}]
  %s10 = inlined_call_operand.vmem [shape: f32[33,128], index: 10, kind: input, shape index: {}]
  %s11 = inlined_call_operand.hbm [shape: f32[8,128], index: 11, kind: output, shape index: {}]
  %s12 = sld [smem:[#allocation0]]
  $region54: #{tpu_custom_call.1} parent=0
    _
  %s14 = ssub.s32 1, %s12
  %s15 = scalar_select 0, %s14, %s12
  $region1: #{tpu_custom_call.1} parent=0
    #allocation2 [shape = 'u8[4096]{0}', space=vmem, size = 0x1000, scoped, tag = 'output window, operand 0, single buffered']
    #allocation3 [shape = 's32[1]{0}', space=sflag, size = 0x4, scoped, tag = 'scoped memory for tpu_custom_call.1']
    %16 = vsyncpa [#allocation3], 0
    // Predicated region
    $region2: #{tpu_custom_call.1} parent=1 // pred_check
      _
    $region3: #{tpu_custom_call.1} parent=1 // pred_check_branch
      %18 = sbr.rel (0) target = $region5
    $region4: #{tpu_custom_call.1} parent=1 // pred_region
      _
    $region5: #{tpu_custom_call.1} parent=1 // pred_fallthru
      _
    // Predicated region
    $region6: #{tpu_custom_call.1} parent=1 // pred_check
      _
    $region7: #{tpu_custom_call.1} parent=1 // pred_check_branch
      %20 = sbr.rel (0) target = $region9
    $region8: #{tpu_custom_call.1} parent=1 // pred_region
      _
    $region9: #{tpu_custom_call.1} parent=1 // pred_fallthru
      _
    // Predicated region
    $region10: #{tpu_custom_call.1} parent=1 // pred_check
      _
    $region11: #{tpu_custom_call.1} parent=1 // pred_check_branch
      %22 = sbr.rel (0) target = $region13
    $region12: #{tpu_custom_call.1} parent=1 // pred_region
      _
    $region13: #{tpu_custom_call.1} parent=1 // pred_fallthru
      _
    // Predicated region
    $region14: #{tpu_custom_call.1} parent=1 // pred_check
      _
    $region15: #{tpu_custom_call.1} parent=1 // pred_check_branch
      %24 = sbr.rel (0) target = $region17
    $region16: #{tpu_custom_call.1} parent=1 // pred_region
      _
    $region17: #{tpu_custom_call.1} parent=1 // pred_fallthru
      _
    // Predicated region
    $region18: #{tpu_custom_call.1} parent=1 // pred_check
      _
    $region19: #{tpu_custom_call.1} parent=1 // pred_check_branch
      %26 = sbr.rel (0) target = $region21
    $region20: #{tpu_custom_call.1} parent=1 // pred_region
      _
    $region21: #{tpu_custom_call.1} parent=1 // pred_fallthru
      _
    // Predicated region
    $region22: #{tpu_custom_call.1} parent=1 // pred_check
      _
    $region23: #{tpu_custom_call.1} parent=1 // pred_check_branch
      %28 = sbr.rel (0) target = $region25
    $region24: #{tpu_custom_call.1} parent=1 // pred_region
      _
    $region25: #{tpu_custom_call.1} parent=1 // pred_fallthru
      _
    // Predicated region
    $region26: #{tpu_custom_call.1} parent=1 // pred_check
      _
    $region27: #{tpu_custom_call.1} parent=1 // pred_check_branch
      %30 = sbr.rel (0) target = $region29
    $region28: #{tpu_custom_call.1} parent=1 // pred_region
      _
    $region29: #{tpu_custom_call.1} parent=1 // pred_fallthru
      _
    // Predicated region
    $region30: #{tpu_custom_call.1} parent=1 // pred_check
      _
    $region31: #{tpu_custom_call.1} parent=1 // pred_check_branch
      %32 = sbr.rel (0) target = $region33
    $region32: #{tpu_custom_call.1} parent=1 // pred_region
      _
    $region33: #{tpu_custom_call.1} parent=1 // pred_fallthru
      _
    // Predicated region
    $region34: #{tpu_custom_call.1} parent=1 // pred_check
      _
    $region35: #{tpu_custom_call.1} parent=1 // pred_check_branch
      %34 = sbr.rel (0) target = $region37
    $region36: #{tpu_custom_call.1} parent=1 // pred_region
      _
    $region37: #{tpu_custom_call.1} parent=1 // pred_fallthru
      _
    // Predicated region
    $region38: #{tpu_custom_call.1} parent=1 // pred_check
      _
    $region39: #{tpu_custom_call.1} parent=1 // pred_check_branch
      %36 = sbr.rel (0) target = $region41
    $region40: #{tpu_custom_call.1} parent=1 // pred_region
      _
    $region41: #{tpu_custom_call.1} parent=1 // pred_fallthru
      _
    // Predicated region
    $region42: #{tpu_custom_call.1} parent=1 // pred_check
      _
    $region43: #{tpu_custom_call.1} parent=1 // pred_check_branch
      %38 = sbr.rel (0) target = $region45
    $region44: #{tpu_custom_call.1} parent=1 // pred_region
      _
    $region45: #{tpu_custom_call.1} parent=1 // pred_fallthru
      _
    %v39 = vld [vmem:[%s0] sm:$0xff]
    %v40 = vld [vmem:[%s0 + $0x8] sm:$0xff]
    %v41 = vld [vmem:[%s2] sm:$0xff]
    %v42 = vld [vmem:[%s2 + $0x8] sm:$0xff]
    %v43 = vld [vmem:[%s1] sm:$0xff]
    %v44 = vld [vmem:[%s1 + $0x8] sm:$0xff]
    %vm45 = vcmask 130048
    %v47 = vsel %vm45, %v39, 0
    %v50 = vsel %vm45, %v40, 0
    %52 = vmatprep.subr.mxu0 0.0
    %53 = vmatpush1.msra.mxu0 %v41
    %54 = vmatprep.subr.mxu0 0.0
    %55 = vmatpush1.msra.mxu0 %v42
    %56 = vmatprep.subr.mxu0 0.0
    %57 = vmatpush1.msra.mxu0 0.0
    %58 = vmatprep.subr.mxu0 0.0
    %59 = vmatpush1.msra.mxu0 0.0
    %60 = vmatprep.subr.mxu0 0.0
    %61 = vmatpush1.msra.mxu0 0.0
    %62 = vmatprep.subr.mxu0 0.0
    %63 = vmatpush1.msra.mxu0 0.0
    %64 = vmatprep.subr.mxu0 0.0
    %65 = vmatpush1.msra.mxu0 0.0
    %66 = vmatprep.subr.mxu0 0.0
    %67 = vmatpush1.msra.mxu0 0.0
    %68 = vmatprep.subr.mxu0 0.0
    %69 = vmatpush1.msra.mxu0 0.0
    %70 = vmatprep.subr.mxu0 0.0
    %71 = vmatpush1.msra.mxu0 0.0
    %72 = vmatprep.subr.mxu0 0.0
    %73 = vmatpush1.msra.mxu0 0.0
    %74 = vmatprep.subr.mxu0 0.0
    %75 = vmatpush1.msra.mxu0 0.0
    %76 = vmatprep.subr.mxu0 0.0
    %77 = vmatpush1.msra.mxu0 0.0
    %78 = vmatprep.subr.mxu0 0.0
    %79 = vmatpush1.msra.mxu0 0.0
    %80 = vmatprep.subr.mxu0 0.0
    %81 = vmatpush1.msra.mxu0 0.0
    %82 = vmatprep.subr.mxu0 0.0
    %83 = vmatpush1.msra.mxu0 0.0
    %84 = vmatprep.subr.mxu0 0.0
    %85 = vmatpush1.msra.mxu0 0.0
    %86 = vmatprep.subr.mxu0 0.0
    %87 = vmatpush1.msra.mxu0 0.0
    %88 = vmatprep.subr.mxu0 0.0
    %89 = vmatpush1.msra.mxu0 0.0
    %90 = vmatprep.subr.mxu0 0.0
    %91 = vmatpush1.msra.mxu0 0.0
    %92 = vmatprep.subr.mxu0 0.0
    %93 = vmatpush1.msra.mxu0 0.0
    %94 = vmatprep.subr.mxu0 0.0
    %95 = vmatpush1.msra.mxu0 0.0
    %96 = vmatprep.subr.mxu0 0.0
    %97 = vmatpush1.msra.mxu0 0.0
    %98 = vmatprep.subr.mxu0 0.0
    %99 = vmatpush1.msra.mxu0 0.0
    %100 = vmatprep.subr.mxu0 0.0
    %101 = vmatpush1.msra.mxu0 0.0
    %102 = vmatprep.subr.mxu0 0.0
    %103 = vmatpush1.msra.mxu0 0.0
    %104 = vmatprep.subr.mxu0 0.0
    %105 = vmatpush1.msra.mxu0 0.0
    %106 = vmatprep.subr.mxu0 0.0
    %107 = vmatpush1.msra.mxu0 0.0
    %108 = vmatprep.subr.mxu0 0.0
    %109 = vmatpush1.msra.mxu0 0.0
    %110 = vmatprep.subr.mxu0 0.0
    %111 = vmatpush1.msra.mxu0 0.0
    %112 = vmatprep.subr.mxu0 0.0
    %113 = vmatpush1.msra.mxu0 0.0
    %114 = vmatprep.subr.mxu0 0.0
    %115 = vmatpush1.msra.mxu0 0.0
    %116 = vmatprep.mubr.f32.mxu0 0.0
    %117 = vmatmul.mubr.f32.gmra.mrb[0].mxu0 %v47
    %v118 = vpop.f32.mrb[0].mxu0
    %v119 = vadd.f32 %v43, %v118
    %v120 = vpop.f32.mrb[0].mxu0
    %121 = vmatprep.mubr.f32.mxu0 0.0
    %122 = vmatmul.mubr.f32.gmra.mrb[0].mxu0 %v50
    %v123 = vpop.f32.mrb[0].mxu0
    %v124 = vadd.f32 %v44, %v123
    %v125 = vpop.f32.mrb[0].mxu0
    %126 = vdwg.mxu0
    %v127 = vld [vmem:[%s3] sm:$0xff]
    %v128 = vld [vmem:[%s3 + $0x8] sm:$0xff]
    %v129 = vld [vmem:[%s3 + $0x10] sm:$0xff]
    %v130 = vld [vmem:[%s3 + $0x18] sm:$0xff]
    %v131 = vld [vmem:[%s4] sm:$0x1]
    %v133 = vlaneseq
    %v134 = vshrl.u32 %v133, 7
    %v135 = vsub.s32 0, %v134
    %v136 = vrot.slane %v131, %v135
    %vm138 = vcmask 261120
    %v140 = vsel %vm138, %v119, 0
    %v143 = vsel %vm138, %v124, 0
    %145 = vmatprep.subr.mxu0 0.0
    %146 = vmatpush1.msra.mxu0 %v127
    %147 = vmatprep.subr.mxu0 0.0
    %148 = vmatpush1.msra.mxu0 %v128
    %149 = vmatprep.subr.mxu0 0.0
    %150 = vmatpush1.msra.mxu0 %v129
    %151 = vmatprep.subr.mxu0 0.0
    %152 = vmatpush1.msra.mxu0 %v130
    %153 = vmatprep.subr.mxu0 0.0
    %154 = vmatpush1.msra.mxu0 0.0
    %155 = vmatprep.subr.mxu0 0.0
    %156 = vmatpush1.msra.mxu0 0.0
    %157 = vmatprep.subr.mxu0 0.0
    %158 = vmatpush1.msra.mxu0 0.0
    %159 = vmatprep.subr.mxu0 0.0
    %160 = vmatpush1.msra.mxu0 0.0
    %161 = vmatprep.subr.mxu0 0.0
    %162 = vmatpush1.msra.mxu0 0.0
    %163 = vmatprep.subr.mxu0 0.0
    %164 = vmatpush1.msra.mxu0 0.0
    %165 = vmatprep.subr.mxu0 0.0
    %166 = vmatpush1.msra.mxu0 0.0
    %167 = vmatprep.subr.mxu0 0.0
    %168 = vmatpush1.msra.mxu0 0.0
    %169 = vmatprep.subr.mxu0 0.0
    %170 = vmatpush1.msra.mxu0 0.0
    %171 = vmatprep.subr.mxu0 0.0
    %172 = vmatpush1.msra.mxu0 0.0
    %173 = vmatprep.subr.mxu0 0.0
    %174 = vmatpush1.msra.mxu0 0.0
    %175 = vmatprep.subr.mxu0 0.0
    %176 = vmatpush1.msra.mxu0 0.0
    %177 = vmatprep.subr.mxu0 0.0
    %178 = vmatpush1.msra.mxu0 0.0
    %179 = vmatprep.subr.mxu0 0.0
    %180 = vmatpush1.msra.mxu0 0.0
    %181 = vmatprep.subr.mxu0 0.0
    %182 = vmatpush1.msra.mxu0 0.0
    %183 = vmatprep.subr.mxu0 0.0
    %184 = vmatpush1.msra.mxu0 0.0
    %185 = vmatprep.subr.mxu0 0.0
    %186 = vmatpush1.msra.mxu0 0.0
    %187 = vmatprep.subr.mxu0 0.0
    %188 = vmatpush1.msra.mxu0 0.0
    %189 = vmatprep.subr.mxu0 0.0
    %190 = vmatpush1.msra.mxu0 0.0
    %191 = vmatprep.subr.mxu0 0.0
    %192 = vmatpush1.msra.mxu0 0.0
    %193 = vmatprep.subr.mxu0 0.0
    %194 = vmatpush1.msra.mxu0 0.0
    %195 = vmatprep.subr.mxu0 0.0
    %196 = vmatpush1.msra.mxu0 0.0
    %197 = vmatprep.subr.mxu0 0.0
    %198 = vmatpush1.msra.mxu0 0.0
    %199 = vmatprep.subr.mxu0 0.0
    %200 = vmatpush1.msra.mxu0 0.0
    %201 = vmatprep.subr.mxu0 0.0
    %202 = vmatpush1.msra.mxu0 0.0
    %203 = vmatprep.subr.mxu0 0.0
    %204 = vmatpush1.msra.mxu0 0.0
    %205 = vmatprep.subr.mxu0 0.0
    %206 = vmatpush1.msra.mxu0 0.0
    %207 = vmatprep.subr.mxu0 0.0
    %208 = vmatpush1.msra.mxu0 0.0
    %209 = vmatprep.mubr.f32.mxu0 0.0
    %210 = vmatmul.mubr.f32.gmra.mrb[0].mxu0 %v140
    %v211 = vpop.f32.mrb[0].mxu0
    %v212 = vadd.f32 %v136, %v211
    %v213 = vpop.f32.mrb[0].mxu0
    %214 = vmatprep.mubr.f32.mxu0 0.0
    %215 = vmatmul.mubr.f32.gmra.mrb[0].mxu0 %v143
    %v216 = vpop.f32.mrb[0].mxu0
    %v217 = vadd.f32 %v136, %v216
    %v218 = vpop.f32.mrb[0].mxu0
    %219 = vdwg.mxu0
    %222 = vrot.lane.b32.xlu0 %v212, 120
    %v223 = vpop.permute.xlu0 %222
    %224 = vrot.lane.b32.xlu0 %v217, 120
    %v225 = vpop.permute.xlu0 %224
    %226 = vrot.lane.b32.xlu0 %v212, 112
    %v227 = vpop.permute.xlu0 %226
    %228 = vrot.lane.b32.xlu0 %v217, 112
    %v229 = vpop.permute.xlu0 %228
    %230 = vrot.lane.b32.xlu0 %v212, 104
    %v231 = vpop.permute.xlu0 %230
    %232 = vrot.lane.b32.xlu0 %v217, 104
    %v233 = vpop.permute.xlu0 %232
    %234 = vrot.lane.b32.xlu0 %v212, 96
    %v235 = vpop.permute.xlu0 %234
    %vm236 = vcmask 64512
    %v237 = vsel %vm236, %v212, 0
    %v239 = vsel %vm236, %v235, 0
    %241 = vmatprep.subr.mxu0 0.0
    %242 = vmatpush1.xpose.msra.mxu0 %v239
    %243 = vmatprep.subr.mxu0 0.0
    %244 = vmatpush1.xpose.msra.mxu0 0.0
    %245 = vmatprep.subr.mxu0 0.0
    %246 = vmatpush1.xpose.msra.mxu0 0.0
    %247 = vmatprep.subr.mxu0 0.0
    %248 = vmatpush1.xpose.msra.mxu0 0.0
    %249 = vmatprep.subr.mxu0 0.0
    %250 = vmatpush1.xpose.msra.mxu0 0.0
    %251 = vmatprep.subr.mxu0 0.0
    %252 = vmatpush1.xpose.msra.mxu0 0.0
    %253 = vmatprep.subr.mxu0 0.0
    %254 = vmatpush1.xpose.msra.mxu0 0.0
    %255 = vmatprep.subr.mxu0 0.0
    %256 = vmatpush1.xpose.msra.mxu0 0.0
    %257 = vmatprep.subr.mxu0 0.0
    %258 = vmatpush1.xpose.msra.mxu0 0.0
    %259 = vmatprep.subr.mxu0 0.0
    %260 = vmatpush1.xpose.msra.mxu0 0.0
    %261 = vmatprep.subr.mxu0 0.0
    %262 = vmatpush1.xpose.msra.mxu0 0.0
    %263 = vmatprep.subr.mxu0 0.0
    %264 = vmatpush1.xpose.msra.mxu0 0.0
    %265 = vmatprep.subr.mxu0 0.0
    %266 = vmatpush1.xpose.msra.mxu0 0.0
    %267 = vmatprep.subr.mxu0 0.0
    %268 = vmatpush1.xpose.msra.mxu0 0.0
    %269 = vmatprep.subr.mxu0 0.0
    %270 = vmatpush1.xpose.msra.mxu0 0.0
    %271 = vmatprep.subr.mxu0 0.0
    %272 = vmatpush1.xpose.msra.mxu0 0.0
    %273 = vmatprep.subr.mxu0 0.0
    %274 = vmatpush1.xpose.msra.mxu0 0.0
    %275 = vmatprep.subr.mxu0 0.0
    %276 = vmatpush1.xpose.msra.mxu0 0.0
    %277 = vmatprep.subr.mxu0 0.0
    %278 = vmatpush1.xpose.msra.mxu0 0.0
    %279 = vmatprep.subr.mxu0 0.0
    %280 = vmatpush1.xpose.msra.mxu0 0.0
    %281 = vmatprep.subr.mxu0 0.0
    %282 = vmatpush1.xpose.msra.mxu0 0.0
    %283 = vmatprep.subr.mxu0 0.0
    %284 = vmatpush1.xpose.msra.mxu0 0.0
    %285 = vmatprep.subr.mxu0 0.0
    %286 = vmatpush1.xpose.msra.mxu0 0.0
    %287 = vmatprep.subr.mxu0 0.0
    %288 = vmatpush1.xpose.msra.mxu0 0.0
    %289 = vmatprep.subr.mxu0 0.0
    %290 = vmatpush1.xpose.msra.mxu0 0.0
    %291 = vmatprep.subr.mxu0 0.0
    %292 = vmatpush1.xpose.msra.mxu0 0.0
    %293 = vmatprep.subr.mxu0 0.0
    %294 = vmatpush1.xpose.msra.mxu0 0.0
    %295 = vmatprep.subr.mxu0 0.0
    %296 = vmatpush1.xpose.msra.mxu0 0.0
    %297 = vmatprep.subr.mxu0 0.0
    %298 = vmatpush1.xpose.msra.mxu0 0.0
    %299 = vmatprep.subr.mxu0 0.0
    %300 = vmatpush1.xpose.msra.mxu0 0.0
    %301 = vmatprep.subr.mxu0 0.0
    %302 = vmatpush1.xpose.msra.mxu0 0.0
    %303 = vmatprep.subr.mxu0 0.0
    %304 = vmatpush1.xpose.msra.mxu0 0.0
    %305 = vmatprep.mubr.f32.mxu0 0.0
    %306 = vmatmul.mubr.f32.gmra.mrb[0].mxu0 %v237
    %v307 = vpop.f32.mrb[0].mxu0
    %v308 = vadd.f32 0.0, %v307
    %v309 = vpop.f32.mrb[0].mxu0
    %310 = vdwg.mxu0
    %311 = vrot.lane.b32.xlu0 %v217, 96
    %v312 = vpop.permute.xlu0 %311
    %v313 = vsel %vm236, %v217, 0
    %v315 = vsel %vm236, %v312, 0
    %317 = vmatprep.subr.mxu0 0.0
    %318 = vmatpush1.xpose.msra.mxu0 %v315
    %319 = vmatprep.subr.mxu0 0.0
    %320 = vmatpush1.xpose.msra.mxu0 0.0
    %321 = vmatprep.subr.mxu0 0.0
    %322 = vmatpush1.xpose.msra.mxu0 0.0
    %323 = vmatprep.subr.mxu0 0.0
    %324 = vmatpush1.xpose.msra.mxu0 0.0
    %325 = vmatprep.subr.mxu0 0.0
    %326 = vmatpush1.xpose.msra.mxu0 0.0
    %327 = vmatprep.subr.mxu0 0.0
    %328 = vmatpush1.xpose.msra.mxu0 0.0
    %329 = vmatprep.subr.mxu0 0.0
    %330 = vmatpush1.xpose.msra.mxu0 0.0
    %331 = vmatprep.subr.mxu0 0.0
    %332 = vmatpush1.xpose.msra.mxu0 0.0
    %333 = vmatprep.subr.mxu0 0.0
    %334 = vmatpush1.xpose.msra.mxu0 0.0
    %335 = vmatprep.subr.mxu0 0.0
    %336 = vmatpush1.xpose.msra.mxu0 0.0
    %337 = vmatprep.subr.mxu0 0.0
    %338 = vmatpush1.xpose.msra.mxu0 0.0
    %339 = vmatprep.subr.mxu0 0.0
    %340 = vmatpush1.xpose.msra.mxu0 0.0
    %341 = vmatprep.subr.mxu0 0.0
    %342 = vmatpush1.xpose.msra.mxu0 0.0
    %343 = vmatprep.subr.mxu0 0.0
    %344 = vmatpush1.xpose.msra.mxu0 0.0
    %345 = vmatprep.subr.mxu0 0.0
    %346 = vmatpush1.xpose.msra.mxu0 0.0
    %347 = vmatprep.subr.mxu0 0.0
    %348 = vmatpush1.xpose.msra.mxu0 0.0
    %349 = vmatprep.subr.mxu0 0.0
    %350 = vmatpush1.xpose.msra.mxu0 0.0
    %351 = vmatprep.subr.mxu0 0.0
    %352 = vmatpush1.xpose.msra.mxu0 0.0
    %353 = vmatprep.subr.mxu0 0.0
    %354 = vmatpush1.xpose.msra.mxu0 0.0
    %355 = vmatprep.subr.mxu0 0.0
    %356 = vmatpush1.xpose.msra.mxu0 0.0
    %357 = vmatprep.subr.mxu0 0.0
    %358 = vmatpush1.xpose.msra.mxu0 0.0
    %359 = vmatprep.subr.mxu0 0.0
    %360 = vmatpush1.xpose.msra.mxu0 0.0
    %361 = vmatprep.subr.mxu0 0.0
    %362 = vmatpush1.xpose.msra.mxu0 0.0
    %363 = vmatprep.subr.mxu0 0.0
    %364 = vmatpush1.xpose.msra.mxu0 0.0
    %365 = vmatprep.subr.mxu0 0.0
    %366 = vmatpush1.xpose.msra.mxu0 0.0
    %367 = vmatprep.subr.mxu0 0.0
    %368 = vmatpush1.xpose.msra.mxu0 0.0
    %369 = vmatprep.subr.mxu0 0.0
    %370 = vmatpush1.xpose.msra.mxu0 0.0
    %371 = vmatprep.subr.mxu0 0.0
    %372 = vmatpush1.xpose.msra.mxu0 0.0
    %373 = vmatprep.subr.mxu0 0.0
    %374 = vmatpush1.xpose.msra.mxu0 0.0
    %375 = vmatprep.subr.mxu0 0.0
    %376 = vmatpush1.xpose.msra.mxu0 0.0
    %377 = vmatprep.subr.mxu0 0.0
    %378 = vmatpush1.xpose.msra.mxu0 0.0
    %379 = vmatprep.subr.mxu0 0.0
    %380 = vmatpush1.xpose.msra.mxu0 0.0
    %381 = vmatprep.mubr.f32.mxu0 0.0
    %382 = vmatmul.mubr.f32.gmra.mrb[0].mxu0 %v313
    %v383 = vpop.f32.mrb[0].mxu0
    %v384 = vadd.f32 0.0, %v383
    %v385 = vpop.f32.mrb[0].mxu0
    %386 = vdwg.mxu0
    %387 = vrot.lane.b32.xlu0 %v223, 96
    %v388 = vpop.permute.xlu0 %387
    %v389 = vsel %vm236, %v223, 0
    %v391 = vsel %vm236, %v388, 0
    %393 = vmatprep.subr.mxu0 0.0
    %394 = vmatpush1.xpose.msra.mxu0 %v391
    %395 = vmatprep.subr.mxu0 0.0
    %396 = vmatpush1.xpose.msra.mxu0 0.0
    %397 = vmatprep.subr.mxu0 0.0
    %398 = vmatpush1.xpose.msra.mxu0 0.0
    %399 = vmatprep.subr.mxu0 0.0
    %400 = vmatpush1.xpose.msra.mxu0 0.0
    %401 = vmatprep.subr.mxu0 0.0
    %402 = vmatpush1.xpose.msra.mxu0 0.0
    %403 = vmatprep.subr.mxu0 0.0
    %404 = vmatpush1.xpose.msra.mxu0 0.0
    %405 = vmatprep.subr.mxu0 0.0
    %406 = vmatpush1.xpose.msra.mxu0 0.0
    %407 = vmatprep.subr.mxu0 0.0
    %408 = vmatpush1.xpose.msra.mxu0 0.0
    %409 = vmatprep.subr.mxu0 0.0
    %410 = vmatpush1.xpose.msra.mxu0 0.0
    %411 = vmatprep.subr.mxu0 0.0
    %412 = vmatpush1.xpose.msra.mxu0 0.0
    %413 = vmatprep.subr.mxu0 0.0
    %414 = vmatpush1.xpose.msra.mxu0 0.0
    %415 = vmatprep.subr.mxu0 0.0
    %416 = vmatpush1.xpose.msra.mxu0 0.0
    %417 = vmatprep.subr.mxu0 0.0
    %418 = vmatpush1.xpose.msra.mxu0 0.0
    %419 = vmatprep.subr.mxu0 0.0
    %420 = vmatpush1.xpose.msra.mxu0 0.0
    %421 = vmatprep.subr.mxu0 0.0
    %422 = vmatpush1.xpose.msra.mxu0 0.0
    %423 = vmatprep.subr.mxu0 0.0
    %424 = vmatpush1.xpose.msra.mxu0 0.0
    %425 = vmatprep.subr.mxu0 0.0
    %426 = vmatpush1.xpose.msra.mxu0 0.0
    %427 = vmatprep.subr.mxu0 0.0
    %428 = vmatpush1.xpose.msra.mxu0 0.0
    %429 = vmatprep.subr.mxu0 0.0
    %430 = vmatpush1.xpose.msra.mxu0 0.0
    %431 = vmatprep.subr.mxu0 0.0
    %432 = vmatpush1.xpose.msra.mxu0 0.0
    %433 = vmatprep.subr.mxu0 0.0
    %434 = vmatpush1.xpose.msra.mxu0 0.0
    %435 = vmatprep.subr.mxu0 0.0
    %436 = vmatpush1.xpose.msra.mxu0 0.0
    %437 = vmatprep.subr.mxu0 0.0
    %438 = vmatpush1.xpose.msra.mxu0 0.0
    %439 = vmatprep.subr.mxu0 0.0
    %440 = vmatpush1.xpose.msra.mxu0 0.0
    %441 = vmatprep.subr.mxu0 0.0
    %442 = vmatpush1.xpose.msra.mxu0 0.0
    %443 = vmatprep.subr.mxu0 0.0
    %444 = vmatpush1.xpose.msra.mxu0 0.0
    %445 = vmatprep.subr.mxu0 0.0
    %446 = vmatpush1.xpose.msra.mxu0 0.0
    %447 = vmatprep.subr.mxu0 0.0
    %448 = vmatpush1.xpose.msra.mxu0 0.0
    %449 = vmatprep.subr.mxu0 0.0
    %450 = vmatpush1.xpose.msra.mxu0 0.0
    %451 = vmatprep.subr.mxu0 0.0
    %452 = vmatpush1.xpose.msra.mxu0 0.0
    %453 = vmatprep.subr.mxu0 0.0
    %454 = vmatpush1.xpose.msra.mxu0 0.0
    %455 = vmatprep.subr.mxu0 0.0
    %456 = vmatpush1.xpose.msra.mxu0 0.0
    %457 = vmatprep.mubr.f32.mxu0 0.0
    %458 = vmatmul.mubr.f32.gmra.mrb[0].mxu0 %v389
    %v459 = vpop.f32.mrb[0].mxu0
    %v460 = vadd.f32 0.0, %v459
    %v461 = vpop.f32.mrb[0].mxu0
    %462 = vdwg.mxu0
    %463 = vrot.lane.b32.xlu0 %v225, 96
    %v464 = vpop.permute.xlu0 %463
    %v465 = vsel %vm236, %v225, 0
    %v467 = vsel %vm236, %v464, 0
    %469 = vmatprep.subr.mxu0 0.0
    %470 = vmatpush1.xpose.msra.mxu0 %v467
    %471 = vmatprep.subr.mxu0 0.0
    %472 = vmatpush1.xpose.msra.mxu0 0.0
    %473 = vmatprep.subr.mxu0 0.0
    %474 = vmatpush1.xpose.msra.mxu0 0.0
    %475 = vmatprep.subr.mxu0 0.0
    %476 = vmatpush1.xpose.msra.mxu0 0.0
    %477 = vmatprep.subr.mxu0 0.0
    %478 = vmatpush1.xpose.msra.mxu0 0.0
    %479 = vmatprep.subr.mxu0 0.0
    %480 = vmatpush1.xpose.msra.mxu0 0.0
    %481 = vmatprep.subr.mxu0 0.0
    %482 = vmatpush1.xpose.msra.mxu0 0.0
    %483 = vmatprep.subr.mxu0 0.0
    %484 = vmatpush1.xpose.msra.mxu0 0.0
    %485 = vmatprep.subr.mxu0 0.0
    %486 = vmatpush1.xpose.msra.mxu0 0.0
    %487 = vmatprep.subr.mxu0 0.0
    %488 = vmatpush1.xpose.msra.mxu0 0.0
    %489 = vmatprep.subr.mxu0 0.0
    %490 = vmatpush1.xpose.msra.mxu0 0.0
    %491 = vmatprep.subr.mxu0 0.0
    %492 = vmatpush1.xpose.msra.mxu0 0.0
    %493 = vmatprep.subr.mxu0 0.0
    %494 = vmatpush1.xpose.msra.mxu0 0.0
    %495 = vmatprep.subr.mxu0 0.0
    %496 = vmatpush1.xpose.msra.mxu0 0.0
    %497 = vmatprep.subr.mxu0 0.0
    %498 = vmatpush1.xpose.msra.mxu0 0.0
    %499 = vmatprep.subr.mxu0 0.0
    %500 = vmatpush1.xpose.msra.mxu0 0.0
    %501 = vmatprep.subr.mxu0 0.0
    %502 = vmatpush1.xpose.msra.mxu0 0.0
    %503 = vmatprep.subr.mxu0 0.0
    %504 = vmatpush1.xpose.msra.mxu0 0.0
    %505 = vmatprep.subr.mxu0 0.0
    %506 = vmatpush1.xpose.msra.mxu0 0.0
    %507 = vmatprep.subr.mxu0 0.0
    %508 = vmatpush1.xpose.msra.mxu0 0.0
    %509 = vmatprep.subr.mxu0 0.0
    %510 = vmatpush1.xpose.msra.mxu0 0.0
    %511 = vmatprep.subr.mxu0 0.0
    %512 = vmatpush1.xpose.msra.mxu0 0.0
    %513 = vmatprep.subr.mxu0 0.0
    %514 = vmatpush1.xpose.msra.mxu0 0.0
    %515 = vmatprep.subr.mxu0 0.0
    %516 = vmatpush1.xpose.msra.mxu0 0.0
    %517 = vmatprep.subr.mxu0 0.0
    %518 = vmatpush1.xpose.msra.mxu0 0.0
    %519 = vmatprep.subr.mxu0 0.0
    %520 = vmatpush1.xpose.msra.mxu0 0.0
    %521 = vmatprep.subr.mxu0 0.0
    %522 = vmatpush1.xpose.msra.mxu0 0.0
    %523 = vmatprep.subr.mxu0 0.0
    %524 = vmatpush1.xpose.msra.mxu0 0.0
    %525 = vmatprep.subr.mxu0 0.0
    %526 = vmatpush1.xpose.msra.mxu0 0.0
    %527 = vmatprep.subr.mxu0 0.0
    %528 = vmatpush1.xpose.msra.mxu0 0.0
    %529 = vmatprep.subr.mxu0 0.0
    %530 = vmatpush1.xpose.msra.mxu0 0.0
    %531 = vmatprep.subr.mxu0 0.0
    %532 = vmatpush1.xpose.msra.mxu0 0.0
    %533 = vmatprep.mubr.f32.mxu0 0.0
    %534 = vmatmul.mubr.f32.gmra.mrb[0].mxu0 %v465
    %v535 = vpop.f32.mrb[0].mxu0
    %v536 = vadd.f32 0.0, %v535
    %v537 = vpop.f32.mrb[0].mxu0
    %538 = vdwg.mxu0
    %539 = vrot.lane.b32.xlu0 %v227, 96
    %v540 = vpop.permute.xlu0 %539
    %v541 = vsel %vm236, %v227, 0
    %v543 = vsel %vm236, %v540, 0
    %545 = vmatprep.subr.mxu0 0.0
    %546 = vmatpush1.xpose.msra.mxu0 %v543
    %547 = vmatprep.subr.mxu0 0.0
    %548 = vmatpush1.xpose.msra.mxu0 0.0
    %549 = vmatprep.subr.mxu0 0.0
    %550 = vmatpush1.xpose.msra.mxu0 0.0
    %551 = vmatprep.subr.mxu0 0.0
    %552 = vmatpush1.xpose.msra.mxu0 0.0
    %553 = vmatprep.subr.mxu0 0.0
    %554 = vmatpush1.xpose.msra.mxu0 0.0
    %555 = vmatprep.subr.mxu0 0.0
    %556 = vmatpush1.xpose.msra.mxu0 0.0
    %557 = vmatprep.subr.mxu0 0.0
    %558 = vmatpush1.xpose.msra.mxu0 0.0
    %559 = vmatprep.subr.mxu0 0.0
    %560 = vmatpush1.xpose.msra.mxu0 0.0
    %561 = vmatprep.subr.mxu0 0.0
    %562 = vmatpush1.xpose.msra.mxu0 0.0
    %563 = vmatprep.subr.mxu0 0.0
    %564 = vmatpush1.xpose.msra.mxu0 0.0
    %565 = vmatprep.subr.mxu0 0.0
    %566 = vmatpush1.xpose.msra.mxu0 0.0
    %567 = vmatprep.subr.mxu0 0.0
    %568 = vmatpush1.xpose.msra.mxu0 0.0
    %569 = vmatprep.subr.mxu0 0.0
    %570 = vmatpush1.xpose.msra.mxu0 0.0
    %571 = vmatprep.subr.mxu0 0.0
    %572 = vmatpush1.xpose.msra.mxu0 0.0
    %573 = vmatprep.subr.mxu0 0.0
    %574 = vmatpush1.xpose.msra.mxu0 0.0
    %575 = vmatprep.subr.mxu0 0.0
    %576 = vmatpush1.xpose.msra.mxu0 0.0
    %577 = vmatprep.subr.mxu0 0.0
    %578 = vmatpush1.xpose.msra.mxu0 0.0
    %579 = vmatprep.subr.mxu0 0.0
    %580 = vmatpush1.xpose.msra.mxu0 0.0
    %581 = vmatprep.subr.mxu0 0.0
    %582 = vmatpush1.xpose.msra.mxu0 0.0
    %583 = vmatprep.subr.mxu0 0.0
    %584 = vmatpush1.xpose.msra.mxu0 0.0
    %585 = vmatprep.subr.mxu0 0.0
    %586 = vmatpush1.xpose.msra.mxu0 0.0
    %587 = vmatprep.subr.mxu0 0.0
    %588 = vmatpush1.xpose.msra.mxu0 0.0
    %589 = vmatprep.subr.mxu0 0.0
    %590 = vmatpush1.xpose.msra.mxu0 0.0
    %591 = vmatprep.subr.mxu0 0.0
    %592 = vmatpush1.xpose.msra.mxu0 0.0
    %593 = vmatprep.subr.mxu0 0.0
    %594 = vmatpush1.xpose.msra.mxu0 0.0
    %595 = vmatprep.subr.mxu0 0.0
    %596 = vmatpush1.xpose.msra.mxu0 0.0
    %597 = vmatprep.subr.mxu0 0.0
    %598 = vmatpush1.xpose.msra.mxu0 0.0
    %599 = vmatprep.subr.mxu0 0.0
    %600 = vmatpush1.xpose.msra.mxu0 0.0
    %601 = vmatprep.subr.mxu0 0.0
    %602 = vmatpush1.xpose.msra.mxu0 0.0
    %603 = vmatprep.subr.mxu0 0.0
    %604 = vmatpush1.xpose.msra.mxu0 0.0
    %605 = vmatprep.subr.mxu0 0.0
    %606 = vmatpush1.xpose.msra.mxu0 0.0
    %607 = vmatprep.subr.mxu0 0.0
    %608 = vmatpush1.xpose.msra.mxu0 0.0
    %609 = vmatprep.mubr.f32.mxu0 0.0
    %610 = vmatmul.mubr.f32.gmra.mrb[0].mxu0 %v541
    %v611 = vpop.f32.mrb[0].mxu0
    %v612 = vadd.f32 0.0, %v611
    %v613 = vpop.f32.mrb[0].mxu0
    %614 = vdwg.mxu0
    %615 = vrot.lane.b32.xlu0 %v229, 96
    %v616 = vpop.permute.xlu0 %615
    %v617 = vsel %vm236, %v229, 0
    %v619 = vsel %vm236, %v616, 0
    %621 = vmatprep.subr.mxu0 0.0
    %622 = vmatpush1.xpose.msra.mxu0 %v619
    %623 = vmatprep.subr.mxu0 0.0
    %624 = vmatpush1.xpose.msra.mxu0 0.0
    %625 = vmatprep.subr.mxu0 0.0
    %626 = vmatpush1.xpose.msra.mxu0 0.0
    %627 = vmatprep.subr.mxu0 0.0
    %628 = vmatpush1.xpose.msra.mxu0 0.0
    %629 = vmatprep.subr.mxu0 0.0
    %630 = vmatpush1.xpose.msra.mxu0 0.0
    %631 = vmatprep.subr.mxu0 0.0
    %632 = vmatpush1.xpose.msra.mxu0 0.0
    %633 = vmatprep.subr.mxu0 0.0
    %634 = vmatpush1.xpose.msra.mxu0 0.0
    %635 = vmatprep.subr.mxu0 0.0
    %636 = vmatpush1.xpose.msra.mxu0 0.0
    %637 = vmatprep.subr.mxu0 0.0
    %638 = vmatpush1.xpose.msra.mxu0 0.0
    %639 = vmatprep.subr.mxu0 0.0
    %640 = vmatpush1.xpose.msra.mxu0 0.0
    %641 = vmatprep.subr.mxu0 0.0
    %642 = vmatpush1.xpose.msra.mxu0 0.0
    %643 = vmatprep.subr.mxu0 0.0
    %644 = vmatpush1.xpose.msra.mxu0 0.0
    %645 = vmatprep.subr.mxu0 0.0
    %646 = vmatpush1.xpose.msra.mxu0 0.0
    %647 = vmatprep.subr.mxu0 0.0
    %648 = vmatpush1.xpose.msra.mxu0 0.0
    %649 = vmatprep.subr.mxu0 0.0
    %650 = vmatpush1.xpose.msra.mxu0 0.0
    %651 = vmatprep.subr.mxu0 0.0
    %652 = vmatpush1.xpose.msra.mxu0 0.0
    %653 = vmatprep.subr.mxu0 0.0
    %654 = vmatpush1.xpose.msra.mxu0 0.0
    %655 = vmatprep.subr.mxu0 0.0
    %656 = vmatpush1.xpose.msra.mxu0 0.0
    %657 = vmatprep.subr.mxu0 0.0
    %658 = vmatpush1.xpose.msra.mxu0 0.0
    %659 = vmatprep.subr.mxu0 0.0
    %660 = vmatpush1.xpose.msra.mxu0 0.0
    %661 = vmatprep.subr.mxu0 0.0
    %662 = vmatpush1.xpose.msra.mxu0 0.0
    %663 = vmatprep.subr.mxu0 0.0
    %664 = vmatpush1.xpose.msra.mxu0 0.0
    %665 = vmatprep.subr.mxu0 0.0
    %666 = vmatpush1.xpose.msra.mxu0 0.0
    %667 = vmatprep.subr.mxu0 0.0
    %668 = vmatpush1.xpose.msra.mxu0 0.0
    %669 = vmatprep.subr.mxu0 0.0
    %670 = vmatpush1.xpose.msra.mxu0 0.0
    %671 = vmatprep.subr.mxu0 0.0
    %672 = vmatpush1.xpose.msra.mxu0 0.0
    %673 = vmatprep.subr.mxu0 0.0
    %674 = vmatpush1.xpose.msra.mxu0 0.0
    %675 = vmatprep.subr.mxu0 0.0
    %676 = vmatpush1.xpose.msra.mxu0 0.0
    %677 = vmatprep.subr.mxu0 0.0
    %678 = vmatpush1.xpose.msra.mxu0 0.0
    %679 = vmatprep.subr.mxu0 0.0
    %680 = vmatpush1.xpose.msra.mxu0 0.0
    %681 = vmatprep.subr.mxu0 0.0
    %682 = vmatpush1.xpose.msra.mxu0 0.0
    %683 = vmatprep.subr.mxu0 0.0
    %684 = vmatpush1.xpose.msra.mxu0 0.0
    %685 = vmatprep.mubr.f32.mxu0 0.0
    %686 = vmatmul.mubr.f32.gmra.mrb[0].mxu0 %v617
    %v687 = vpop.f32.mrb[0].mxu0
    %v688 = vadd.f32 0.0, %v687
    %v689 = vpop.f32.mrb[0].mxu0
    %690 = vdwg.mxu0
    %691 = vrot.lane.b32.xlu0 %v231, 96
    %v692 = vpop.permute.xlu0 %691
    %v693 = vsel %vm236, %v231, 0
    %v695 = vsel %vm236, %v692, 0
    %697 = vmatprep.subr.mxu0 0.0
    %698 = vmatpush1.xpose.msra.mxu0 %v695
    %699 = vmatprep.subr.mxu0 0.0
    %700 = vmatpush1.xpose.msra.mxu0 0.0
    %701 = vmatprep.subr.mxu0 0.0
    %702 = vmatpush1.xpose.msra.mxu0 0.0
    %703 = vmatprep.subr.mxu0 0.0
    %704 = vmatpush1.xpose.msra.mxu0 0.0
    %705 = vmatprep.subr.mxu0 0.0
    %706 = vmatpush1.xpose.msra.mxu0 0.0
    %707 = vmatprep.subr.mxu0 0.0
    %708 = vmatpush1.xpose.msra.mxu0 0.0
    %709 = vmatprep.subr.mxu0 0.0
    %710 = vmatpush1.xpose.msra.mxu0 0.0
    %711 = vmatprep.subr.mxu0 0.0
    %712 = vmatpush1.xpose.msra.mxu0 0.0
    %713 = vmatprep.subr.mxu0 0.0
    %714 = vmatpush1.xpose.msra.mxu0 0.0
    %715 = vmatprep.subr.mxu0 0.0
    %716 = vmatpush1.xpose.msra.mxu0 0.0
    %717 = vmatprep.subr.mxu0 0.0
    %718 = vmatpush1.xpose.msra.mxu0 0.0
    %719 = vmatprep.subr.mxu0 0.0
    %720 = vmatpush1.xpose.msra.mxu0 0.0
    %721 = vmatprep.subr.mxu0 0.0
    %722 = vmatpush1.xpose.msra.mxu0 0.0
    %723 = vmatprep.subr.mxu0 0.0
    %724 = vmatpush1.xpose.msra.mxu0 0.0
    %725 = vmatprep.subr.mxu0 0.0
    %726 = vmatpush1.xpose.msra.mxu0 0.0
    %727 = vmatprep.subr.mxu0 0.0
    %728 = vmatpush1.xpose.msra.mxu0 0.0
    %729 = vmatprep.subr.mxu0 0.0
    %730 = vmatpush1.xpose.msra.mxu0 0.0
    %731 = vmatprep.subr.mxu0 0.0
    %732 = vmatpush1.xpose.msra.mxu0 0.0
    %733 = vmatprep.subr.mxu0 0.0
    %734 = vmatpush1.xpose.msra.mxu0 0.0
    %735 = vmatprep.subr.mxu0 0.0
    %736 = vmatpush1.xpose.msra.mxu0 0.0
    %737 = vmatprep.subr.mxu0 0.0
    %738 = vmatpush1.xpose.msra.mxu0 0.0
    %739 = vmatprep.subr.mxu0 0.0
    %740 = vmatpush1.xpose.msra.mxu0 0.0
    %741 = vmatprep.subr.mxu0 0.0
    %742 = vmatpush1.xpose.msra.mxu0 0.0
    %743 = vmatprep.subr.mxu0 0.0
    %744 = vmatpush1.xpose.msra.mxu0 0.0
    %745 = vmatprep.subr.mxu0 0.0
    %746 = vmatpush1.xpose.msra.mxu0 0.0
    %747 = vmatprep.subr.mxu0 0.0
    %748 = vmatpush1.xpose.msra.mxu0 0.0
    %749 = vmatprep.subr.mxu0 0.0
    %750 = vmatpush1.xpose.msra.mxu0 0.0
    %751 = vmatprep.subr.mxu0 0.0
    %752 = vmatpush1.xpose.msra.mxu0 0.0
    %753 = vmatprep.subr.mxu0 0.0
    %754 = vmatpush1.xpose.msra.mxu0 0.0
    %755 = vmatprep.subr.mxu0 0.0
    %756 = vmatpush1.xpose.msra.mxu0 0.0
    %757 = vmatprep.subr.mxu0 0.0
    %758 = vmatpush1.xpose.msra.mxu0 0.0
    %759 = vmatprep.subr.mxu0 0.0
    %760 = vmatpush1.xpose.msra.mxu0 0.0
    %761 = vmatprep.mubr.f32.mxu0 0.0
    %762 = vmatmul.mubr.f32.gmra.mrb[0].mxu0 %v693
    %v763 = vpop.f32.mrb[0].mxu0
    %v764 = vadd.f32 0.0, %v763
    %v765 = vpop.f32.mrb[0].mxu0
    %766 = vdwg.mxu0
    %767 = vrot.lane.b32.xlu0 %v233, 96
    %v768 = vpop.permute.xlu0 %767
    %v769 = vsel %vm236, %v233, 0
    %v771 = vsel %vm236, %v768, 0
    %773 = vmatprep.subr.mxu0 0.0
    %774 = vmatpush1.xpose.msra.mxu0 %v771
    %775 = vmatprep.subr.mxu0 0.0
    %776 = vmatpush1.xpose.msra.mxu0 0.0
    %777 = vmatprep.subr.mxu0 0.0
    %778 = vmatpush1.xpose.msra.mxu0 0.0
    %779 = vmatprep.subr.mxu0 0.0
    %780 = vmatpush1.xpose.msra.mxu0 0.0
    %781 = vmatprep.subr.mxu0 0.0
    %782 = vmatpush1.xpose.msra.mxu0 0.0
    %783 = vmatprep.subr.mxu0 0.0
    %784 = vmatpush1.xpose.msra.mxu0 0.0
    %785 = vmatprep.subr.mxu0 0.0
    %786 = vmatpush1.xpose.msra.mxu0 0.0
    %787 = vmatprep.subr.mxu0 0.0
    %788 = vmatpush1.xpose.msra.mxu0 0.0
    %789 = vmatprep.subr.mxu0 0.0
    %790 = vmatpush1.xpose.msra.mxu0 0.0
    %791 = vmatprep.subr.mxu0 0.0
    %792 = vmatpush1.xpose.msra.mxu0 0.0
    %793 = vmatprep.subr.mxu0 0.0
    %794 = vmatpush1.xpose.msra.mxu0 0.0
    %795 = vmatprep.subr.mxu0 0.0
    %796 = vmatpush1.xpose.msra.mxu0 0.0
    %797 = vmatprep.subr.mxu0 0.0
    %798 = vmatpush1.xpose.msra.mxu0 0.0
    %799 = vmatprep.subr.mxu0 0.0
    %800 = vmatpush1.xpose.msra.mxu0 0.0
    %801 = vmatprep.subr.mxu0 0.0
    %802 = vmatpush1.xpose.msra.mxu0 0.0
    %803 = vmatprep.subr.mxu0 0.0
    %804 = vmatpush1.xpose.msra.mxu0 0.0
    %805 = vmatprep.subr.mxu0 0.0
    %806 = vmatpush1.xpose.msra.mxu0 0.0
    %807 = vmatprep.subr.mxu0 0.0
    %808 = vmatpush1.xpose.msra.mxu0 0.0
    %809 = vmatprep.subr.mxu0 0.0
    %810 = vmatpush1.xpose.msra.mxu0 0.0
    %811 = vmatprep.subr.mxu0 0.0
    %812 = vmatpush1.xpose.msra.mxu0 0.0
    %813 = vmatprep.subr.mxu0 0.0
    %814 = vmatpush1.xpose.msra.mxu0 0.0
    %815 = vmatprep.subr.mxu0 0.0
    %816 = vmatpush1.xpose.msra.mxu0 0.0
    %817 = vmatprep.subr.mxu0 0.0
    %818 = vmatpush1.xpose.msra.mxu0 0.0
    %819 = vmatprep.subr.mxu0 0.0
    %820 = vmatpush1.xpose.msra.mxu0 0.0
    %821 = vmatprep.subr.mxu0 0.0
    %822 = vmatpush1.xpose.msra.mxu0 0.0
    %823 = vmatprep.subr.mxu0 0.0
    %824 = vmatpush1.xpose.msra.mxu0 0.0
    %825 = vmatprep.subr.mxu0 0.0
    %826 = vmatpush1.xpose.msra.mxu0 0.0
    %827 = vmatprep.subr.mxu0 0.0
    %828 = vmatpush1.xpose.msra.mxu0 0.0
    %829 = vmatprep.subr.mxu0 0.0
    %830 = vmatpush1.xpose.msra.mxu0 0.0
    %831 = vmatprep.subr.mxu0 0.0
    %832 = vmatpush1.xpose.msra.mxu0 0.0
    %833 = vmatprep.subr.mxu0 0.0
    %834 = vmatpush1.xpose.msra.mxu0 0.0
    %835 = vmatprep.subr.mxu0 0.0
    %836 = vmatpush1.xpose.msra.mxu0 0.0
    %837 = vmatprep.mubr.f32.mxu0 0.0
    %838 = vmatmul.mubr.f32.gmra.mrb[0].mxu0 %v769
    %v839 = vpop.f32.mrb[0].mxu0
    %v840 = vadd.f32 0.0, %v839
    %v841 = vpop.f32.mrb[0].mxu0
    %842 = vdwg.mxu0
    %v843 = vsel %vm236, %v308, -inf
    %844 = vmax.xlane.f32.xlu0 %v843
    %v845 = vpop.xlane.xlu0 %844
    %v846 = vsel %vm236, %v384, -inf
    %847 = vmax.xlane.f32.xlu0 %v846
    %v848 = vpop.xlane.xlu0 %847
    %v849 = vsel %vm236, %v460, -inf
    %850 = vmax.xlane.f32.xlu0 %v849
    %v851 = vpop.xlane.xlu0 %850
    %v852 = vsel %vm236, %v536, -inf
    %853 = vmax.xlane.f32.xlu0 %v852
    %v854 = vpop.xlane.xlu0 %853
    %v855 = vsel %vm236, %v612, -inf
    %856 = vmax.xlane.f32.xlu0 %v855
    %v857 = vpop.xlane.xlu0 %856
    %v858 = vsel %vm236, %v688, -inf
    %859 = vmax.xlane.f32.xlu0 %v858
    %v860 = vpop.xlane.xlu0 %859
    %v861 = vsel %vm236, %v764, -inf
    %862 = vmax.xlane.f32.xlu0 %v861
    %v863 = vpop.xlane.xlu0 %862
    %v864 = vsel %vm236, %v840, -inf
    %865 = vmax.xlane.f32.xlu0 %v864
    %v866 = vpop.xlane.xlu0 %865
    %v867 = vsub.f32 %v308, %v845
    %v868 = vsub.f32 %v384, %v848
    %v869 = vsub.f32 %v460, %v851
    %v870 = vsub.f32 %v536, %v854
    %v871 = vsub.f32 %v612, %v857
    %v872 = vsub.f32 %v688, %v860
    %v873 = vsub.f32 %v764, %v863
    %v874 = vsub.f32 %v840, %v866
    %v875 = vmul.f32 %v867, 1.442695
    %v876 = vpow.pop %v875
    %v877 = vmul.f32 %v868, 1.442695
    %v878 = vpow.pop %v877
    %v879 = vmul.f32 %v869, 1.442695
    %v880 = vpow.pop %v879
    %v881 = vmul.f32 %v870, 1.442695
    %v882 = vpow.pop %v881
    %v883 = vmul.f32 %v871, 1.442695
    %v884 = vpow.pop %v883
    %v885 = vmul.f32 %v872, 1.442695
    %v886 = vpow.pop %v885
    %v887 = vmul.f32 %v873, 1.442695
    %v888 = vpow.pop %v887
    %v889 = vmul.f32 %v874, 1.442695
    %v890 = vpow.pop %v889
    %v891 = vsel %vm236, %v876, 0.0
    %892 = vadd.xlane.f32.xlu0 %v891
    %v893 = vpop.xlane.xlu0 %892
    %v894 = vsel %vm236, %v878, 0.0
    %895 = vadd.xlane.f32.xlu0 %v894
    %v896 = vpop.xlane.xlu0 %895
    %v897 = vsel %vm236, %v880, 0.0
    %898 = vadd.xlane.f32.xlu0 %v897
    %v899 = vpop.xlane.xlu0 %898
    %v900 = vsel %vm236, %v882, 0.0
    %901 = vadd.xlane.f32.xlu0 %v900
    %v902 = vpop.xlane.xlu0 %901
    %v903 = vsel %vm236, %v884, 0.0
    %904 = vadd.xlane.f32.xlu0 %v903
    %v905 = vpop.xlane.xlu0 %904
    %v906 = vsel %vm236, %v886, 0.0
    %907 = vadd.xlane.f32.xlu0 %v906
    %v908 = vpop.xlane.xlu0 %907
    %v909 = vsel %vm236, %v888, 0.0
    %910 = vadd.xlane.f32.xlu0 %v909
    %v911 = vpop.xlane.xlu0 %910
    %v912 = vsel %vm236, %v890, 0.0
    %913 = vadd.xlane.f32.xlu0 %v912
    %v914 = vpop.xlane.xlu0 %913
    %v915 = vrcp.pop %v893
    %v916 = vrcp.pop %v896
    %v917 = vrcp.pop %v899
    %v918 = vrcp.pop %v902
    %v919 = vrcp.pop %v905
    %v920 = vrcp.pop %v908
    %v921 = vrcp.pop %v911
    %v922 = vrcp.pop %v914
    %v923 = vmul.f32 %v876, %v915
    %v924 = vmul.f32 %v878, %v916
    %v925 = vmul.f32 %v880, %v917
    %v926 = vmul.f32 %v882, %v918
    %v927 = vmul.f32 %v884, %v919
    %v928 = vmul.f32 %v886, %v920
    %v929 = vmul.f32 %v888, %v921
    %v930 = vmul.f32 %v890, %v922
    %931 = vrot.lane.b32.xlu0 %v212, 64
    %v932 = vpop.permute.xlu0 %931
    %v935 = vsel %vm236, %v923, 0
    %937 = vmatprep.subr.mxu0 0.0
    %938 = vmatpush1.msra.mxu0 %v932
    %939 = vmatprep.subr.mxu0 0.0
    %940 = vmatpush1.msra.mxu0 0.0
    %941 = vmatprep.subr.mxu0 0.0
    %942 = vmatpush1.msra.mxu0 0.0
    %943 = vmatprep.subr.mxu0 0.0
    %944 = vmatpush1.msra.mxu0 0.0
    %945 = vmatprep.subr.mxu0 0.0
    %946 = vmatpush1.msra.mxu0 0.0
    %947 = vmatprep.subr.mxu0 0.0
    %948 = vmatpush1.msra.mxu0 0.0
    %949 = vmatprep.subr.mxu0 0.0
    %950 = vmatpush1.msra.mxu0 0.0
    %951 = vmatprep.subr.mxu0 0.0
    %952 = vmatpush1.msra.mxu0 0.0
    %953 = vmatprep.subr.mxu0 0.0
    %954 = vmatpush1.msra.mxu0 0.0
    %955 = vmatprep.subr.mxu0 0.0
    %956 = vmatpush1.msra.mxu0 0.0
    %957 = vmatprep.subr.mxu0 0.0
    %958 = vmatpush1.msra.mxu0 0.0
    %959 = vmatprep.subr.mxu0 0.0
    %960 = vmatpush1.msra.mxu0 0.0
    %961 = vmatprep.subr.mxu0 0.0
    %962 = vmatpush1.msra.mxu0 0.0
    %963 = vmatprep.subr.mxu0 0.0
    %964 = vmatpush1.msra.mxu0 0.0
    %965 = vmatprep.subr.mxu0 0.0
    %966 = vmatpush1.msra.mxu0 0.0
    %967 = vmatprep.subr.mxu0 0.0
    %968 = vmatpush1.msra.mxu0 0.0
    %969 = vmatprep.subr.mxu0 0.0
    %970 = vmatpush1.msra.mxu0 0.0
    %971 = vmatprep.subr.mxu0 0.0
    %972 = vmatpush1.msra.mxu0 0.0
    %973 = vmatprep.subr.mxu0 0.0
    %974 = vmatpush1.msra.mxu0 0.0
    %975 = vmatprep.subr.mxu0 0.0
    %976 = vmatpush1.msra.mxu0 0.0
    %977 = vmatprep.subr.mxu0 0.0
    %978 = vmatpush1.msra.mxu0 0.0
    %979 = vmatprep.subr.mxu0 0.0
    %980 = vmatpush1.msra.mxu0 0.0
    %981 = vmatprep.subr.mxu0 0.0
    %982 = vmatpush1.msra.mxu0 0.0
    %983 = vmatprep.subr.mxu0 0.0
    %984 = vmatpush1.msra.mxu0 0.0
    %985 = vmatprep.subr.mxu0 0.0
    %986 = vmatpush1.msra.mxu0 0.0
    %987 = vmatprep.subr.mxu0 0.0
    %988 = vmatpush1.msra.mxu0 0.0
    %989 = vmatprep.subr.mxu0 0.0
    %990 = vmatpush1.msra.mxu0 0.0
    %991 = vmatprep.subr.mxu0 0.0
    %992 = vmatpush1.msra.mxu0 0.0
    %993 = vmatprep.subr.mxu0 0.0
    %994 = vmatpush1.msra.mxu0 0.0
    %995 = vmatprep.subr.mxu0 0.0
    %996 = vmatpush1.msra.mxu0 0.0
    %997 = vmatprep.subr.mxu0 0.0
    %998 = vmatpush1.msra.mxu0 0.0
    %999 = vmatprep.subr.mxu0 0.0
    %1000 = vmatpush1.msra.mxu0 0.0
    %1001 = vmatprep.mubr.f32.mxu0 0.0
    %1002 = vmatmul.mubr.f32.gmra.mrb[0].mxu0 %v935
    %v1003 = vpop.f32.mrb[0].mxu0
    %v1004 = vadd.f32 0.0, %v1003
    %v1005 = vpop.f32.mrb[0].mxu0
    %1006 = vdwg.mxu0
    %1007 = vrot.lane.b32.xlu0 %v217, 64
    %v1008 = vpop.permute.xlu0 %1007
    %v1011 = vsel %vm236, %v924, 0
    %1013 = vmatprep.subr.mxu0 0.0
    %1014 = vmatpush1.msra.mxu0 %v1008
    %1015 = vmatprep.subr.mxu0 0.0
    %1016 = vmatpush1.msra.mxu0 0.0
    %1017 = vmatprep.subr.mxu0 0.0
    %1018 = vmatpush1.msra.mxu0 0.0
    %1019 = vmatprep.subr.mxu0 0.0
    %1020 = vmatpush1.msra.mxu0 0.0
    %1021 = vmatprep.subr.mxu0 0.0
    %1022 = vmatpush1.msra.mxu0 0.0
    %1023 = vmatprep.subr.mxu0 0.0
    %1024 = vmatpush1.msra.mxu0 0.0
    %1025 = vmatprep.subr.mxu0 0.0
    %1026 = vmatpush1.msra.mxu0 0.0
    %1027 = vmatprep.subr.mxu0 0.0
    %1028 = vmatpush1.msra.mxu0 0.0
    %1029 = vmatprep.subr.mxu0 0.0
    %1030 = vmatpush1.msra.mxu0 0.0
    %1031 = vmatprep.subr.mxu0 0.0
    %1032 = vmatpush1.msra.mxu0 0.0
    %1033 = vmatprep.subr.mxu0 0.0
    %1034 = vmatpush1.msra.mxu0 0.0
    %1035 = vmatprep.subr.mxu0 0.0
    %1036 = vmatpush1.msra.mxu0 0.0
    %1037 = vmatprep.subr.mxu0 0.0
    %1038 = vmatpush1.msra.mxu0 0.0
    %1039 = vmatprep.subr.mxu0 0.0
    %1040 = vmatpush1.msra.mxu0 0.0
    %1041 = vmatprep.subr.mxu0 0.0
    %1042 = vmatpush1.msra.mxu0 0.0
    %1043 = vmatprep.subr.mxu0 0.0
    %1044 = vmatpush1.msra.mxu0 0.0
    %1045 = vmatprep.subr.mxu0 0.0
    %1046 = vmatpush1.msra.mxu0 0.0
    %1047 = vmatprep.subr.mxu0 0.0
    %1048 = vmatpush1.msra.mxu0 0.0
    %1049 = vmatprep.subr.mxu0 0.0
    %1050 = vmatpush1.msra.mxu0 0.0
    %1051 = vmatprep.subr.mxu0 0.0
    %1052 = vmatpush1.msra.mxu0 0.0
    %1053 = vmatprep.subr.mxu0 0.0
    %1054 = vmatpush1.msra.mxu0 0.0
    %1055 = vmatprep.subr.mxu0 0.0
    %1056 = vmatpush1.msra.mxu0 0.0
    %1057 = vmatprep.subr.mxu0 0.0
    %1058 = vmatpush1.msra.mxu0 0.0
    %1059 = vmatprep.subr.mxu0 0.0
    %1060 = vmatpush1.msra.mxu0 0.0
    %1061 = vmatprep.subr.mxu0 0.0
    %1062 = vmatpush1.msra.mxu0 0.0
    %1063 = vmatprep.subr.mxu0 0.0
    %1064 = vmatpush1.msra.mxu0 0.0
    %1065 = vmatprep.subr.mxu0 0.0
    %1066 = vmatpush1.msra.mxu0 0.0
    %1067 = vmatprep.subr.mxu0 0.0
    %1068 = vmatpush1.msra.mxu0 0.0
    %1069 = vmatprep.subr.mxu0 0.0
    %1070 = vmatpush1.msra.mxu0 0.0
    %1071 = vmatprep.subr.mxu0 0.0
    %1072 = vmatpush1.msra.mxu0 0.0
    %1073 = vmatprep.subr.mxu0 0.0
    %1074 = vmatpush1.msra.mxu0 0.0
    %1075 = vmatprep.subr.mxu0 0.0
    %1076 = vmatpush1.msra.mxu0 0.0
    %1077 = vmatprep.mubr.f32.mxu0 0.0
    %1078 = vmatmul.mubr.f32.gmra.mrb[0].mxu0 %v1011
    %v1079 = vpop.f32.mrb[0].mxu0
    %v1080 = vadd.f32 0.0, %v1079
    %v1081 = vpop.f32.mrb[0].mxu0
    %1082 = vdwg.mxu0
    %1083 = vrot.lane.b32.xlu0 %v223, 64
    %v1084 = vpop.permute.xlu0 %1083
    %v1087 = vsel %vm236, %v925, 0
    %1089 = vmatprep.subr.mxu0 0.0
    %1090 = vmatpush1.msra.mxu0 %v1084
    %1091 = vmatprep.subr.mxu0 0.0
    %1092 = vmatpush1.msra.mxu0 0.0
    %1093 = vmatprep.subr.mxu0 0.0
    %1094 = vmatpush1.msra.mxu0 0.0
    %1095 = vmatprep.subr.mxu0 0.0
    %1096 = vmatpush1.msra.mxu0 0.0
    %1097 = vmatprep.subr.mxu0 0.0
    %1098 = vmatpush1.msra.mxu0 0.0
    %1099 = vmatprep.subr.mxu0 0.0
    %1100 = vmatpush1.msra.mxu0 0.0
    %1101 = vmatprep.subr.mxu0 0.0
    %1102 = vmatpush1.msra.mxu0 0.0
    %1103 = vmatprep.subr.mxu0 0.0
    %1104 = vmatpush1.msra.mxu0 0.0
    %1105 = vmatprep.subr.mxu0 0.0
    %1106 = vmatpush1.msra.mxu0 0.0
    %1107 = vmatprep.subr.mxu0 0.0
    %1108 = vmatpush1.msra.mxu0 0.0
    %1109 = vmatprep.subr.mxu0 0.0
    %1110 = vmatpush1.msra.mxu0 0.0
    %1111 = vmatprep.subr.mxu0 0.0
    %1112 = vmatpush1.msra.mxu0 0.0
    %1113 = vmatprep.subr.mxu0 0.0
    %1114 = vmatpush1.msra.mxu0 0.0
    %1115 = vmatprep.subr.mxu0 0.0
    %1116 = vmatpush1.msra.mxu0 0.0
    %1117 = vmatprep.subr.mxu0 0.0
    %1118 = vmatpush1.msra.mxu0 0.0
    %1119 = vmatprep.subr.mxu0 0.0
    %1120 = vmatpush1.msra.mxu0 0.0
    %1121 = vmatprep.subr.mxu0 0.0
    %1122 = vmatpush1.msra.mxu0 0.0
    %1123 = vmatprep.subr.mxu0 0.0
    %1124 = vmatpush1.msra.mxu0 0.0
    %1125 = vmatprep.subr.mxu0 0.0
    %1126 = vmatpush1.msra.mxu0 0.0
    %1127 = vmatprep.subr.mxu0 0.0
    %1128 = vmatpush1.msra.mxu0 0.0
    %1129 = vmatprep.subr.mxu0 0.0
    %1130 = vmatpush1.msra.mxu0 0.0
    %1131 = vmatprep.subr.mxu0 0.0
    %1132 = vmatpush1.msra.mxu0 0.0
    %1133 = vmatprep.subr.mxu0 0.0
    %1134 = vmatpush1.msra.mxu0 0.0
    %1135 = vmatprep.subr.mxu0 0.0
    %1136 = vmatpush1.msra.mxu0 0.0
    %1137 = vmatprep.subr.mxu0 0.0
    %1138 = vmatpush1.msra.mxu0 0.0
    %1139 = vmatprep.subr.mxu0 0.0
    %1140 = vmatpush1.msra.mxu0 0.0
    %1141 = vmatprep.subr.mxu0 0.0
    %1142 = vmatpush1.msra.mxu0 0.0
    %1143 = vmatprep.subr.mxu0 0.0
    %1144 = vmatpush1.msra.mxu0 0.0
    %1145 = vmatprep.subr.mxu0 0.0
    %1146 = vmatpush1.msra.mxu0 0.0
    %1147 = vmatprep.subr.mxu0 0.0
    %1148 = vmatpush1.msra.mxu0 0.0
    %1149 = vmatprep.subr.mxu0 0.0
    %1150 = vmatpush1.msra.mxu0 0.0
    %1151 = vmatprep.subr.mxu0 0.0
    %1152 = vmatpush1.msra.mxu0 0.0
    %1153 = vmatprep.mubr.f32.mxu0 0.0
    %1154 = vmatmul.mubr.f32.gmra.mrb[0].mxu0 %v1087
    %v1155 = vpop.f32.mrb[0].mxu0
    %v1156 = vadd.f32 0.0, %v1155
    %v1157 = vpop.f32.mrb[0].mxu0
    %1158 = vdwg.mxu0
    %1159 = vrot.lane.b32.xlu0 %v225, 64
    %v1160 = vpop.permute.xlu0 %1159
    %v1163 = vsel %vm236, %v926, 0
    %1165 = vmatprep.subr.mxu0 0.0
    %1166 = vmatpush1.msra.mxu0 %v1160
    %1167 = vmatprep.subr.mxu0 0.0
    %1168 = vmatpush1.msra.mxu0 0.0
    %1169 = vmatprep.subr.mxu0 0.0
    %1170 = vmatpush1.msra.mxu0 0.0
    %1171 = vmatprep.subr.mxu0 0.0
    %1172 = vmatpush1.msra.mxu0 0.0
    %1173 = vmatprep.subr.mxu0 0.0
    %1174 = vmatpush1.msra.mxu0 0.0
    %1175 = vmatprep.subr.mxu0 0.0
    %1176 = vmatpush1.msra.mxu0 0.0
    %1177 = vmatprep.subr.mxu0 0.0
    %1178 = vmatpush1.msra.mxu0 0.0
    %1179 = vmatprep.subr.mxu0 0.0
    %1180 = vmatpush1.msra.mxu0 0.0
    %1181 = vmatprep.subr.mxu0 0.0
    %1182 = vmatpush1.msra.mxu0 0.0
    %1183 = vmatprep.subr.mxu0 0.0
    %1184 = vmatpush1.msra.mxu0 0.0
    %1185 = vmatprep.subr.mxu0 0.0
    %1186 = vmatpush1.msra.mxu0 0.0
    %1187 = vmatprep.subr.mxu0 0.0
    %1188 = vmatpush1.msra.mxu0 0.0
    %1189 = vmatprep.subr.mxu0 0.0
    %1190 = vmatpush1.msra.mxu0 0.0
    %1191 = vmatprep.subr.mxu0 0.0
    %1192 = vmatpush1.msra.mxu0 0.0
    %1193 = vmatprep.subr.mxu0 0.0
    %1194 = vmatpush1.msra.mxu0 0.0
    %1195 = vmatprep.subr.mxu0 0.0
    %1196 = vmatpush1.msra.mxu0 0.0
    %1197 = vmatprep.subr.mxu0 0.0
    %1198 = vmatpush1.msra.mxu0 0.0
    %1199 = vmatprep.subr.mxu0 0.0
    %1200 = vmatpush1.msra.mxu0 0.0
    %1201 = vmatprep.subr.mxu0 0.0
    %1202 = vmatpush1.msra.mxu0 0.0
    %1203 = vmatprep.subr.mxu0 0.0
    %1204 = vmatpush1.msra.mxu0 0.0
    %1205 = vmatprep.subr.mxu0 0.0
    %1206 = vmatpush1.msra.mxu0 0.0
    %1207 = vmatprep.subr.mxu0 0.0
    %1208 = vmatpush1.msra.mxu0 0.0
    %1209 = vmatprep.subr.mxu0 0.0
    %1210 = vmatpush1.msra.mxu0 0.0
    %1211 = vmatprep.subr.mxu0 0.0
    %1212 = vmatpush1.msra.mxu0 0.0
    %1213 = vmatprep.subr.mxu0 0.0
    %1214 = vmatpush1.msra.mxu0 0.0
    %1215 = vmatprep.subr.mxu0 0.0
    %1216 = vmatpush1.msra.mxu0 0.0
    %1217 = vmatprep.subr.mxu0 0.0
    %1218 = vmatpush1.msra.mxu0 0.0
    %1219 = vmatprep.subr.mxu0 0.0
    %1220 = vmatpush1.msra.mxu0 0.0
    %1221 = vmatprep.subr.mxu0 0.0
    %1222 = vmatpush1.msra.mxu0 0.0
    %1223 = vmatprep.subr.mxu0 0.0
    %1224 = vmatpush1.msra.mxu0 0.0
    %1225 = vmatprep.subr.mxu0 0.0
    %1226 = vmatpush1.msra.mxu0 0.0
    %1227 = vmatprep.subr.mxu0 0.0
    %1228 = vmatpush1.msra.mxu0 0.0
    %1229 = vmatprep.mubr.f32.mxu0 0.0
    %1230 = vmatmul.mubr.f32.gmra.mrb[0].mxu0 %v1163
    %v1231 = vpop.f32.mrb[0].mxu0
    %v1232 = vadd.f32 0.0, %v1231
    %v1233 = vpop.f32.mrb[0].mxu0
    %1234 = vdwg.mxu0
    %1235 = vrot.lane.b32.xlu0 %v227, 64
    %v1236 = vpop.permute.xlu0 %1235
    %v1239 = vsel %vm236, %v927, 0
    %1241 = vmatprep.subr.mxu0 0.0
    %1242 = vmatpush1.msra.mxu0 %v1236
    %1243 = vmatprep.subr.mxu0 0.0
    %1244 = vmatpush1.msra.mxu0 0.0
    %1245 = vmatprep.subr.mxu0 0.0
    %1246 = vmatpush1.msra.mxu0 0.0
    %1247 = vmatprep.subr.mxu0 0.0
    %1248 = vmatpush1.msra.mxu0 0.0
    %1249 = vmatprep.subr.mxu0 0.0
    %1250 = vmatpush1.msra.mxu0 0.0
    %1251 = vmatprep.subr.mxu0 0.0
    %1252 = vmatpush1.msra.mxu0 0.0
    %1253 = vmatprep.subr.mxu0 0.0
    %1254 = vmatpush1.msra.mxu0 0.0
    %1255 = vmatprep.subr.mxu0 0.0
    %1256 = vmatpush1.msra.mxu0 0.0
    %1257 = vmatprep.subr.mxu0 0.0
    %1258 = vmatpush1.msra.mxu0 0.0
    %1259 = vmatprep.subr.mxu0 0.0
    %1260 = vmatpush1.msra.mxu0 0.0
    %1261 = vmatprep.subr.mxu0 0.0
    %1262 = vmatpush1.msra.mxu0 0.0
    %1263 = vmatprep.subr.mxu0 0.0
    %1264 = vmatpush1.msra.mxu0 0.0
    %1265 = vmatprep.subr.mxu0 0.0
    %1266 = vmatpush1.msra.mxu0 0.0
    %1267 = vmatprep.subr.mxu0 0.0
    %1268 = vmatpush1.msra.mxu0 0.0
    %1269 = vmatprep.subr.mxu0 0.0
    %1270 = vmatpush1.msra.mxu0 0.0
    %1271 = vmatprep.subr.mxu0 0.0
    %1272 = vmatpush1.msra.mxu0 0.0
    %1273 = vmatprep.subr.mxu0 0.0
    %1274 = vmatpush1.msra.mxu0 0.0
    %1275 = vmatprep.subr.mxu0 0.0
    %1276 = vmatpush1.msra.mxu0 0.0
    %1277 = vmatprep.subr.mxu0 0.0
    %1278 = vmatpush1.msra.mxu0 0.0
    %1279 = vmatprep.subr.mxu0 0.0
    %1280 = vmatpush1.msra.mxu0 0.0
    %1281 = vmatprep.subr.mxu0 0.0
    %1282 = vmatpush1.msra.mxu0 0.0
    %1283 = vmatprep.subr.mxu0 0.0
    %1284 = vmatpush1.msra.mxu0 0.0
    %1285 = vmatprep.subr.mxu0 0.0
    %1286 = vmatpush1.msra.mxu0 0.0
    %1287 = vmatprep.subr.mxu0 0.0
    %1288 = vmatpush1.msra.mxu0 0.0
    %1289 = vmatprep.subr.mxu0 0.0
    %1290 = vmatpush1.msra.mxu0 0.0
    %1291 = vmatprep.subr.mxu0 0.0
    %1292 = vmatpush1.msra.mxu0 0.0
    %1293 = vmatprep.subr.mxu0 0.0
    %1294 = vmatpush1.msra.mxu0 0.0
    %1295 = vmatprep.subr.mxu0 0.0
    %1296 = vmatpush1.msra.mxu0 0.0
    %1297 = vmatprep.subr.mxu0 0.0
    %1298 = vmatpush1.msra.mxu0 0.0
    %1299 = vmatprep.subr.mxu0 0.0
    %1300 = vmatpush1.msra.mxu0 0.0
    %1301 = vmatprep.subr.mxu0 0.0
    %1302 = vmatpush1.msra.mxu0 0.0
    %1303 = vmatprep.subr.mxu0 0.0
    %1304 = vmatpush1.msra.mxu0 0.0
    %1305 = vmatprep.mubr.f32.mxu0 0.0
    %1306 = vmatmul.mubr.f32.gmra.mrb[0].mxu0 %v1239
    %v1307 = vpop.f32.mrb[0].mxu0
    %v1308 = vadd.f32 0.0, %v1307
    %v1309 = vpop.f32.mrb[0].mxu0
    %1310 = vdwg.mxu0
    %1311 = vrot.lane.b32.xlu0 %v229, 64
    %v1312 = vpop.permute.xlu0 %1311
    %v1315 = vsel %vm236, %v928, 0
    %1317 = vmatprep.subr.mxu0 0.0
    %1318 = vmatpush1.msra.mxu0 %v1312
    %1319 = vmatprep.subr.mxu0 0.0
    %1320 = vmatpush1.msra.mxu0 0.0
    %1321 = vmatprep.subr.mxu0 0.0
    %1322 = vmatpush1.msra.mxu0 0.0
    %1323 = vmatprep.subr.mxu0 0.0
    %1324 = vmatpush1.msra.mxu0 0.0
    %1325 = vmatprep.subr.mxu0 0.0
    %1326 = vmatpush1.msra.mxu0 0.0
    %1327 = vmatprep.subr.mxu0 0.0
    %1328 = vmatpush1.msra.mxu0 0.0
    %1329 = vmatprep.subr.mxu0 0.0
    %1330 = vmatpush1.msra.mxu0 0.0
    %1331 = vmatprep.subr.mxu0 0.0
    %1332 = vmatpush1.msra.mxu0 0.0
    %1333 = vmatprep.subr.mxu0 0.0
    %1334 = vmatpush1.msra.mxu0 0.0
    %1335 = vmatprep.subr.mxu0 0.0
    %1336 = vmatpush1.msra.mxu0 0.0
    %1337 = vmatprep.subr.mxu0 0.0
    %1338 = vmatpush1.msra.mxu0 0.0
    %1339 = vmatprep.subr.mxu0 0.0
    %1340 = vmatpush1.msra.mxu0 0.0
    %1341 = vmatprep.subr.mxu0 0.0
    %1342 = vmatpush1.msra.mxu0 0.0
    %1343 = vmatprep.subr.mxu0 0.0
    %1344 = vmatpush1.msra.mxu0 0.0
    %1345 = vmatprep.subr.mxu0 0.0
    %1346 = vmatpush1.msra.mxu0 0.0
    %1347 = vmatprep.subr.mxu0 0.0
    %1348 = vmatpush1.msra.mxu0 0.0
    %1349 = vmatprep.subr.mxu0 0.0
    %1350 = vmatpush1.msra.mxu0 0.0
    %1351 = vmatprep.subr.mxu0 0.0
    %1352 = vmatpush1.msra.mxu0 0.0
    %1353 = vmatprep.subr.mxu0 0.0
    %1354 = vmatpush1.msra.mxu0 0.0
    %1355 = vmatprep.subr.mxu0 0.0
    %1356 = vmatpush1.msra.mxu0 0.0
    %1357 = vmatprep.subr.mxu0 0.0
    %1358 = vmatpush1.msra.mxu0 0.0
    %1359 = vmatprep.subr.mxu0 0.0
    %1360 = vmatpush1.msra.mxu0 0.0
    %1361 = vmatprep.subr.mxu0 0.0
    %1362 = vmatpush1.msra.mxu0 0.0
    %1363 = vmatprep.subr.mxu0 0.0
    %1364 = vmatpush1.msra.mxu0 0.0
    %1365 = vmatprep.subr.mxu0 0.0
    %1366 = vmatpush1.msra.mxu0 0.0
    %1367 = vmatprep.subr.mxu0 0.0
    %1368 = vmatpush1.msra.mxu0 0.0
    %1369 = vmatprep.subr.mxu0 0.0
    %1370 = vmatpush1.msra.mxu0 0.0
    %1371 = vmatprep.subr.mxu0 0.0
    %1372 = vmatpush1.msra.mxu0 0.0
    %1373 = vmatprep.subr.mxu0 0.0
    %1374 = vmatpush1.msra.mxu0 0.0
    %1375 = vmatprep.subr.mxu0 0.0
    %1376 = vmatpush1.msra.mxu0 0.0
    %1377 = vmatprep.subr.mxu0 0.0
    %1378 = vmatpush1.msra.mxu0 0.0
    %1379 = vmatprep.subr.mxu0 0.0
    %1380 = vmatpush1.msra.mxu0 0.0
    %1381 = vmatprep.mubr.f32.mxu0 0.0
    %1382 = vmatmul.mubr.f32.gmra.mrb[0].mxu0 %v1315
    %v1383 = vpop.f32.mrb[0].mxu0
    %v1384 = vadd.f32 0.0, %v1383
    %v1385 = vpop.f32.mrb[0].mxu0
    %1386 = vdwg.mxu0
    %1387 = vrot.lane.b32.xlu0 %v231, 64
    %v1388 = vpop.permute.xlu0 %1387
    %v1391 = vsel %vm236, %v929, 0
    %1393 = vmatprep.subr.mxu0 0.0
    %1394 = vmatpush1.msra.mxu0 %v1388
    %1395 = vmatprep.subr.mxu0 0.0
    %1396 = vmatpush1.msra.mxu0 0.0
    %1397 = vmatprep.subr.mxu0 0.0
    %1398 = vmatpush1.msra.mxu0 0.0
    %1399 = vmatprep.subr.mxu0 0.0
    %1400 = vmatpush1.msra.mxu0 0.0
    %1401 = vmatprep.subr.mxu0 0.0
    %1402 = vmatpush1.msra.mxu0 0.0
    %1403 = vmatprep.subr.mxu0 0.0
    %1404 = vmatpush1.msra.mxu0 0.0
    %1405 = vmatprep.subr.mxu0 0.0
    %1406 = vmatpush1.msra.mxu0 0.0
    %1407 = vmatprep.subr.mxu0 0.0
    %1408 = vmatpush1.msra.mxu0 0.0
    %1409 = vmatprep.subr.mxu0 0.0
    %1410 = vmatpush1.msra.mxu0 0.0
    %1411 = vmatprep.subr.mxu0 0.0
    %1412 = vmatpush1.msra.mxu0 0.0
    %1413 = vmatprep.subr.mxu0 0.0
    %1414 = vmatpush1.msra.mxu0 0.0
    %1415 = vmatprep.subr.mxu0 0.0
    %1416 = vmatpush1.msra.mxu0 0.0
    %1417 = vmatprep.subr.mxu0 0.0
    %1418 = vmatpush1.msra.mxu0 0.0
    %1419 = vmatprep.subr.mxu0 0.0
    %1420 = vmatpush1.msra.mxu0 0.0
    %1421 = vmatprep.subr.mxu0 0.0
    %1422 = vmatpush1.msra.mxu0 0.0
    %1423 = vmatprep.subr.mxu0 0.0
    %1424 = vmatpush1.msra.mxu0 0.0
    %1425 = vmatprep.subr.mxu0 0.0
    %1426 = vmatpush1.msra.mxu0 0.0
    %1427 = vmatprep.subr.mxu0 0.0
    %1428 = vmatpush1.msra.mxu0 0.0
    %1429 = vmatprep.subr.mxu0 0.0
    %1430 = vmatpush1.msra.mxu0 0.0
    %1431 = vmatprep.subr.mxu0 0.0
    %1432 = vmatpush1.msra.mxu0 0.0
    %1433 = vmatprep.subr.mxu0 0.0
    %1434 = vmatpush1.msra.mxu0 0.0
    %1435 = vmatprep.subr.mxu0 0.0
    %1436 = vmatpush1.msra.mxu0 0.0
    %1437 = vmatprep.subr.mxu0 0.0
    %1438 = vmatpush1.msra.mxu0 0.0
    %1439 = vmatprep.subr.mxu0 0.0
    %1440 = vmatpush1.msra.mxu0 0.0
    %1441 = vmatprep.subr.mxu0 0.0
    %1442 = vmatpush1.msra.mxu0 0.0
    %1443 = vmatprep.subr.mxu0 0.0
    %1444 = vmatpush1.msra.mxu0 0.0
    %1445 = vmatprep.subr.mxu0 0.0
    %1446 = vmatpush1.msra.mxu0 0.0
    %1447 = vmatprep.subr.mxu0 0.0
    %1448 = vmatpush1.msra.mxu0 0.0
    %1449 = vmatprep.subr.mxu0 0.0
    %1450 = vmatpush1.msra.mxu0 0.0
    %1451 = vmatprep.subr.mxu0 0.0
    %1452 = vmatpush1.msra.mxu0 0.0
    %1453 = vmatprep.subr.mxu0 0.0
    %1454 = vmatpush1.msra.mxu0 0.0
    %1455 = vmatprep.subr.mxu0 0.0
    %1456 = vmatpush1.msra.mxu0 0.0
    %1457 = vmatprep.mubr.f32.mxu0 0.0
    %1458 = vmatmul.mubr.f32.gmra.mrb[0].mxu0 %v1391
    %v1459 = vpop.f32.mrb[0].mxu0
    %v1460 = vadd.f32 0.0, %v1459
    %v1461 = vpop.f32.mrb[0].mxu0
    %1462 = vdwg.mxu0
    %1463 = vrot.lane.b32.xlu0 %v233, 64
    %v1464 = vpop.permute.xlu0 %1463
    %v1467 = vsel %vm236, %v930, 0
    %1469 = vmatprep.subr.mxu0 0.0
    %1470 = vmatpush1.msra.mxu0 %v1464
    %1471 = vmatprep.subr.mxu0 0.0
    %1472 = vmatpush1.msra.mxu0 0.0
    %1473 = vmatprep.subr.mxu0 0.0
    %1474 = vmatpush1.msra.mxu0 0.0
    %1475 = vmatprep.subr.mxu0 0.0
    %1476 = vmatpush1.msra.mxu0 0.0
    %1477 = vmatprep.subr.mxu0 0.0
    %1478 = vmatpush1.msra.mxu0 0.0
    %1479 = vmatprep.subr.mxu0 0.0
    %1480 = vmatpush1.msra.mxu0 0.0
    %1481 = vmatprep.subr.mxu0 0.0
    %1482 = vmatpush1.msra.mxu0 0.0
    %1483 = vmatprep.subr.mxu0 0.0
    %1484 = vmatpush1.msra.mxu0 0.0
    %1485 = vmatprep.subr.mxu0 0.0
    %1486 = vmatpush1.msra.mxu0 0.0
    %1487 = vmatprep.subr.mxu0 0.0
    %1488 = vmatpush1.msra.mxu0 0.0
    %1489 = vmatprep.subr.mxu0 0.0
    %1490 = vmatpush1.msra.mxu0 0.0
    %1491 = vmatprep.subr.mxu0 0.0
    %1492 = vmatpush1.msra.mxu0 0.0
    %1493 = vmatprep.subr.mxu0 0.0
    %1494 = vmatpush1.msra.mxu0 0.0
    %1495 = vmatprep.subr.mxu0 0.0
    %1496 = vmatpush1.msra.mxu0 0.0
    %1497 = vmatprep.subr.mxu0 0.0
    %1498 = vmatpush1.msra.mxu0 0.0
    %1499 = vmatprep.subr.mxu0 0.0
    %1500 = vmatpush1.msra.mxu0 0.0
    %1501 = vmatprep.subr.mxu0 0.0
    %1502 = vmatpush1.msra.mxu0 0.0
    %1503 = vmatprep.subr.mxu0 0.0
    %1504 = vmatpush1.msra.mxu0 0.0
    %1505 = vmatprep.subr.mxu0 0.0
    %1506 = vmatpush1.msra.mxu0 0.0
    %1507 = vmatprep.subr.mxu0 0.0
    %1508 = vmatpush1.msra.mxu0 0.0
    %1509 = vmatprep.subr.mxu0 0.0
    %1510 = vmatpush1.msra.mxu0 0.0
    %1511 = vmatprep.subr.mxu0 0.0
    %1512 = vmatpush1.msra.mxu0 0.0
    %1513 = vmatprep.subr.mxu0 0.0
    %1514 = vmatpush1.msra.mxu0 0.0
    %1515 = vmatprep.subr.mxu0 0.0
    %1516 = vmatpush1.msra.mxu0 0.0
    %1517 = vmatprep.subr.mxu0 0.0
    %1518 = vmatpush1.msra.mxu0 0.0
    %1519 = vmatprep.subr.mxu0 0.0
    %1520 = vmatpush1.msra.mxu0 0.0
    %1521 = vmatprep.subr.mxu0 0.0
    %1522 = vmatpush1.msra.mxu0 0.0
    %1523 = vmatprep.subr.mxu0 0.0
    %1524 = vmatpush1.msra.mxu0 0.0
    %1525 = vmatprep.subr.mxu0 0.0
    %1526 = vmatpush1.msra.mxu0 0.0
    %1527 = vmatprep.subr.mxu0 0.0
    %1528 = vmatpush1.msra.mxu0 0.0
    %1529 = vmatprep.subr.mxu0 0.0
    %1530 = vmatpush1.msra.mxu0 0.0
    %1531 = vmatprep.subr.mxu0 0.0
    %1532 = vmatpush1.msra.mxu0 0.0
    %1533 = vmatprep.mubr.f32.mxu0 0.0
    %1534 = vmatmul.mubr.f32.gmra.mrb[0].mxu0 %v1467
    %v1535 = vpop.f32.mrb[0].mxu0
    %v1536 = vadd.f32 0.0, %v1535
    %v1537 = vpop.f32.mrb[0].mxu0
    %1538 = vdwg.mxu0
    %1541 = vrot.lane.b32.xlu0 %v1156, 8
    %v1542 = vpop.permute.xlu0 %1541
    %1543 = vrot.lane.b32.xlu0 %v1232, 8
    %v1544 = vpop.permute.xlu0 %1543
    %1549 = vrot.lane.b32.xlu0 %v1308, 16
    %v1550 = vpop.permute.xlu0 %1549
    %1551 = vrot.lane.b32.xlu0 %v1384, 16
    %v1552 = vpop.permute.xlu0 %1551
    %1557 = vrot.lane.b32.xlu0 %v1460, 24
    %v1558 = vpop.permute.xlu0 %1557
    %1559 = vrot.lane.b32.xlu0 %v1536, 24
    %v1560 = vpop.permute.xlu0 %1559
    %v1563 = vsel %vm236, %v1004, %v1542
    %v1564 = vsel %vm236, %v1080, %v1544
    %v1565 = vsel %vm45, %v1563, %v1550
    %v1566 = vsel %vm45, %v1564, %v1552
    %vm1567 = vcmask 195584
    %v1568 = vsel %vm1567, %v1565, %v1558
    %v1569 = vsel %vm1567, %v1566, %v1560
    %v1570 = vld [vmem:[%s5] sm:$0xff]
    %v1571 = vld [vmem:[%s5 + $0x8] sm:$0xff]
    %v1572 = vld [vmem:[%s5 + $0x10] sm:$0xff]
    %v1573 = vld [vmem:[%s5 + $0x18] sm:$0xff]
    %v1574 = vld [vmem:[%s6] sm:$0x1]
    %v1575 = vlaneseq
    %v1576 = vshrl.u32 %v1575, 7
    %v1577 = vsub.s32 0, %v1576
    %v1578 = vrot.slane %v1574, %v1577
    %v1580 = vsel %vm138, %v1568, 0
    %v1583 = vsel %vm138, %v1569, 0
    %1585 = vmatprep.subr.mxu0 0.0
    %1586 = vmatpush1.msra.mxu0 %v1570
    %1587 = vmatprep.subr.mxu0 0.0
    %1588 = vmatpush1.msra.mxu0 %v1571
    %1589 = vmatprep.subr.mxu0 0.0
    %1590 = vmatpush1.msra.mxu0 %v1572
    %1591 = vmatprep.subr.mxu0 0.0
    %1592 = vmatpush1.msra.mxu0 %v1573
    %1593 = vmatprep.subr.mxu0 0.0
    %1594 = vmatpush1.msra.mxu0 0.0
    %1595 = vmatprep.subr.mxu0 0.0
    %1596 = vmatpush1.msra.mxu0 0.0
    %1597 = vmatprep.subr.mxu0 0.0
    %1598 = vmatpush1.msra.mxu0 0.0
    %1599 = vmatprep.subr.mxu0 0.0
    %1600 = vmatpush1.msra.mxu0 0.0
    %1601 = vmatprep.subr.mxu0 0.0
    %1602 = vmatpush1.msra.mxu0 0.0
    %1603 = vmatprep.subr.mxu0 0.0
    %1604 = vmatpush1.msra.mxu0 0.0
    %1605 = vmatprep.subr.mxu0 0.0
    %1606 = vmatpush1.msra.mxu0 0.0
    %1607 = vmatprep.subr.mxu0 0.0
    %1608 = vmatpush1.msra.mxu0 0.0
    %1609 = vmatprep.subr.mxu0 0.0
    %1610 = vmatpush1.msra.mxu0 0.0
    %1611 = vmatprep.subr.mxu0 0.0
    %1612 = vmatpush1.msra.mxu0 0.0
    %1613 = vmatprep.subr.mxu0 0.0
    %1614 = vmatpush1.msra.mxu0 0.0
    %1615 = vmatprep.subr.mxu0 0.0
    %1616 = vmatpush1.msra.mxu0 0.0
    %1617 = vmatprep.subr.mxu0 0.0
    %1618 = vmatpush1.msra.mxu0 0.0
    %1619 = vmatprep.subr.mxu0 0.0
    %1620 = vmatpush1.msra.mxu0 0.0
    %1621 = vmatprep.subr.mxu0 0.0
    %1622 = vmatpush1.msra.mxu0 0.0
    %1623 = vmatprep.subr.mxu0 0.0
    %1624 = vmatpush1.msra.mxu0 0.0
    %1625 = vmatprep.subr.mxu0 0.0
    %1626 = vmatpush1.msra.mxu0 0.0
    %1627 = vmatprep.subr.mxu0 0.0
    %1628 = vmatpush1.msra.mxu0 0.0
    %1629 = vmatprep.subr.mxu0 0.0
    %1630 = vmatpush1.msra.mxu0 0.0
    %1631 = vmatprep.subr.mxu0 0.0
    %1632 = vmatpush1.msra.mxu0 0.0
    %1633 = vmatprep.subr.mxu0 0.0
    %1634 = vmatpush1.msra.mxu0 0.0
    %1635 = vmatprep.subr.mxu0 0.0
    %1636 = vmatpush1.msra.mxu0 0.0
    %1637 = vmatprep.subr.mxu0 0.0
    %1638 = vmatpush1.msra.mxu0 0.0
    %1639 = vmatprep.subr.mxu0 0.0
    %1640 = vmatpush1.msra.mxu0 0.0
    %1641 = vmatprep.subr.mxu0 0.0
    %1642 = vmatpush1.msra.mxu0 0.0
    %1643 = vmatprep.subr.mxu0 0.0
    %1644 = vmatpush1.msra.mxu0 0.0
    %1645 = vmatprep.subr.mxu0 0.0
    %1646 = vmatpush1.msra.mxu0 0.0
    %1647 = vmatprep.subr.mxu0 0.0
    %1648 = vmatpush1.msra.mxu0 0.0
    %1649 = vmatprep.mubr.f32.mxu0 0.0
    %1650 = vmatmul.mubr.f32.gmra.mrb[0].mxu0 %v1580
    %v1651 = vpop.f32.mrb[0].mxu0
    %v1652 = vadd.f32 %v1578, %v1651
    %v1653 = vpop.f32.mrb[0].mxu0
    %1654 = vmatprep.mubr.f32.mxu0 0.0
    %1655 = vmatmul.mubr.f32.gmra.mrb[0].mxu0 %v1583
    %v1656 = vpop.f32.mrb[0].mxu0
    %v1657 = vadd.f32 %v1578, %v1656
    %v1658 = vpop.f32.mrb[0].mxu0
    %1659 = vdwg.mxu0
    %v1660 = vadd.f32 %v119, %v1652
    %v1661 = vadd.f32 %v124, %v1657
    %v1662 = vld [vmem:[%s6 + $0x1] sm:$0x1]
    %v1663 = vld [vmem:[%s6 + $0x2] sm:$0x1]
    %v1664 = vsel %vm138, %v1660, 0.0
    %1665 = vadd.xlane.f32.xlu0 %v1664
    %v1666 = vpop.xlane.xlu0 %1665
    %v1667 = vsel %vm138, %v1661, 0.0
    %1668 = vadd.xlane.f32.xlu0 %v1667
    %v1669 = vpop.xlane.xlu0 %1668
    %v1670 = vrcp.pop 32.0
    %v1671 = vmul.f32 %v1666, %v1670
    %v1672 = vmul.f32 %v1669, %v1670
    %v1673 = vmul.f32 %v1660, %v1660
    %v1674 = vmul.f32 %v1661, %v1661
    %v1675 = vsel %vm138, %v1673, 0.0
    %1676 = vadd.xlane.f32.xlu0 %v1675
    %v1677 = vpop.xlane.xlu0 %1676
    %v1678 = vsel %vm138, %v1674, 0.0
    %1679 = vadd.xlane.f32.xlu0 %v1678
    %v1680 = vpop.xlane.xlu0 %1679
    %v1681 = vmul.f32 %v1677, %v1670
    %v1682 = vmul.f32 %v1680, %v1670
    %v1683 = vmul.f32 %v1671, %v1671
    %v1684 = vmul.f32 %v1672, %v1672
    %v1685 = vsub.f32 %v1681, %v1683
    %v1686 = vsub.f32 %v1682, %v1684
    %v1687 = vsub.f32 %v1660, %v1671
    %v1688 = vsub.f32 %v1661, %v1672
    %v1689 = vadd.f32 %v1685, 1e-05
    %v1690 = vadd.f32 %v1686, 1e-05
    %v1691 = vrsqrt.pop %v1689
    %v1692 = vrsqrt.pop %v1690
    %v1693 = vmul.f32 %v1687, %v1691
    %v1694 = vmul.f32 %v1688, %v1692
    %v1695 = vlaneseq
    %v1696 = vshrl.u32 %v1695, 7
    %v1697 = vsub.s32 0, %v1696
    %v1698 = vrot.slane %v1662, %v1697
    %v1699 = vmul.f32 %v1693, %v1698
    %v1700 = vmul.f32 %v1694, %v1698
    %v1701 = vlaneseq
    %v1702 = vshrl.u32 %v1701, 7
    %v1703 = vsub.s32 0, %v1702
    %v1704 = vrot.slane %v1663, %v1703
    %v1705 = vadd.f32 %v1699, %v1704
    %v1706 = vadd.f32 %v1700, %v1704
    %v1707 = vld [vmem:[%s7] sm:$0xff]
    %v1708 = vld [vmem:[%s7 + $0x8] sm:$0xff]
    %v1709 = vld [vmem:[%s7 + $0x10] sm:$0xff]
    %v1710 = vld [vmem:[%s7 + $0x18] sm:$0xff]
    %v1711 = vld [vmem:[%s8] sm:$0x1]
    %v1712 = vlaneseq
    %v1713 = vshrl.u32 %v1712, 7
    %v1714 = vsub.s32 0, %v1713
    %v1715 = vrot.slane %v1711, %v1714
    %v1717 = vsel %vm138, %v1705, 0
    %v1720 = vsel %vm138, %v1706, 0
    %1722 = vmatprep.subr.mxu0 0.0
    %1723 = vmatpush1.msra.mxu0 %v1707
    %1724 = vmatprep.subr.mxu0 0.0
    %1725 = vmatpush1.msra.mxu0 %v1708
    %1726 = vmatprep.subr.mxu0 0.0
    %1727 = vmatpush1.msra.mxu0 %v1709
    %1728 = vmatprep.subr.mxu0 0.0
    %1729 = vmatpush1.msra.mxu0 %v1710
    %1730 = vmatprep.subr.mxu0 0.0
    %1731 = vmatpush1.msra.mxu0 0.0
    %1732 = vmatprep.subr.mxu0 0.0
    %1733 = vmatpush1.msra.mxu0 0.0
    %1734 = vmatprep.subr.mxu0 0.0
    %1735 = vmatpush1.msra.mxu0 0.0
    %1736 = vmatprep.subr.mxu0 0.0
    %1737 = vmatpush1.msra.mxu0 0.0
    %1738 = vmatprep.subr.mxu0 0.0
    %1739 = vmatpush1.msra.mxu0 0.0
    %1740 = vmatprep.subr.mxu0 0.0
    %1741 = vmatpush1.msra.mxu0 0.0
    %1742 = vmatprep.subr.mxu0 0.0
    %1743 = vmatpush1.msra.mxu0 0.0
    %1744 = vmatprep.subr.mxu0 0.0
    %1745 = vmatpush1.msra.mxu0 0.0
    %1746 = vmatprep.subr.mxu0 0.0
    %1747 = vmatpush1.msra.mxu0 0.0
    %1748 = vmatprep.subr.mxu0 0.0
    %1749 = vmatpush1.msra.mxu0 0.0
    %1750 = vmatprep.subr.mxu0 0.0
    %1751 = vmatpush1.msra.mxu0 0.0
    %1752 = vmatprep.subr.mxu0 0.0
    %1753 = vmatpush1.msra.mxu0 0.0
    %1754 = vmatprep.subr.mxu0 0.0
    %1755 = vmatpush1.msra.mxu0 0.0
    %1756 = vmatprep.subr.mxu0 0.0
    %1757 = vmatpush1.msra.mxu0 0.0
    %1758 = vmatprep.subr.mxu0 0.0
    %1759 = vmatpush1.msra.mxu0 0.0
    %1760 = vmatprep.subr.mxu0 0.0
    %1761 = vmatpush1.msra.mxu0 0.0
    %1762 = vmatprep.subr.mxu0 0.0
    %1763 = vmatpush1.msra.mxu0 0.0
    %1764 = vmatprep.subr.mxu0 0.0
    %1765 = vmatpush1.msra.mxu0 0.0
    %1766 = vmatprep.subr.mxu0 0.0
    %1767 = vmatpush1.msra.mxu0 0.0
    %1768 = vmatprep.subr.mxu0 0.0
    %1769 = vmatpush1.msra.mxu0 0.0
    %1770 = vmatprep.subr.mxu0 0.0
    %1771 = vmatpush1.msra.mxu0 0.0
    %1772 = vmatprep.subr.mxu0 0.0
    %1773 = vmatpush1.msra.mxu0 0.0
    %1774 = vmatprep.subr.mxu0 0.0
    %1775 = vmatpush1.msra.mxu0 0.0
    %1776 = vmatprep.subr.mxu0 0.0
    %1777 = vmatpush1.msra.mxu0 0.0
    %1778 = vmatprep.subr.mxu0 0.0
    %1779 = vmatpush1.msra.mxu0 0.0
    %1780 = vmatprep.subr.mxu0 0.0
    %1781 = vmatpush1.msra.mxu0 0.0
    %1782 = vmatprep.subr.mxu0 0.0
    %1783 = vmatpush1.msra.mxu0 0.0
    %1784 = vmatprep.subr.mxu0 0.0
    %1785 = vmatpush1.msra.mxu0 0.0
    %1786 = vmatprep.mubr.f32.mxu0 0.0
    %1787 = vmatmul.mubr.f32.gmra.mrb[0].mxu0 %v1717
    %v1788 = vpop.f32.mrb[0].mxu0
    %v1789 = vadd.f32 %v1715, %v1788
    %v1790 = vpop.f32.mrb[0].mxu0
    %1791 = vmatprep.mubr.f32.mxu0 0.0
    %1792 = vmatmul.mubr.f32.gmra.mrb[0].mxu0 %v1720
    %v1793 = vpop.f32.mrb[0].mxu0
    %v1794 = vadd.f32 %v1715, %v1793
    %v1795 = vpop.f32.mrb[0].mxu0
    %1796 = vdwg.mxu0
    %v1797 = vmax.f32 %v1789, 0.0
    %v1798 = vmax.f32 %v1794, 0.0
    %v1799 = vld [vmem:[%s9] sm:$0xff]
    %v1800 = vld [vmem:[%s9 + $0x8] sm:$0xff]
    %v1801 = vld [vmem:[%s9 + $0x10] sm:$0xff]
    %v1802 = vld [vmem:[%s9 + $0x18] sm:$0xff]
    %v1803 = vld [vmem:[%s9 + $0x20] sm:$0xff]
    %v1804 = vld [vmem:[%s9 + $0x28] sm:$0xff]
    %v1805 = vld [vmem:[%s9 + $0x30] sm:$0xff]
    %v1806 = vld [vmem:[%s9 + $0x38] sm:$0xff]
    %v1807 = vld [vmem:[%s9 + $0x40] sm:$0xff]
    %v1808 = vld [vmem:[%s9 + $0x48] sm:$0xff]
    %v1809 = vld [vmem:[%s9 + $0x50] sm:$0xff]
    %v1810 = vld [vmem:[%s9 + $0x58] sm:$0xff]
    %v1811 = vld [vmem:[%s9 + $0x60] sm:$0xff]
    %v1812 = vld [vmem:[%s9 + $0x68] sm:$0xff]
    %v1813 = vld [vmem:[%s9 + $0x70] sm:$0xff]
    %v1814 = vld [vmem:[%s9 + $0x78] sm:$0xff]
    %v1815 = vld [vmem:[%s6 + $0x5] sm:$0x1]
    %v1816 = vlaneseq
    %v1817 = vshrl.u32 %v1816, 7
    %v1818 = vsub.s32 0, %v1817
    %v1819 = vrot.slane %v1815, %v1818
    %1820 = vmatprep.subr.mxu0 0.0
    %1821 = vmatpush1.msra.mxu0 %v1799
    %1822 = vmatprep.subr.mxu0 0.0
    %1823 = vmatpush1.msra.mxu0 %v1800
    %1824 = vmatprep.subr.mxu0 0.0
    %1825 = vmatpush1.msra.mxu0 %v1801
    %1826 = vmatprep.subr.mxu0 0.0
    %1827 = vmatpush1.msra.mxu0 %v1802
    %1828 = vmatprep.subr.mxu0 0.0
    %1829 = vmatpush1.msra.mxu0 %v1803
    %1830 = vmatprep.subr.mxu0 0.0
    %1831 = vmatpush1.msra.mxu0 %v1804
    %1832 = vmatprep.subr.mxu0 0.0
    %1833 = vmatpush1.msra.mxu0 %v1805
    %1834 = vmatprep.subr.mxu0 0.0
    %1835 = vmatpush1.msra.mxu0 %v1806
    %1836 = vmatprep.subr.mxu0 0.0
    %1837 = vmatpush1.msra.mxu0 %v1807
    %1838 = vmatprep.subr.mxu0 0.0
    %1839 = vmatpush1.msra.mxu0 %v1808
    %1840 = vmatprep.subr.mxu0 0.0
    %1841 = vmatpush1.msra.mxu0 %v1809
    %1842 = vmatprep.subr.mxu0 0.0
    %1843 = vmatpush1.msra.mxu0 %v1810
    %1844 = vmatprep.subr.mxu0 0.0
    %1845 = vmatpush1.msra.mxu0 %v1811
    %1846 = vmatprep.subr.mxu0 0.0
    %1847 = vmatpush1.msra.mxu0 %v1812
    %1848 = vmatprep.subr.mxu0 0.0
    %1849 = vmatpush1.msra.mxu0 %v1813
    %1850 = vmatprep.subr.mxu0 0.0
    %1851 = vmatpush1.msra.mxu0 %v1814
    %1852 = vmatprep.subr.mxu0 0.0
    %1853 = vmatpush1.msra.mxu0 0.0
    %1854 = vmatprep.subr.mxu0 0.0
    %1855 = vmatpush1.msra.mxu0 0.0
    %1856 = vmatprep.subr.mxu0 0.0
    %1857 = vmatpush1.msra.mxu0 0.0
    %1858 = vmatprep.subr.mxu0 0.0
    %1859 = vmatpush1.msra.mxu0 0.0
    %1860 = vmatprep.subr.mxu0 0.0
    %1861 = vmatpush1.msra.mxu0 0.0
    %1862 = vmatprep.subr.mxu0 0.0
    %1863 = vmatpush1.msra.mxu0 0.0
    %1864 = vmatprep.subr.mxu0 0.0
    %1865 = vmatpush1.msra.mxu0 0.0
    %1866 = vmatprep.subr.mxu0 0.0
    %1867 = vmatpush1.msra.mxu0 0.0
    %1868 = vmatprep.subr.mxu0 0.0
    %1869 = vmatpush1.msra.mxu0 0.0
    %1870 = vmatprep.subr.mxu0 0.0
    %1871 = vmatpush1.msra.mxu0 0.0
    %1872 = vmatprep.subr.mxu0 0.0
    %1873 = vmatpush1.msra.mxu0 0.0
    %1874 = vmatprep.subr.mxu0 0.0
    %1875 = vmatpush1.msra.mxu0 0.0
    %1876 = vmatprep.subr.mxu0 0.0
    %1877 = vmatpush1.msra.mxu0 0.0
    %1878 = vmatprep.subr.mxu0 0.0
    %1879 = vmatpush1.msra.mxu0 0.0
    %1880 = vmatprep.subr.mxu0 0.0
    %1881 = vmatpush1.msra.mxu0 0.0
    %1882 = vmatprep.subr.mxu0 0.0
    %1883 = vmatpush1.msra.mxu0 0.0
    %1884 = vmatprep.mubr.f32.mxu0 0.0
    %1885 = vmatmul.mubr.f32.gmra.mrb[0].mxu0 %v1797
    %v1886 = vpop.f32.mrb[0].mxu0
    %v1887 = vadd.f32 %v1819, %v1886
    %v1888 = vpop.f32.mrb[0].mxu0
    %1889 = vmatprep.mubr.f32.mxu0 0.0
    %1890 = vmatmul.mubr.f32.gmra.mrb[0].mxu0 %v1798
    %v1891 = vpop.f32.mrb[0].mxu0
    %v1892 = vadd.f32 %v1819, %v1891
    %v1893 = vpop.f32.mrb[0].mxu0
    %1894 = vdwg.mxu0
    %v1895 = vadd.f32 %v1705, %v1887
    %v1896 = vadd.f32 %v1706, %v1892
    %v1897 = vld [vmem:[%s6 + $0x3] sm:$0x1]
    %v1898 = vld [vmem:[%s6 + $0x4] sm:$0x1]
    %v1899 = vsel %vm138, %v1895, 0.0
    %1900 = vadd.xlane.f32.xlu0 %v1899
    %v1901 = vpop.xlane.xlu0 %1900
    %v1902 = vsel %vm138, %v1896, 0.0
    %1903 = vadd.xlane.f32.xlu0 %v1902
    %v1904 = vpop.xlane.xlu0 %1903
    %v1905 = vmul.f32 %v1901, %v1670
    %v1906 = vmul.f32 %v1904, %v1670
    %v1907 = vmul.f32 %v1895, %v1895
    %v1908 = vmul.f32 %v1896, %v1896
    %v1909 = vsel %vm138, %v1907, 0.0
    %1910 = vadd.xlane.f32.xlu0 %v1909
    %v1911 = vpop.xlane.xlu0 %1910
    %v1912 = vsel %vm138, %v1908, 0.0
    %1913 = vadd.xlane.f32.xlu0 %v1912
    %v1914 = vpop.xlane.xlu0 %1913
    %v1915 = vmul.f32 %v1911, %v1670
    %v1916 = vmul.f32 %v1914, %v1670
    %v1917 = vmul.f32 %v1905, %v1905
    %v1918 = vmul.f32 %v1906, %v1906
    %v1919 = vsub.f32 %v1915, %v1917
    %v1920 = vsub.f32 %v1916, %v1918
    %v1921 = vsub.f32 %v1895, %v1905
    %v1922 = vsub.f32 %v1896, %v1906
    %v1923 = vadd.f32 %v1919, 1e-05
    %v1924 = vadd.f32 %v1920, 1e-05
    %v1925 = vrsqrt.pop %v1923
    %v1926 = vrsqrt.pop %v1924
    %v1927 = vmul.f32 %v1921, %v1925
    %v1928 = vmul.f32 %v1922, %v1926
    %v1929 = vlaneseq
    %v1930 = vshrl.u32 %v1929, 7
    %v1931 = vsub.s32 0, %v1930
    %v1932 = vrot.slane %v1897, %v1931
    %v1933 = vmul.f32 %v1927, %v1932
    %v1934 = vmul.f32 %v1928, %v1932
    %v1935 = vlaneseq
    %v1936 = vshrl.u32 %v1935, 7
    %v1937 = vsub.s32 0, %v1936
    %v1938 = vrot.slane %v1898, %v1937
    %v1939 = vadd.f32 %v1933, %v1938
    %v1940 = vadd.f32 %v1934, %v1938
    %s1941 = scalar_lea.vmem %s3, 32
    %v1942 = vld [vmem:[%s1941] sm:$0xff]
    %v1943 = vld [vmem:[%s1941 + $0x8] sm:$0xff]
    %v1944 = vld [vmem:[%s1941 + $0x10] sm:$0xff]
    %v1945 = vld [vmem:[%s1941 + $0x18] sm:$0xff]
    %s1946 = scalar_lea.vmem %s4, 1
    %v1947 = vld [vmem:[%s1946] sm:$0x1]
    %v1949 = vlaneseq
    %v1950 = vshrl.u32 %v1949, 7
    %v1951 = vsub.s32 0, %v1950
    %v1952 = vrot.slane %v1947, %v1951
    %v1955 = vsel %vm138, %v1939, 0
    %v1958 = vsel %vm138, %v1940, 0
    %1960 = vmatprep.subr.mxu0 0.0
    %1961 = vmatpush1.msra.mxu0 %v1942
    %1962 = vmatprep.subr.mxu0 0.0
    %1963 = vmatpush1.msra.mxu0 %v1943
    %1964 = vmatprep.subr.mxu0 0.0
    %1965 = vmatpush1.msra.mxu0 %v1944
    %1966 = vmatprep.subr.mxu0 0.0
    %1967 = vmatpush1.msra.mxu0 %v1945
    %1968 = vmatprep.subr.mxu0 0.0
    %1969 = vmatpush1.msra.mxu0 0.0
    %1970 = vmatprep.subr.mxu0 0.0
    %1971 = vmatpush1.msra.mxu0 0.0
    %1972 = vmatprep.subr.mxu0 0.0
    %1973 = vmatpush1.msra.mxu0 0.0
    %1974 = vmatprep.subr.mxu0 0.0
    %1975 = vmatpush1.msra.mxu0 0.0
    %1976 = vmatprep.subr.mxu0 0.0
    %1977 = vmatpush1.msra.mxu0 0.0
    %1978 = vmatprep.subr.mxu0 0.0
    %1979 = vmatpush1.msra.mxu0 0.0
    %1980 = vmatprep.subr.mxu0 0.0
    %1981 = vmatpush1.msra.mxu0 0.0
    %1982 = vmatprep.subr.mxu0 0.0
    %1983 = vmatpush1.msra.mxu0 0.0
    %1984 = vmatprep.subr.mxu0 0.0
    %1985 = vmatpush1.msra.mxu0 0.0
    %1986 = vmatprep.subr.mxu0 0.0
    %1987 = vmatpush1.msra.mxu0 0.0
    %1988 = vmatprep.subr.mxu0 0.0
    %1989 = vmatpush1.msra.mxu0 0.0
    %1990 = vmatprep.subr.mxu0 0.0
    %1991 = vmatpush1.msra.mxu0 0.0
    %1992 = vmatprep.subr.mxu0 0.0
    %1993 = vmatpush1.msra.mxu0 0.0
    %1994 = vmatprep.subr.mxu0 0.0
    %1995 = vmatpush1.msra.mxu0 0.0
    %1996 = vmatprep.subr.mxu0 0.0
    %1997 = vmatpush1.msra.mxu0 0.0
    %1998 = vmatprep.subr.mxu0 0.0
    %1999 = vmatpush1.msra.mxu0 0.0
    %2000 = vmatprep.subr.mxu0 0.0
    %2001 = vmatpush1.msra.mxu0 0.0
    %2002 = vmatprep.subr.mxu0 0.0
    %2003 = vmatpush1.msra.mxu0 0.0
    %2004 = vmatprep.subr.mxu0 0.0
    %2005 = vmatpush1.msra.mxu0 0.0
    %2006 = vmatprep.subr.mxu0 0.0
    %2007 = vmatpush1.msra.mxu0 0.0
    %2008 = vmatprep.subr.mxu0 0.0
    %2009 = vmatpush1.msra.mxu0 0.0
    %2010 = vmatprep.subr.mxu0 0.0
    %2011 = vmatpush1.msra.mxu0 0.0
    %2012 = vmatprep.subr.mxu0 0.0
    %2013 = vmatpush1.msra.mxu0 0.0
    %2014 = vmatprep.subr.mxu0 0.0
    %2015 = vmatpush1.msra.mxu0 0.0
    %2016 = vmatprep.subr.mxu0 0.0
    %2017 = vmatpush1.msra.mxu0 0.0
    %2018 = vmatprep.subr.mxu0 0.0
    %2019 = vmatpush1.msra.mxu0 0.0
    %2020 = vmatprep.subr.mxu0 0.0
    %2021 = vmatpush1.msra.mxu0 0.0
    %2022 = vmatprep.subr.mxu0 0.0
    %2023 = vmatpush1.msra.mxu0 0.0
    %2024 = vmatprep.mubr.f32.mxu0 0.0
    %2025 = vmatmul.mubr.f32.gmra.mrb[0].mxu0 %v1955
    %v2026 = vpop.f32.mrb[0].mxu0
    %v2027 = vadd.f32 %v1952, %v2026
    %v2028 = vpop.f32.mrb[0].mxu0
    %2029 = vmatprep.mubr.f32.mxu0 0.0
    %2030 = vmatmul.mubr.f32.gmra.mrb[0].mxu0 %v1958
    %v2031 = vpop.f32.mrb[0].mxu0
    %v2032 = vadd.f32 %v1952, %v2031
    %v2033 = vpop.f32.mrb[0].mxu0
    %2034 = vdwg.mxu0
    %2037 = vrot.lane.b32.xlu0 %v2027, 120
    %v2038 = vpop.permute.xlu0 %2037
    %2039 = vrot.lane.b32.xlu0 %v2032, 120
    %v2040 = vpop.permute.xlu0 %2039
    %2041 = vrot.lane.b32.xlu0 %v2027, 112
    %v2042 = vpop.permute.xlu0 %2041
    %2043 = vrot.lane.b32.xlu0 %v2032, 112
    %v2044 = vpop.permute.xlu0 %2043
    %2045 = vrot.lane.b32.xlu0 %v2027, 104
    %v2046 = vpop.permute.xlu0 %2045
    %2047 = vrot.lane.b32.xlu0 %v2032, 104
    %v2048 = vpop.permute.xlu0 %2047
    %2049 = vrot.lane.b32.xlu0 %v2027, 96
    %v2050 = vpop.permute.xlu0 %2049
    %v2051 = vsel %vm236, %v2027, 0
    %v2053 = vsel %vm236, %v2050, 0
    %2055 = vmatprep.subr.mxu0 0.0
    %2056 = vmatpush1.xpose.msra.mxu0 %v2053
    %2057 = vmatprep.subr.mxu0 0.0
    %2058 = vmatpush1.xpose.msra.mxu0 0.0
    %2059 = vmatprep.subr.mxu0 0.0
    %2060 = vmatpush1.xpose.msra.mxu0 0.0
    %2061 = vmatprep.subr.mxu0 0.0
    %2062 = vmatpush1.xpose.msra.mxu0 0.0
    %2063 = vmatprep.subr.mxu0 0.0
    %2064 = vmatpush1.xpose.msra.mxu0 0.0
    %2065 = vmatprep.subr.mxu0 0.0
    %2066 = vmatpush1.xpose.msra.mxu0 0.0
    %2067 = vmatprep.subr.mxu0 0.0
    %2068 = vmatpush1.xpose.msra.mxu0 0.0
    %2069 = vmatprep.subr.mxu0 0.0
    %2070 = vmatpush1.xpose.msra.mxu0 0.0
    %2071 = vmatprep.subr.mxu0 0.0
    %2072 = vmatpush1.xpose.msra.mxu0 0.0
    %2073 = vmatprep.subr.mxu0 0.0
    %2074 = vmatpush1.xpose.msra.mxu0 0.0
    %2075 = vmatprep.subr.mxu0 0.0
    %2076 = vmatpush1.xpose.msra.mxu0 0.0
    %2077 = vmatprep.subr.mxu0 0.0
    %2078 = vmatpush1.xpose.msra.mxu0 0.0
    %2079 = vmatprep.subr.mxu0 0.0
    %2080 = vmatpush1.xpose.msra.mxu0 0.0
    %2081 = vmatprep.subr.mxu0 0.0
    %2082 = vmatpush1.xpose.msra.mxu0 0.0
    %2083 = vmatprep.subr.mxu0 0.0
    %2084 = vmatpush1.xpose.msra.mxu0 0.0
    %2085 = vmatprep.subr.mxu0 0.0
    %2086 = vmatpush1.xpose.msra.mxu0 0.0
    %2087 = vmatprep.subr.mxu0 0.0
    %2088 = vmatpush1.xpose.msra.mxu0 0.0
    %2089 = vmatprep.subr.mxu0 0.0
    %2090 = vmatpush1.xpose.msra.mxu0 0.0
    %2091 = vmatprep.subr.mxu0 0.0
    %2092 = vmatpush1.xpose.msra.mxu0 0.0
    %2093 = vmatprep.subr.mxu0 0.0
    %2094 = vmatpush1.xpose.msra.mxu0 0.0
    %2095 = vmatprep.subr.mxu0 0.0
    %2096 = vmatpush1.xpose.msra.mxu0 0.0
    %2097 = vmatprep.subr.mxu0 0.0
    %2098 = vmatpush1.xpose.msra.mxu0 0.0
    %2099 = vmatprep.subr.mxu0 0.0
    %2100 = vmatpush1.xpose.msra.mxu0 0.0
    %2101 = vmatprep.subr.mxu0 0.0
    %2102 = vmatpush1.xpose.msra.mxu0 0.0
    %2103 = vmatprep.subr.mxu0 0.0
    %2104 = vmatpush1.xpose.msra.mxu0 0.0
    %2105 = vmatprep.subr.mxu0 0.0
    %2106 = vmatpush1.xpose.msra.mxu0 0.0
    %2107 = vmatprep.subr.mxu0 0.0
    %2108 = vmatpush1.xpose.msra.mxu0 0.0
    %2109 = vmatprep.subr.mxu0 0.0
    %2110 = vmatpush1.xpose.msra.mxu0 0.0
    %2111 = vmatprep.subr.mxu0 0.0
    %2112 = vmatpush1.xpose.msra.mxu0 0.0
    %2113 = vmatprep.subr.mxu0 0.0
    %2114 = vmatpush1.xpose.msra.mxu0 0.0
    %2115 = vmatprep.subr.mxu0 0.0
    %2116 = vmatpush1.xpose.msra.mxu0 0.0
    %2117 = vmatprep.subr.mxu0 0.0
    %2118 = vmatpush1.xpose.msra.mxu0 0.0
    %2119 = vmatprep.mubr.f32.mxu0 0.0
    %2120 = vmatmul.mubr.f32.gmra.mrb[0].mxu0 %v2051
    %v2121 = vpop.f32.mrb[0].mxu0
    %v2122 = vadd.f32 0.0, %v2121
    %v2123 = vpop.f32.mrb[0].mxu0
    %2124 = vdwg.mxu0
    %2125 = vrot.lane.b32.xlu0 %v2032, 96
    %v2126 = vpop.permute.xlu0 %2125
    %v2127 = vsel %vm236, %v2032, 0
    %v2129 = vsel %vm236, %v2126, 0
    %2131 = vmatprep.subr.mxu0 0.0
    %2132 = vmatpush1.xpose.msra.mxu0 %v2129
    %2133 = vmatprep.subr.mxu0 0.0
    %2134 = vmatpush1.xpose.msra.mxu0 0.0
    %2135 = vmatprep.subr.mxu0 0.0
    %2136 = vmatpush1.xpose.msra.mxu0 0.0
    %2137 = vmatprep.subr.mxu0 0.0
    %2138 = vmatpush1.xpose.msra.mxu0 0.0
    %2139 = vmatprep.subr.mxu0 0.0
    %2140 = vmatpush1.xpose.msra.mxu0 0.0
    %2141 = vmatprep.subr.mxu0 0.0
    %2142 = vmatpush1.xpose.msra.mxu0 0.0
    %2143 = vmatprep.subr.mxu0 0.0
    %2144 = vmatpush1.xpose.msra.mxu0 0.0
    %2145 = vmatprep.subr.mxu0 0.0
    %2146 = vmatpush1.xpose.msra.mxu0 0.0
    %2147 = vmatprep.subr.mxu0 0.0
    %2148 = vmatpush1.xpose.msra.mxu0 0.0
    %2149 = vmatprep.subr.mxu0 0.0
    %2150 = vmatpush1.xpose.msra.mxu0 0.0
    %2151 = vmatprep.subr.mxu0 0.0
    %2152 = vmatpush1.xpose.msra.mxu0 0.0
    %2153 = vmatprep.subr.mxu0 0.0
    %2154 = vmatpush1.xpose.msra.mxu0 0.0
    %2155 = vmatprep.subr.mxu0 0.0
    %2156 = vmatpush1.xpose.msra.mxu0 0.0
    %2157 = vmatprep.subr.mxu0 0.0
    %2158 = vmatpush1.xpose.msra.mxu0 0.0
    %2159 = vmatprep.subr.mxu0 0.0
    %2160 = vmatpush1.xpose.msra.mxu0 0.0
    %2161 = vmatprep.subr.mxu0 0.0
    %2162 = vmatpush1.xpose.msra.mxu0 0.0
    %2163 = vmatprep.subr.mxu0 0.0
    %2164 = vmatpush1.xpose.msra.mxu0 0.0
    %2165 = vmatprep.subr.mxu0 0.0
    %2166 = vmatpush1.xpose.msra.mxu0 0.0
    %2167 = vmatprep.subr.mxu0 0.0
    %2168 = vmatpush1.xpose.msra.mxu0 0.0
    %2169 = vmatprep.subr.mxu0 0.0
    %2170 = vmatpush1.xpose.msra.mxu0 0.0
    %2171 = vmatprep.subr.mxu0 0.0
    %2172 = vmatpush1.xpose.msra.mxu0 0.0
    %2173 = vmatprep.subr.mxu0 0.0
    %2174 = vmatpush1.xpose.msra.mxu0 0.0
    %2175 = vmatprep.subr.mxu0 0.0
    %2176 = vmatpush1.xpose.msra.mxu0 0.0
    %2177 = vmatprep.subr.mxu0 0.0
    %2178 = vmatpush1.xpose.msra.mxu0 0.0
    %2179 = vmatprep.subr.mxu0 0.0
    %2180 = vmatpush1.xpose.msra.mxu0 0.0
    %2181 = vmatprep.subr.mxu0 0.0
    %2182 = vmatpush1.xpose.msra.mxu0 0.0
    %2183 = vmatprep.subr.mxu0 0.0
    %2184 = vmatpush1.xpose.msra.mxu0 0.0
    %2185 = vmatprep.subr.mxu0 0.0
    %2186 = vmatpush1.xpose.msra.mxu0 0.0
    %2187 = vmatprep.subr.mxu0 0.0
    %2188 = vmatpush1.xpose.msra.mxu0 0.0
    %2189 = vmatprep.subr.mxu0 0.0
    %2190 = vmatpush1.xpose.msra.mxu0 0.0
    %2191 = vmatprep.subr.mxu0 0.0
    %2192 = vmatpush1.xpose.msra.mxu0 0.0
    %2193 = vmatprep.subr.mxu0 0.0
    %2194 = vmatpush1.xpose.msra.mxu0 0.0
    %2195 = vmatprep.mubr.f32.mxu0 0.0
    %2196 = vmatmul.mubr.f32.gmra.mrb[0].mxu0 %v2127
    %v2197 = vpop.f32.mrb[0].mxu0
    %v2198 = vadd.f32 0.0, %v2197
    %v2199 = vpop.f32.mrb[0].mxu0
    %2200 = vdwg.mxu0
    %2201 = vrot.lane.b32.xlu0 %v2038, 96
    %v2202 = vpop.permute.xlu0 %2201
    %v2203 = vsel %vm236, %v2038, 0
    %v2205 = vsel %vm236, %v2202, 0
    %2207 = vmatprep.subr.mxu0 0.0
    %2208 = vmatpush1.xpose.msra.mxu0 %v2205
    %2209 = vmatprep.subr.mxu0 0.0
    %2210 = vmatpush1.xpose.msra.mxu0 0.0
    %2211 = vmatprep.subr.mxu0 0.0
    %2212 = vmatpush1.xpose.msra.mxu0 0.0
    %2213 = vmatprep.subr.mxu0 0.0
    %2214 = vmatpush1.xpose.msra.mxu0 0.0
    %2215 = vmatprep.subr.mxu0 0.0
    %2216 = vmatpush1.xpose.msra.mxu0 0.0
    %2217 = vmatprep.subr.mxu0 0.0
    %2218 = vmatpush1.xpose.msra.mxu0 0.0
    %2219 = vmatprep.subr.mxu0 0.0
    %2220 = vmatpush1.xpose.msra.mxu0 0.0
    %2221 = vmatprep.subr.mxu0 0.0
    %2222 = vmatpush1.xpose.msra.mxu0 0.0
    %2223 = vmatprep.subr.mxu0 0.0
    %2224 = vmatpush1.xpose.msra.mxu0 0.0
    %2225 = vmatprep.subr.mxu0 0.0
    %2226 = vmatpush1.xpose.msra.mxu0 0.0
    %2227 = vmatprep.subr.mxu0 0.0
    %2228 = vmatpush1.xpose.msra.mxu0 0.0
    %2229 = vmatprep.subr.mxu0 0.0
    %2230 = vmatpush1.xpose.msra.mxu0 0.0
    %2231 = vmatprep.subr.mxu0 0.0
    %2232 = vmatpush1.xpose.msra.mxu0 0.0
    %2233 = vmatprep.subr.mxu0 0.0
    %2234 = vmatpush1.xpose.msra.mxu0 0.0
    %2235 = vmatprep.subr.mxu0 0.0
    %2236 = vmatpush1.xpose.msra.mxu0 0.0
    %2237 = vmatprep.subr.mxu0 0.0
    %2238 = vmatpush1.xpose.msra.mxu0 0.0
    %2239 = vmatprep.subr.mxu0 0.0
    %2240 = vmatpush1.xpose.msra.mxu0 0.0
    %2241 = vmatprep.subr.mxu0 0.0
    %2242 = vmatpush1.xpose.msra.mxu0 0.0
    %2243 = vmatprep.subr.mxu0 0.0
    %2244 = vmatpush1.xpose.msra.mxu0 0.0
    %2245 = vmatprep.subr.mxu0 0.0
    %2246 = vmatpush1.xpose.msra.mxu0 0.0
    %2247 = vmatprep.subr.mxu0 0.0
    %2248 = vmatpush1.xpose.msra.mxu0 0.0
    %2249 = vmatprep.subr.mxu0 0.0
    %2250 = vmatpush1.xpose.msra.mxu0 0.0
    %2251 = vmatprep.subr.mxu0 0.0
    %2252 = vmatpush1.xpose.msra.mxu0 0.0
    %2253 = vmatprep.subr.mxu0 0.0
    %2254 = vmatpush1.xpose.msra.mxu0 0.0
    %2255 = vmatprep.subr.mxu0 0.0
    %2256 = vmatpush1.xpose.msra.mxu0 0.0
    %2257 = vmatprep.subr.mxu0 0.0
    %2258 = vmatpush1.xpose.msra.mxu0 0.0
    %2259 = vmatprep.subr.mxu0 0.0
    %2260 = vmatpush1.xpose.msra.mxu0 0.0
    %2261 = vmatprep.subr.mxu0 0.0
    %2262 = vmatpush1.xpose.msra.mxu0 0.0
    %2263 = vmatprep.subr.mxu0 0.0
    %2264 = vmatpush1.xpose.msra.mxu0 0.0
    %2265 = vmatprep.subr.mxu0 0.0
    %2266 = vmatpush1.xpose.msra.mxu0 0.0
    %2267 = vmatprep.subr.mxu0 0.0
    %2268 = vmatpush1.xpose.msra.mxu0 0.0
    %2269 = vmatprep.subr.mxu0 0.0
    %2270 = vmatpush1.xpose.msra.mxu0 0.0
    %2271 = vmatprep.mubr.f32.mxu0 0.0
    %2272 = vmatmul.mubr.f32.gmra.mrb[0].mxu0 %v2203
    %v2273 = vpop.f32.mrb[0].mxu0
    %v2274 = vadd.f32 0.0, %v2273
    %v2275 = vpop.f32.mrb[0].mxu0
    %2276 = vdwg.mxu0
    %2277 = vrot.lane.b32.xlu0 %v2040, 96
    %v2278 = vpop.permute.xlu0 %2277
    %v2279 = vsel %vm236, %v2040, 0
    %v2281 = vsel %vm236, %v2278, 0
    %2283 = vmatprep.subr.mxu0 0.0
    %2284 = vmatpush1.xpose.msra.mxu0 %v2281
    %2285 = vmatprep.subr.mxu0 0.0
    %2286 = vmatpush1.xpose.msra.mxu0 0.0
    %2287 = vmatprep.subr.mxu0 0.0
    %2288 = vmatpush1.xpose.msra.mxu0 0.0
    %2289 = vmatprep.subr.mxu0 0.0
    %2290 = vmatpush1.xpose.msra.mxu0 0.0
    %2291 = vmatprep.subr.mxu0 0.0
    %2292 = vmatpush1.xpose.msra.mxu0 0.0
    %2293 = vmatprep.subr.mxu0 0.0
    %2294 = vmatpush1.xpose.msra.mxu0 0.0
    %2295 = vmatprep.subr.mxu0 0.0
    %2296 = vmatpush1.xpose.msra.mxu0 0.0
    %2297 = vmatprep.subr.mxu0 0.0
    %2298 = vmatpush1.xpose.msra.mxu0 0.0
    %2299 = vmatprep.subr.mxu0 0.0
    %2300 = vmatpush1.xpose.msra.mxu0 0.0
    %2301 = vmatprep.subr.mxu0 0.0
    %2302 = vmatpush1.xpose.msra.mxu0 0.0
    %2303 = vmatprep.subr.mxu0 0.0
    %2304 = vmatpush1.xpose.msra.mxu0 0.0
    %2305 = vmatprep.subr.mxu0 0.0
    %2306 = vmatpush1.xpose.msra.mxu0 0.0
    %2307 = vmatprep.subr.mxu0 0.0
    %2308 = vmatpush1.xpose.msra.mxu0 0.0
    %2309 = vmatprep.subr.mxu0 0.0
    %2310 = vmatpush1.xpose.msra.mxu0 0.0
    %2311 = vmatprep.subr.mxu0 0.0
    %2312 = vmatpush1.xpose.msra.mxu0 0.0
    %2313 = vmatprep.subr.mxu0 0.0
    %2314 = vmatpush1.xpose.msra.mxu0 0.0
    %2315 = vmatprep.subr.mxu0 0.0
    %2316 = vmatpush1.xpose.msra.mxu0 0.0
    %2317 = vmatprep.subr.mxu0 0.0
    %2318 = vmatpush1.xpose.msra.mxu0 0.0
    %2319 = vmatprep.subr.mxu0 0.0
    %2320 = vmatpush1.xpose.msra.mxu0 0.0
    %2321 = vmatprep.subr.mxu0 0.0
    %2322 = vmatpush1.xpose.msra.mxu0 0.0
    %2323 = vmatprep.subr.mxu0 0.0
    %2324 = vmatpush1.xpose.msra.mxu0 0.0
    %2325 = vmatprep.subr.mxu0 0.0
    %2326 = vmatpush1.xpose.msra.mxu0 0.0
    %2327 = vmatprep.subr.mxu0 0.0
    %2328 = vmatpush1.xpose.msra.mxu0 0.0
    %2329 = vmatprep.subr.mxu0 0.0
    %2330 = vmatpush1.xpose.msra.mxu0 0.0
    %2331 = vmatprep.subr.mxu0 0.0
    %2332 = vmatpush1.xpose.msra.mxu0 0.0
    %2333 = vmatprep.subr.mxu0 0.0
    %2334 = vmatpush1.xpose.msra.mxu0 0.0
    %2335 = vmatprep.subr.mxu0 0.0
    %2336 = vmatpush1.xpose.msra.mxu0 0.0
    %2337 = vmatprep.subr.mxu0 0.0
    %2338 = vmatpush1.xpose.msra.mxu0 0.0
    %2339 = vmatprep.subr.mxu0 0.0
    %2340 = vmatpush1.xpose.msra.mxu0 0.0
    %2341 = vmatprep.subr.mxu0 0.0
    %2342 = vmatpush1.xpose.msra.mxu0 0.0
    %2343 = vmatprep.subr.mxu0 0.0
    %2344 = vmatpush1.xpose.msra.mxu0 0.0
    %2345 = vmatprep.subr.mxu0 0.0
    %2346 = vmatpush1.xpose.msra.mxu0 0.0
    %2347 = vmatprep.mubr.f32.mxu0 0.0
    %2348 = vmatmul.mubr.f32.gmra.mrb[0].mxu0 %v2279
    %v2349 = vpop.f32.mrb[0].mxu0
    %v2350 = vadd.f32 0.0, %v2349
    %v2351 = vpop.f32.mrb[0].mxu0
    %2352 = vdwg.mxu0
    %2353 = vrot.lane.b32.xlu0 %v2042, 96
    %v2354 = vpop.permute.xlu0 %2353
    %v2355 = vsel %vm236, %v2042, 0
    %v2357 = vsel %vm236, %v2354, 0
    %2359 = vmatprep.subr.mxu0 0.0
    %2360 = vmatpush1.xpose.msra.mxu0 %v2357
    %2361 = vmatprep.subr.mxu0 0.0
    %2362 = vmatpush1.xpose.msra.mxu0 0.0
    %2363 = vmatprep.subr.mxu0 0.0
    %2364 = vmatpush1.xpose.msra.mxu0 0.0
    %2365 = vmatprep.subr.mxu0 0.0
    %2366 = vmatpush1.xpose.msra.mxu0 0.0
    %2367 = vmatprep.subr.mxu0 0.0
    %2368 = vmatpush1.xpose.msra.mxu0 0.0
    %2369 = vmatprep.subr.mxu0 0.0
    %2370 = vmatpush1.xpose.msra.mxu0 0.0
    %2371 = vmatprep.subr.mxu0 0.0
    %2372 = vmatpush1.xpose.msra.mxu0 0.0
    %2373 = vmatprep.subr.mxu0 0.0
    %2374 = vmatpush1.xpose.msra.mxu0 0.0
    %2375 = vmatprep.subr.mxu0 0.0
    %2376 = vmatpush1.xpose.msra.mxu0 0.0
    %2377 = vmatprep.subr.mxu0 0.0
    %2378 = vmatpush1.xpose.msra.mxu0 0.0
    %2379 = vmatprep.subr.mxu0 0.0
    %2380 = vmatpush1.xpose.msra.mxu0 0.0
    %2381 = vmatprep.subr.mxu0 0.0
    %2382 = vmatpush1.xpose.msra.mxu0 0.0
    %2383 = vmatprep.subr.mxu0 0.0
    %2384 = vmatpush1.xpose.msra.mxu0 0.0
    %2385 = vmatprep.subr.mxu0 0.0
    %2386 = vmatpush1.xpose.msra.mxu0 0.0
    %2387 = vmatprep.subr.mxu0 0.0
    %2388 = vmatpush1.xpose.msra.mxu0 0.0
    %2389 = vmatprep.subr.mxu0 0.0
    %2390 = vmatpush1.xpose.msra.mxu0 0.0
    %2391 = vmatprep.subr.mxu0 0.0
    %2392 = vmatpush1.xpose.msra.mxu0 0.0
    %2393 = vmatprep.subr.mxu0 0.0
    %2394 = vmatpush1.xpose.msra.mxu0 0.0
    %2395 = vmatprep.subr.mxu0 0.0
    %2396 = vmatpush1.xpose.msra.mxu0 0.0
    %2397 = vmatprep.subr.mxu0 0.0
    %2398 = vmatpush1.xpose.msra.mxu0 0.0
    %2399 = vmatprep.subr.mxu0 0.0
    %2400 = vmatpush1.xpose.msra.mxu0 0.0
    %2401 = vmatprep.subr.mxu0 0.0
    %2402 = vmatpush1.xpose.msra.mxu0 0.0
    %2403 = vmatprep.subr.mxu0 0.0
    %2404 = vmatpush1.xpose.msra.mxu0 0.0
    %2405 = vmatprep.subr.mxu0 0.0
    %2406 = vmatpush1.xpose.msra.mxu0 0.0
    %2407 = vmatprep.subr.mxu0 0.0
    %2408 = vmatpush1.xpose.msra.mxu0 0.0
    %2409 = vmatprep.subr.mxu0 0.0
    %2410 = vmatpush1.xpose.msra.mxu0 0.0
    %2411 = vmatprep.subr.mxu0 0.0
    %2412 = vmatpush1.xpose.msra.mxu0 0.0
    %2413 = vmatprep.subr.mxu0 0.0
    %2414 = vmatpush1.xpose.msra.mxu0 0.0
    %2415 = vmatprep.subr.mxu0 0.0
    %2416 = vmatpush1.xpose.msra.mxu0 0.0
    %2417 = vmatprep.subr.mxu0 0.0
    %2418 = vmatpush1.xpose.msra.mxu0 0.0
    %2419 = vmatprep.subr.mxu0 0.0
    %2420 = vmatpush1.xpose.msra.mxu0 0.0
    %2421 = vmatprep.subr.mxu0 0.0
    %2422 = vmatpush1.xpose.msra.mxu0 0.0
    %2423 = vmatprep.mubr.f32.mxu0 0.0
    %2424 = vmatmul.mubr.f32.gmra.mrb[0].mxu0 %v2355
    %v2425 = vpop.f32.mrb[0].mxu0
    %v2426 = vadd.f32 0.0, %v2425
    %v2427 = vpop.f32.mrb[0].mxu0
    %2428 = vdwg.mxu0
    %2429 = vrot.lane.b32.xlu0 %v2044, 96
    %v2430 = vpop.permute.xlu0 %2429
    %v2431 = vsel %vm236, %v2044, 0
    %v2433 = vsel %vm236, %v2430, 0
    %2435 = vmatprep.subr.mxu0 0.0
    %2436 = vmatpush1.xpose.msra.mxu0 %v2433
    %2437 = vmatprep.subr.mxu0 0.0
    %2438 = vmatpush1.xpose.msra.mxu0 0.0
    %2439 = vmatprep.subr.mxu0 0.0
    %2440 = vmatpush1.xpose.msra.mxu0 0.0
    %2441 = vmatprep.subr.mxu0 0.0
    %2442 = vmatpush1.xpose.msra.mxu0 0.0
    %2443 = vmatprep.subr.mxu0 0.0
    %2444 = vmatpush1.xpose.msra.mxu0 0.0
    %2445 = vmatprep.subr.mxu0 0.0
    %2446 = vmatpush1.xpose.msra.mxu0 0.0
    %2447 = vmatprep.subr.mxu0 0.0
    %2448 = vmatpush1.xpose.msra.mxu0 0.0
    %2449 = vmatprep.subr.mxu0 0.0
    %2450 = vmatpush1.xpose.msra.mxu0 0.0
    %2451 = vmatprep.subr.mxu0 0.0
    %2452 = vmatpush1.xpose.msra.mxu0 0.0
    %2453 = vmatprep.subr.mxu0 0.0
    %2454 = vmatpush1.xpose.msra.mxu0 0.0
    %2455 = vmatprep.subr.mxu0 0.0
    %2456 = vmatpush1.xpose.msra.mxu0 0.0
    %2457 = vmatprep.subr.mxu0 0.0
    %2458 = vmatpush1.xpose.msra.mxu0 0.0
    %2459 = vmatprep.subr.mxu0 0.0
    %2460 = vmatpush1.xpose.msra.mxu0 0.0
    %2461 = vmatprep.subr.mxu0 0.0
    %2462 = vmatpush1.xpose.msra.mxu0 0.0
    %2463 = vmatprep.subr.mxu0 0.0
    %2464 = vmatpush1.xpose.msra.mxu0 0.0
    %2465 = vmatprep.subr.mxu0 0.0
    %2466 = vmatpush1.xpose.msra.mxu0 0.0
    %2467 = vmatprep.subr.mxu0 0.0
    %2468 = vmatpush1.xpose.msra.mxu0 0.0
    %2469 = vmatprep.subr.mxu0 0.0
    %2470 = vmatpush1.xpose.msra.mxu0 0.0
    %2471 = vmatprep.subr.mxu0 0.0
    %2472 = vmatpush1.xpose.msra.mxu0 0.0
    %2473 = vmatprep.subr.mxu0 0.0
    %2474 = vmatpush1.xpose.msra.mxu0 0.0
    %2475 = vmatprep.subr.mxu0 0.0
    %2476 = vmatpush1.xpose.msra.mxu0 0.0
    %2477 = vmatprep.subr.mxu0 0.0
    %2478 = vmatpush1.xpose.msra.mxu0 0.0
    %2479 = vmatprep.subr.mxu0 0.0
    %2480 = vmatpush1.xpose.msra.mxu0 0.0
    %2481 = vmatprep.subr.mxu0 0.0
    %2482 = vmatpush1.xpose.msra.mxu0 0.0
    %2483 = vmatprep.subr.mxu0 0.0
    %2484 = vmatpush1.xpose.msra.mxu0 0.0
    %2485 = vmatprep.subr.mxu0 0.0
    %2486 = vmatpush1.xpose.msra.mxu0 0.0
    %2487 = vmatprep.subr.mxu0 0.0
    %2488 = vmatpush1.xpose.msra.mxu0 0.0
    %2489 = vmatprep.subr.mxu0 0.0
    %2490 = vmatpush1.xpose.msra.mxu0 0.0
    %2491 = vmatprep.subr.mxu0 0.0
    %2492 = vmatpush1.xpose.msra.mxu0 0.0
    %2493 = vmatprep.subr.mxu0 0.0
    %2494 = vmatpush1.xpose.msra.mxu0 0.0
    %2495 = vmatprep.subr.mxu0 0.0
    %2496 = vmatpush1.xpose.msra.mxu0 0.0
    %2497 = vmatprep.subr.mxu0 0.0
    %2498 = vmatpush1.xpose.msra.mxu0 0.0
    %2499 = vmatprep.mubr.f32.mxu0 0.0
    %2500 = vmatmul.mubr.f32.gmra.mrb[0].mxu0 %v2431
    %v2501 = vpop.f32.mrb[0].mxu0
    %v2502 = vadd.f32 0.0, %v2501
    %v2503 = vpop.f32.mrb[0].mxu0
    %2504 = vdwg.mxu0
    %2505 = vrot.lane.b32.xlu0 %v2046, 96
    %v2506 = vpop.permute.xlu0 %2505
    %v2507 = vsel %vm236, %v2046, 0
    %v2509 = vsel %vm236, %v2506, 0
    %2511 = vmatprep.subr.mxu0 0.0
    %2512 = vmatpush1.xpose.msra.mxu0 %v2509
    %2513 = vmatprep.subr.mxu0 0.0
    %2514 = vmatpush1.xpose.msra.mxu0 0.0
    %2515 = vmatprep.subr.mxu0 0.0
    %2516 = vmatpush1.xpose.msra.mxu0 0.0
    %2517 = vmatprep.subr.mxu0 0.0
    %2518 = vmatpush1.xpose.msra.mxu0 0.0
    %2519 = vmatprep.subr.mxu0 0.0
    %2520 = vmatpush1.xpose.msra.mxu0 0.0
    %2521 = vmatprep.subr.mxu0 0.0
    %2522 = vmatpush1.xpose.msra.mxu0 0.0
    %2523 = vmatprep.subr.mxu0 0.0
    %2524 = vmatpush1.xpose.msra.mxu0 0.0
    %2525 = vmatprep.subr.mxu0 0.0
    %2526 = vmatpush1.xpose.msra.mxu0 0.0
    %2527 = vmatprep.subr.mxu0 0.0
    %2528 = vmatpush1.xpose.msra.mxu0 0.0
    %2529 = vmatprep.subr.mxu0 0.0
    %2530 = vmatpush1.xpose.msra.mxu0 0.0
    %2531 = vmatprep.subr.mxu0 0.0
    %2532 = vmatpush1.xpose.msra.mxu0 0.0
    %2533 = vmatprep.subr.mxu0 0.0
    %2534 = vmatpush1.xpose.msra.mxu0 0.0
    %2535 = vmatprep.subr.mxu0 0.0
    %2536 = vmatpush1.xpose.msra.mxu0 0.0
    %2537 = vmatprep.subr.mxu0 0.0
    %2538 = vmatpush1.xpose.msra.mxu0 0.0
    %2539 = vmatprep.subr.mxu0 0.0
    %2540 = vmatpush1.xpose.msra.mxu0 0.0
    %2541 = vmatprep.subr.mxu0 0.0
    %2542 = vmatpush1.xpose.msra.mxu0 0.0
    %2543 = vmatprep.subr.mxu0 0.0
    %2544 = vmatpush1.xpose.msra.mxu0 0.0
    %2545 = vmatprep.subr.mxu0 0.0
    %2546 = vmatpush1.xpose.msra.mxu0 0.0
    %2547 = vmatprep.subr.mxu0 0.0
    %2548 = vmatpush1.xpose.msra.mxu0 0.0
    %2549 = vmatprep.subr.mxu0 0.0
    %2550 = vmatpush1.xpose.msra.mxu0 0.0
    %2551 = vmatprep.subr.mxu0 0.0
    %2552 = vmatpush1.xpose.msra.mxu0 0.0
    %2553 = vmatprep.subr.mxu0 0.0
    %2554 = vmatpush1.xpose.msra.mxu0 0.0
    %2555 = vmatprep.subr.mxu0 0.0
    %2556 = vmatpush1.xpose.msra.mxu0 0.0
    %2557 = vmatprep.subr.mxu0 0.0
    %2558 = vmatpush1.xpose.msra.mxu0 0.0
    %2559 = vmatprep.subr.mxu0 0.0
    %2560 = vmatpush1.xpose.msra.mxu0 0.0
    %2561 = vmatprep.subr.mxu0 0.0
    %2562 = vmatpush1.xpose.msra.mxu0 0.0
    %2563 = vmatprep.subr.mxu0 0.0
    %2564 = vmatpush1.xpose.msra.mxu0 0.0
    %2565 = vmatprep.subr.mxu0 0.0
    %2566 = vmatpush1.xpose.msra.mxu0 0.0
    %2567 = vmatprep.subr.mxu0 0.0
    %2568 = vmatpush1.xpose.msra.mxu0 0.0
    %2569 = vmatprep.subr.mxu0 0.0
    %2570 = vmatpush1.xpose.msra.mxu0 0.0
    %2571 = vmatprep.subr.mxu0 0.0
    %2572 = vmatpush1.xpose.msra.mxu0 0.0
    %2573 = vmatprep.subr.mxu0 0.0
    %2574 = vmatpush1.xpose.msra.mxu0 0.0
    %2575 = vmatprep.mubr.f32.mxu0 0.0
    %2576 = vmatmul.mubr.f32.gmra.mrb[0].mxu0 %v2507
    %v2577 = vpop.f32.mrb[0].mxu0
    %v2578 = vadd.f32 0.0, %v2577
    %v2579 = vpop.f32.mrb[0].mxu0
    %2580 = vdwg.mxu0
    %2581 = vrot.lane.b32.xlu0 %v2048, 96
    %v2582 = vpop.permute.xlu0 %2581
    %v2583 = vsel %vm236, %v2048, 0
    %v2585 = vsel %vm236, %v2582, 0
    %2587 = vmatprep.subr.mxu0 0.0
    %2588 = vmatpush1.xpose.msra.mxu0 %v2585
    %2589 = vmatprep.subr.mxu0 0.0
    %2590 = vmatpush1.xpose.msra.mxu0 0.0
    %2591 = vmatprep.subr.mxu0 0.0
    %2592 = vmatpush1.xpose.msra.mxu0 0.0
    %2593 = vmatprep.subr.mxu0 0.0
    %2594 = vmatpush1.xpose.msra.mxu0 0.0
    %2595 = vmatprep.subr.mxu0 0.0
    %2596 = vmatpush1.xpose.msra.mxu0 0.0
    %2597 = vmatprep.subr.mxu0 0.0
    %2598 = vmatpush1.xpose.msra.mxu0 0.0
    %2599 = vmatprep.subr.mxu0 0.0
    %2600 = vmatpush1.xpose.msra.mxu0 0.0
    %2601 = vmatprep.subr.mxu0 0.0
    %2602 = vmatpush1.xpose.msra.mxu0 0.0
    %2603 = vmatprep.subr.mxu0 0.0
    %2604 = vmatpush1.xpose.msra.mxu0 0.0
    %2605 = vmatprep.subr.mxu0 0.0
    %2606 = vmatpush1.xpose.msra.mxu0 0.0
    %2607 = vmatprep.subr.mxu0 0.0
    %2608 = vmatpush1.xpose.msra.mxu0 0.0
    %2609 = vmatprep.subr.mxu0 0.0
    %2610 = vmatpush1.xpose.msra.mxu0 0.0
    %2611 = vmatprep.subr.mxu0 0.0
    %2612 = vmatpush1.xpose.msra.mxu0 0.0
    %2613 = vmatprep.subr.mxu0 0.0
    %2614 = vmatpush1.xpose.msra.mxu0 0.0
    %2615 = vmatprep.subr.mxu0 0.0
    %2616 = vmatpush1.xpose.msra.mxu0 0.0
    %2617 = vmatprep.subr.mxu0 0.0
    %2618 = vmatpush1.xpose.msra.mxu0 0.0
    %2619 = vmatprep.subr.mxu0 0.0
    %2620 = vmatpush1.xpose.msra.mxu0 0.0
    %2621 = vmatprep.subr.mxu0 0.0
    %2622 = vmatpush1.xpose.msra.mxu0 0.0
    %2623 = vmatprep.subr.mxu0 0.0
    %2624 = vmatpush1.xpose.msra.mxu0 0.0
    %2625 = vmatprep.subr.mxu0 0.0
    %2626 = vmatpush1.xpose.msra.mxu0 0.0
    %2627 = vmatprep.subr.mxu0 0.0
    %2628 = vmatpush1.xpose.msra.mxu0 0.0
    %2629 = vmatprep.subr.mxu0 0.0
    %2630 = vmatpush1.xpose.msra.mxu0 0.0
    %2631 = vmatprep.subr.mxu0 0.0
    %2632 = vmatpush1.xpose.msra.mxu0 0.0
    %2633 = vmatprep.subr.mxu0 0.0
    %2634 = vmatpush1.xpose.msra.mxu0 0.0
    %2635 = vmatprep.subr.mxu0 0.0
    %2636 = vmatpush1.xpose.msra.mxu0 0.0
    %2637 = vmatprep.subr.mxu0 0.0
    %2638 = vmatpush1.xpose.msra.mxu0 0.0
    %2639 = vmatprep.subr.mxu0 0.0
    %2640 = vmatpush1.xpose.msra.mxu0 0.0
    %2641 = vmatprep.subr.mxu0 0.0
    %2642 = vmatpush1.xpose.msra.mxu0 0.0
    %2643 = vmatprep.subr.mxu0 0.0
    %2644 = vmatpush1.xpose.msra.mxu0 0.0
    %2645 = vmatprep.subr.mxu0 0.0
    %2646 = vmatpush1.xpose.msra.mxu0 0.0
    %2647 = vmatprep.subr.mxu0 0.0
    %2648 = vmatpush1.xpose.msra.mxu0 0.0
    %2649 = vmatprep.subr.mxu0 0.0
    %2650 = vmatpush1.xpose.msra.mxu0 0.0
    %2651 = vmatprep.mubr.f32.mxu0 0.0
    %2652 = vmatmul.mubr.f32.gmra.mrb[0].mxu0 %v2583
    %v2653 = vpop.f32.mrb[0].mxu0
    %v2654 = vadd.f32 0.0, %v2653
    %v2655 = vpop.f32.mrb[0].mxu0
    %2656 = vdwg.mxu0
    %v2657 = vsel %vm236, %v2122, -inf
    %2658 = vmax.xlane.f32.xlu0 %v2657
    %v2659 = vpop.xlane.xlu0 %2658
    %v2660 = vsel %vm236, %v2198, -inf
    %2661 = vmax.xlane.f32.xlu0 %v2660
    %v2662 = vpop.xlane.xlu0 %2661
    %v2663 = vsel %vm236, %v2274, -inf
    %2664 = vmax.xlane.f32.xlu0 %v2663
    %v2665 = vpop.xlane.xlu0 %2664
    %v2666 = vsel %vm236, %v2350, -inf
    %2667 = vmax.xlane.f32.xlu0 %v2666
    %v2668 = vpop.xlane.xlu0 %2667
    %v2669 = vsel %vm236, %v2426, -inf
    %2670 = vmax.xlane.f32.xlu0 %v2669
    %v2671 = vpop.xlane.xlu0 %2670
    %v2672 = vsel %vm236, %v2502, -inf
    %2673 = vmax.xlane.f32.xlu0 %v2672
    %v2674 = vpop.xlane.xlu0 %2673
    %v2675 = vsel %vm236, %v2578, -inf
    %2676 = vmax.xlane.f32.xlu0 %v2675
    %v2677 = vpop.xlane.xlu0 %2676
    %v2678 = vsel %vm236, %v2654, -inf
    %2679 = vmax.xlane.f32.xlu0 %v2678
    %v2680 = vpop.xlane.xlu0 %2679
    %v2681 = vsub.f32 %v2122, %v2659
    %v2682 = vsub.f32 %v2198, %v2662
    %v2683 = vsub.f32 %v2274, %v2665
    %v2684 = vsub.f32 %v2350, %v2668
    %v2685 = vsub.f32 %v2426, %v2671
    %v2686 = vsub.f32 %v2502, %v2674
    %v2687 = vsub.f32 %v2578, %v2677
    %v2688 = vsub.f32 %v2654, %v2680
    %v2689 = vmul.f32 %v2681, 1.442695
    %v2690 = vpow.pop %v2689
    %v2691 = vmul.f32 %v2682, 1.442695
    %v2692 = vpow.pop %v2691
    %v2693 = vmul.f32 %v2683, 1.442695
    %v2694 = vpow.pop %v2693
    %v2695 = vmul.f32 %v2684, 1.442695
    %v2696 = vpow.pop %v2695
    %v2697 = vmul.f32 %v2685, 1.442695
    %v2698 = vpow.pop %v2697
    %v2699 = vmul.f32 %v2686, 1.442695
    %v2700 = vpow.pop %v2699
    %v2701 = vmul.f32 %v2687, 1.442695
    %v2702 = vpow.pop %v2701
    %v2703 = vmul.f32 %v2688, 1.442695
    %v2704 = vpow.pop %v2703
    %v2705 = vsel %vm236, %v2690, 0.0
    %2706 = vadd.xlane.f32.xlu0 %v2705
    %v2707 = vpop.xlane.xlu0 %2706
    %v2708 = vsel %vm236, %v2692, 0.0
    %2709 = vadd.xlane.f32.xlu0 %v2708
    %v2710 = vpop.xlane.xlu0 %2709
    %v2711 = vsel %vm236, %v2694, 0.0
    %2712 = vadd.xlane.f32.xlu0 %v2711
    %v2713 = vpop.xlane.xlu0 %2712
    %v2714 = vsel %vm236, %v2696, 0.0
    %2715 = vadd.xlane.f32.xlu0 %v2714
    %v2716 = vpop.xlane.xlu0 %2715
    %v2717 = vsel %vm236, %v2698, 0.0
    %2718 = vadd.xlane.f32.xlu0 %v2717
    %v2719 = vpop.xlane.xlu0 %2718
    %v2720 = vsel %vm236, %v2700, 0.0
    %2721 = vadd.xlane.f32.xlu0 %v2720
    %v2722 = vpop.xlane.xlu0 %2721
    %v2723 = vsel %vm236, %v2702, 0.0
    %2724 = vadd.xlane.f32.xlu0 %v2723
    %v2725 = vpop.xlane.xlu0 %2724
    %v2726 = vsel %vm236, %v2704, 0.0
    %2727 = vadd.xlane.f32.xlu0 %v2726
    %v2728 = vpop.xlane.xlu0 %2727
    %v2729 = vrcp.pop %v2707
    %v2730 = vrcp.pop %v2710
    %v2731 = vrcp.pop %v2713
    %v2732 = vrcp.pop %v2716
    %v2733 = vrcp.pop %v2719
    %v2734 = vrcp.pop %v2722
    %v2735 = vrcp.pop %v2725
    %v2736 = vrcp.pop %v2728
    %v2737 = vmul.f32 %v2690, %v2729
    %v2738 = vmul.f32 %v2692, %v2730
    %v2739 = vmul.f32 %v2694, %v2731
    %v2740 = vmul.f32 %v2696, %v2732
    %v2741 = vmul.f32 %v2698, %v2733
    %v2742 = vmul.f32 %v2700, %v2734
    %v2743 = vmul.f32 %v2702, %v2735
    %v2744 = vmul.f32 %v2704, %v2736
    %2745 = vrot.lane.b32.xlu0 %v2027, 64
    %v2746 = vpop.permute.xlu0 %2745
    %v2749 = vsel %vm236, %v2737, 0
    %2751 = vmatprep.subr.mxu0 0.0
    %2752 = vmatpush1.msra.mxu0 %v2746
    %2753 = vmatprep.subr.mxu0 0.0
    %2754 = vmatpush1.msra.mxu0 0.0
    %2755 = vmatprep.subr.mxu0 0.0
    %2756 = vmatpush1.msra.mxu0 0.0
    %2757 = vmatprep.subr.mxu0 0.0
    %2758 = vmatpush1.msra.mxu0 0.0
    %2759 = vmatprep.subr.mxu0 0.0
    %2760 = vmatpush1.msra.mxu0 0.0
    %2761 = vmatprep.subr.mxu0 0.0
    %2762 = vmatpush1.msra.mxu0 0.0
    %2763 = vmatprep.subr.mxu0 0.0
    %2764 = vmatpush1.msra.mxu0 0.0
    %2765 = vmatprep.subr.mxu0 0.0
    %2766 = vmatpush1.msra.mxu0 0.0
    %2767 = vmatprep.subr.mxu0 0.0
    %2768 = vmatpush1.msra.mxu0 0.0
    %2769 = vmatprep.subr.mxu0 0.0
    %2770 = vmatpush1.msra.mxu0 0.0
    %2771 = vmatprep.subr.mxu0 0.0
    %2772 = vmatpush1.msra.mxu0 0.0
    %2773 = vmatprep.subr.mxu0 0.0
    %2774 = vmatpush1.msra.mxu0 0.0
    %2775 = vmatprep.subr.mxu0 0.0
    %2776 = vmatpush1.msra.mxu0 0.0
    %2777 = vmatprep.subr.mxu0 0.0
    %2778 = vmatpush1.msra.mxu0 0.0
    %2779 = vmatprep.subr.mxu0 0.0
    %2780 = vmatpush1.msra.mxu0 0.0
    %2781 = vmatprep.subr.mxu0 0.0
    %2782 = vmatpush1.msra.mxu0 0.0
    %2783 = vmatprep.subr.mxu0 0.0
    %2784 = vmatpush1.msra.mxu0 0.0
    %2785 = vmatprep.subr.mxu0 0.0
    %2786 = vmatpush1.msra.mxu0 0.0
    %2787 = vmatprep.subr.mxu0 0.0
    %2788 = vmatpush1.msra.mxu0 0.0
    %2789 = vmatprep.subr.mxu0 0.0
    %2790 = vmatpush1.msra.mxu0 0.0
    %2791 = vmatprep.subr.mxu0 0.0
    %2792 = vmatpush1.msra.mxu0 0.0
    %2793 = vmatprep.subr.mxu0 0.0
    %2794 = vmatpush1.msra.mxu0 0.0
    %2795 = vmatprep.subr.mxu0 0.0
    %2796 = vmatpush1.msra.mxu0 0.0
    %2797 = vmatprep.subr.mxu0 0.0
    %2798 = vmatpush1.msra.mxu0 0.0
    %2799 = vmatprep.subr.mxu0 0.0
    %2800 = vmatpush1.msra.mxu0 0.0
    %2801 = vmatprep.subr.mxu0 0.0
    %2802 = vmatpush1.msra.mxu0 0.0
    %2803 = vmatprep.subr.mxu0 0.0
    %2804 = vmatpush1.msra.mxu0 0.0
    %2805 = vmatprep.subr.mxu0 0.0
    %2806 = vmatpush1.msra.mxu0 0.0
    %2807 = vmatprep.subr.mxu0 0.0
    %2808 = vmatpush1.msra.mxu0 0.0
    %2809 = vmatprep.subr.mxu0 0.0
    %2810 = vmatpush1.msra.mxu0 0.0
    %2811 = vmatprep.subr.mxu0 0.0
    %2812 = vmatpush1.msra.mxu0 0.0
    %2813 = vmatprep.subr.mxu0 0.0
    %2814 = vmatpush1.msra.mxu0 0.0
    %2815 = vmatprep.mubr.f32.mxu0 0.0
    %2816 = vmatmul.mubr.f32.gmra.mrb[0].mxu0 %v2749
    %v2817 = vpop.f32.mrb[0].mxu0
    %v2818 = vadd.f32 0.0, %v2817
    %v2819 = vpop.f32.mrb[0].mxu0
    %2820 = vdwg.mxu0
    %2821 = vrot.lane.b32.xlu0 %v2032, 64
    %v2822 = vpop.permute.xlu0 %2821
    %v2825 = vsel %vm236, %v2738, 0
    %2827 = vmatprep.subr.mxu0 0.0
    %2828 = vmatpush1.msra.mxu0 %v2822
    %2829 = vmatprep.subr.mxu0 0.0
    %2830 = vmatpush1.msra.mxu0 0.0
    %2831 = vmatprep.subr.mxu0 0.0
    %2832 = vmatpush1.msra.mxu0 0.0
    %2833 = vmatprep.subr.mxu0 0.0
    %2834 = vmatpush1.msra.mxu0 0.0
    %2835 = vmatprep.subr.mxu0 0.0
    %2836 = vmatpush1.msra.mxu0 0.0
    %2837 = vmatprep.subr.mxu0 0.0
    %2838 = vmatpush1.msra.mxu0 0.0
    %2839 = vmatprep.subr.mxu0 0.0
    %2840 = vmatpush1.msra.mxu0 0.0
    %2841 = vmatprep.subr.mxu0 0.0
    %2842 = vmatpush1.msra.mxu0 0.0
    %2843 = vmatprep.subr.mxu0 0.0
    %2844 = vmatpush1.msra.mxu0 0.0
    %2845 = vmatprep.subr.mxu0 0.0
    %2846 = vmatpush1.msra.mxu0 0.0
    %2847 = vmatprep.subr.mxu0 0.0
    %2848 = vmatpush1.msra.mxu0 0.0
    %2849 = vmatprep.subr.mxu0 0.0
    %2850 = vmatpush1.msra.mxu0 0.0
    %2851 = vmatprep.subr.mxu0 0.0
    %2852 = vmatpush1.msra.mxu0 0.0
    %2853 = vmatprep.subr.mxu0 0.0
    %2854 = vmatpush1.msra.mxu0 0.0
    %2855 = vmatprep.subr.mxu0 0.0
    %2856 = vmatpush1.msra.mxu0 0.0
    %2857 = vmatprep.subr.mxu0 0.0
    %2858 = vmatpush1.msra.mxu0 0.0
    %2859 = vmatprep.subr.mxu0 0.0
    %2860 = vmatpush1.msra.mxu0 0.0
    %2861 = vmatprep.subr.mxu0 0.0
    %2862 = vmatpush1.msra.mxu0 0.0
    %2863 = vmatprep.subr.mxu0 0.0
    %2864 = vmatpush1.msra.mxu0 0.0
    %2865 = vmatprep.subr.mxu0 0.0
    %2866 = vmatpush1.msra.mxu0 0.0
    %2867 = vmatprep.subr.mxu0 0.0
    %2868 = vmatpush1.msra.mxu0 0.0
    %2869 = vmatprep.subr.mxu0 0.0
    %2870 = vmatpush1.msra.mxu0 0.0
    %2871 = vmatprep.subr.mxu0 0.0
    %2872 = vmatpush1.msra.mxu0 0.0
    %2873 = vmatprep.subr.mxu0 0.0
    %2874 = vmatpush1.msra.mxu0 0.0
    %2875 = vmatprep.subr.mxu0 0.0
    %2876 = vmatpush1.msra.mxu0 0.0
    %2877 = vmatprep.subr.mxu0 0.0
    %2878 = vmatpush1.msra.mxu0 0.0
    %2879 = vmatprep.subr.mxu0 0.0
    %2880 = vmatpush1.msra.mxu0 0.0
    %2881 = vmatprep.subr.mxu0 0.0
    %2882 = vmatpush1.msra.mxu0 0.0
    %2883 = vmatprep.subr.mxu0 0.0
    %2884 = vmatpush1.msra.mxu0 0.0
    %2885 = vmatprep.subr.mxu0 0.0
    %2886 = vmatpush1.msra.mxu0 0.0
    %2887 = vmatprep.subr.mxu0 0.0
    %2888 = vmatpush1.msra.mxu0 0.0
    %2889 = vmatprep.subr.mxu0 0.0
    %2890 = vmatpush1.msra.mxu0 0.0
    %2891 = vmatprep.mubr.f32.mxu0 0.0
    %2892 = vmatmul.mubr.f32.gmra.mrb[0].mxu0 %v2825
    %v2893 = vpop.f32.mrb[0].mxu0
    %v2894 = vadd.f32 0.0, %v2893
    %v2895 = vpop.f32.mrb[0].mxu0
    %2896 = vdwg.mxu0
    %2897 = vrot.lane.b32.xlu0 %v2038, 64
    %v2898 = vpop.permute.xlu0 %2897
    %v2901 = vsel %vm236, %v2739, 0
    %2903 = vmatprep.subr.mxu0 0.0
    %2904 = vmatpush1.msra.mxu0 %v2898
    %2905 = vmatprep.subr.mxu0 0.0
    %2906 = vmatpush1.msra.mxu0 0.0
    %2907 = vmatprep.subr.mxu0 0.0
    %2908 = vmatpush1.msra.mxu0 0.0
    %2909 = vmatprep.subr.mxu0 0.0
    %2910 = vmatpush1.msra.mxu0 0.0
    %2911 = vmatprep.subr.mxu0 0.0
    %2912 = vmatpush1.msra.mxu0 0.0
    %2913 = vmatprep.subr.mxu0 0.0
    %2914 = vmatpush1.msra.mxu0 0.0
    %2915 = vmatprep.subr.mxu0 0.0
    %2916 = vmatpush1.msra.mxu0 0.0
    %2917 = vmatprep.subr.mxu0 0.0
    %2918 = vmatpush1.msra.mxu0 0.0
    %2919 = vmatprep.subr.mxu0 0.0
    %2920 = vmatpush1.msra.mxu0 0.0
    %2921 = vmatprep.subr.mxu0 0.0
    %2922 = vmatpush1.msra.mxu0 0.0
    %2923 = vmatprep.subr.mxu0 0.0
    %2924 = vmatpush1.msra.mxu0 0.0
    %2925 = vmatprep.subr.mxu0 0.0
    %2926 = vmatpush1.msra.mxu0 0.0
    %2927 = vmatprep.subr.mxu0 0.0
    %2928 = vmatpush1.msra.mxu0 0.0
    %2929 = vmatprep.subr.mxu0 0.0
    %2930 = vmatpush1.msra.mxu0 0.0
    %2931 = vmatprep.subr.mxu0 0.0
    %2932 = vmatpush1.msra.mxu0 0.0
    %2933 = vmatprep.subr.mxu0 0.0
    %2934 = vmatpush1.msra.mxu0 0.0
    %2935 = vmatprep.subr.mxu0 0.0
    %2936 = vmatpush1.msra.mxu0 0.0
    %2937 = vmatprep.subr.mxu0 0.0
    %2938 = vmatpush1.msra.mxu0 0.0
    %2939 = vmatprep.subr.mxu0 0.0
    %2940 = vmatpush1.msra.mxu0 0.0
    %2941 = vmatprep.subr.mxu0 0.0
    %2942 = vmatpush1.msra.mxu0 0.0
    %2943 = vmatprep.subr.mxu0 0.0
    %2944 = vmatpush1.msra.mxu0 0.0
    %2945 = vmatprep.subr.mxu0 0.0
    %2946 = vmatpush1.msra.mxu0 0.0
    %2947 = vmatprep.subr.mxu0 0.0
    %2948 = vmatpush1.msra.mxu0 0.0
    %2949 = vmatprep.subr.mxu0 0.0
    %2950 = vmatpush1.msra.mxu0 0.0
    %2951 = vmatprep.subr.mxu0 0.0
    %2952 = vmatpush1.msra.mxu0 0.0
    %2953 = vmatprep.subr.mxu0 0.0
    %2954 = vmatpush1.msra.mxu0 0.0
    %2955 = vmatprep.subr.mxu0 0.0
    %2956 = vmatpush1.msra.mxu0 0.0
    %2957 = vmatprep.subr.mxu0 0.0
    %2958 = vmatpush1.msra.mxu0 0.0
    %2959 = vmatprep.subr.mxu0 0.0
    %2960 = vmatpush1.msra.mxu0 0.0
    %2961 = vmatprep.subr.mxu0 0.0
    %2962 = vmatpush1.msra.mxu0 0.0
    %2963 = vmatprep.subr.mxu0 0.0
    %2964 = vmatpush1.msra.mxu0 0.0
    %2965 = vmatprep.subr.mxu0 0.0
    %2966 = vmatpush1.msra.mxu0 0.0
    %2967 = vmatprep.mubr.f32.mxu0 0.0
    %2968 = vmatmul.mubr.f32.gmra.mrb[0].mxu0 %v2901
    %v2969 = vpop.f32.mrb[0].mxu0
    %v2970 = vadd.f32 0.0, %v2969
    %v2971 = vpop.f32.mrb[0].mxu0
    %2972 = vdwg.mxu0
    %2973 = vrot.lane.b32.xlu0 %v2040, 64
    %v2974 = vpop.permute.xlu0 %2973
    %v2977 = vsel %vm236, %v2740, 0
    %2979 = vmatprep.subr.mxu0 0.0
    %2980 = vmatpush1.msra.mxu0 %v2974
    %2981 = vmatprep.subr.mxu0 0.0
    %2982 = vmatpush1.msra.mxu0 0.0
    %2983 = vmatprep.subr.mxu0 0.0
    %2984 = vmatpush1.msra.mxu0 0.0
    %2985 = vmatprep.subr.mxu0 0.0
    %2986 = vmatpush1.msra.mxu0 0.0
    %2987 = vmatprep.subr.mxu0 0.0
    %2988 = vmatpush1.msra.mxu0 0.0
    %2989 = vmatprep.subr.mxu0 0.0
    %2990 = vmatpush1.msra.mxu0 0.0
    %2991 = vmatprep.subr.mxu0 0.0
    %2992 = vmatpush1.msra.mxu0 0.0
    %2993 = vmatprep.subr.mxu0 0.0
    %2994 = vmatpush1.msra.mxu0 0.0
    %2995 = vmatprep.subr.mxu0 0.0
    %2996 = vmatpush1.msra.mxu0 0.0
    %2997 = vmatprep.subr.mxu0 0.0
    %2998 = vmatpush1.msra.mxu0 0.0
    %2999 = vmatprep.subr.mxu0 0.0
    %3000 = vmatpush1.msra.mxu0 0.0
    %3001 = vmatprep.subr.mxu0 0.0
    %3002 = vmatpush1.msra.mxu0 0.0
    %3003 = vmatprep.subr.mxu0 0.0
    %3004 = vmatpush1.msra.mxu0 0.0
    %3005 = vmatprep.subr.mxu0 0.0
    %3006 = vmatpush1.msra.mxu0 0.0
    %3007 = vmatprep.subr.mxu0 0.0
    %3008 = vmatpush1.msra.mxu0 0.0
    %3009 = vmatprep.subr.mxu0 0.0
    %3010 = vmatpush1.msra.mxu0 0.0
    %3011 = vmatprep.subr.mxu0 0.0
    %3012 = vmatpush1.msra.mxu0 0.0
    %3013 = vmatprep.subr.mxu0 0.0
    %3014 = vmatpush1.msra.mxu0 0.0
    %3015 = vmatprep.subr.mxu0 0.0
    %3016 = vmatpush1.msra.mxu0 0.0
    %3017 = vmatprep.subr.mxu0 0.0
    %3018 = vmatpush1.msra.mxu0 0.0
    %3019 = vmatprep.subr.mxu0 0.0
    %3020 = vmatpush1.msra.mxu0 0.0
    %3021 = vmatprep.subr.mxu0 0.0
    %3022 = vmatpush1.msra.mxu0 0.0
    %3023 = vmatprep.subr.mxu0 0.0
    %3024 = vmatpush1.msra.mxu0 0.0
    %3025 = vmatprep.subr.mxu0 0.0
    %3026 = vmatpush1.msra.mxu0 0.0
    %3027 = vmatprep.subr.mxu0 0.0
    %3028 = vmatpush1.msra.mxu0 0.0
    %3029 = vmatprep.subr.mxu0 0.0
    %3030 = vmatpush1.msra.mxu0 0.0
    %3031 = vmatprep.subr.mxu0 0.0
    %3032 = vmatpush1.msra.mxu0 0.0
    %3033 = vmatprep.subr.mxu0 0.0
    %3034 = vmatpush1.msra.mxu0 0.0
    %3035 = vmatprep.subr.mxu0 0.0
    %3036 = vmatpush1.msra.mxu0 0.0
    %3037 = vmatprep.subr.mxu0 0.0
    %3038 = vmatpush1.msra.mxu0 0.0
    %3039 = vmatprep.subr.mxu0 0.0
    %3040 = vmatpush1.msra.mxu0 0.0
    %3041 = vmatprep.subr.mxu0 0.0
    %3042 = vmatpush1.msra.mxu0 0.0
    %3043 = vmatprep.mubr.f32.mxu0 0.0
    %3044 = vmatmul.mubr.f32.gmra.mrb[0].mxu0 %v2977
    %v3045 = vpop.f32.mrb[0].mxu0
    %v3046 = vadd.f32 0.0, %v3045
    %v3047 = vpop.f32.mrb[0].mxu0
    %3048 = vdwg.mxu0
    %3049 = vrot.lane.b32.xlu0 %v2042, 64
    %v3050 = vpop.permute.xlu0 %3049
    %v3053 = vsel %vm236, %v2741, 0
    %3055 = vmatprep.subr.mxu0 0.0
    %3056 = vmatpush1.msra.mxu0 %v3050
    %3057 = vmatprep.subr.mxu0 0.0
    %3058 = vmatpush1.msra.mxu0 0.0
    %3059 = vmatprep.subr.mxu0 0.0
    %3060 = vmatpush1.msra.mxu0 0.0
    %3061 = vmatprep.subr.mxu0 0.0
    %3062 = vmatpush1.msra.mxu0 0.0
    %3063 = vmatprep.subr.mxu0 0.0
    %3064 = vmatpush1.msra.mxu0 0.0
    %3065 = vmatprep.subr.mxu0 0.0
    %3066 = vmatpush1.msra.mxu0 0.0
    %3067 = vmatprep.subr.mxu0 0.0
    %3068 = vmatpush1.msra.mxu0 0.0
    %3069 = vmatprep.subr.mxu0 0.0
    %3070 = vmatpush1.msra.mxu0 0.0
    %3071 = vmatprep.subr.mxu0 0.0
    %3072 = vmatpush1.msra.mxu0 0.0
    %3073 = vmatprep.subr.mxu0 0.0
    %3074 = vmatpush1.msra.mxu0 0.0
    %3075 = vmatprep.subr.mxu0 0.0
    %3076 = vmatpush1.msra.mxu0 0.0
    %3077 = vmatprep.subr.mxu0 0.0
    %3078 = vmatpush1.msra.mxu0 0.0
    %3079 = vmatprep.subr.mxu0 0.0
    %3080 = vmatpush1.msra.mxu0 0.0
    %3081 = vmatprep.subr.mxu0 0.0
    %3082 = vmatpush1.msra.mxu0 0.0
    %3083 = vmatprep.subr.mxu0 0.0
    %3084 = vmatpush1.msra.mxu0 0.0
    %3085 = vmatprep.subr.mxu0 0.0
    %3086 = vmatpush1.msra.mxu0 0.0
    %3087 = vmatprep.subr.mxu0 0.0
    %3088 = vmatpush1.msra.mxu0 0.0
    %3089 = vmatprep.subr.mxu0 0.0
    %3090 = vmatpush1.msra.mxu0 0.0
    %3091 = vmatprep.subr.mxu0 0.0
    %3092 = vmatpush1.msra.mxu0 0.0
    %3093 = vmatprep.subr.mxu0 0.0
    %3094 = vmatpush1.msra.mxu0 0.0
    %3095 = vmatprep.subr.mxu0 0.0
    %3096 = vmatpush1.msra.mxu0 0.0
    %3097 = vmatprep.subr.mxu0 0.0
    %3098 = vmatpush1.msra.mxu0 0.0
    %3099 = vmatprep.subr.mxu0 0.0
    %3100 = vmatpush1.msra.mxu0 0.0
    %3101 = vmatprep.subr.mxu0 0.0
    %3102 = vmatpush1.msra.mxu0 0.0
    %3103 = vmatprep.subr.mxu0 0.0
    %3104 = vmatpush1.msra.mxu0 0.0
    %3105 = vmatprep.subr.mxu0 0.0
    %3106 = vmatpush1.msra.mxu0 0.0
    %3107 = vmatprep.subr.mxu0 0.0
    %3108 = vmatpush1.msra.mxu0 0.0
    %3109 = vmatprep.subr.mxu0 0.0
    %3110 = vmatpush1.msra.mxu0 0.0
    %3111 = vmatprep.subr.mxu0 0.0
    %3112 = vmatpush1.msra.mxu0 0.0
    %3113 = vmatprep.subr.mxu0 0.0
    %3114 = vmatpush1.msra.mxu0 0.0
    %3115 = vmatprep.subr.mxu0 0.0
    %3116 = vmatpush1.msra.mxu0 0.0
    %3117 = vmatprep.subr.mxu0 0.0
    %3118 = vmatpush1.msra.mxu0 0.0
    %3119 = vmatprep.mubr.f32.mxu0 0.0
    %3120 = vmatmul.mubr.f32.gmra.mrb[0].mxu0 %v3053
    %v3121 = vpop.f32.mrb[0].mxu0
    %v3122 = vadd.f32 0.0, %v3121
    %v3123 = vpop.f32.mrb[0].mxu0
    %3124 = vdwg.mxu0
    %3125 = vrot.lane.b32.xlu0 %v2044, 64
    %v3126 = vpop.permute.xlu0 %3125
    %v3129 = vsel %vm236, %v2742, 0
    %3131 = vmatprep.subr.mxu0 0.0
    %3132 = vmatpush1.msra.mxu0 %v3126
    %3133 = vmatprep.subr.mxu0 0.0
    %3134 = vmatpush1.msra.mxu0 0.0
    %3135 = vmatprep.subr.mxu0 0.0
    %3136 = vmatpush1.msra.mxu0 0.0
    %3137 = vmatprep.subr.mxu0 0.0
    %3138 = vmatpush1.msra.mxu0 0.0
    %3139 = vmatprep.subr.mxu0 0.0
    %3140 = vmatpush1.msra.mxu0 0.0
    %3141 = vmatprep.subr.mxu0 0.0
    %3142 = vmatpush1.msra.mxu0 0.0
    %3143 = vmatprep.subr.mxu0 0.0
    %3144 = vmatpush1.msra.mxu0 0.0
    %3145 = vmatprep.subr.mxu0 0.0
    %3146 = vmatpush1.msra.mxu0 0.0
    %3147 = vmatprep.subr.mxu0 0.0
    %3148 = vmatpush1.msra.mxu0 0.0
    %3149 = vmatprep.subr.mxu0 0.0
    %3150 = vmatpush1.msra.mxu0 0.0
    %3151 = vmatprep.subr.mxu0 0.0
    %3152 = vmatpush1.msra.mxu0 0.0
    %3153 = vmatprep.subr.mxu0 0.0
    %3154 = vmatpush1.msra.mxu0 0.0
    %3155 = vmatprep.subr.mxu0 0.0
    %3156 = vmatpush1.msra.mxu0 0.0
    %3157 = vmatprep.subr.mxu0 0.0
    %3158 = vmatpush1.msra.mxu0 0.0
    %3159 = vmatprep.subr.mxu0 0.0
    %3160 = vmatpush1.msra.mxu0 0.0
    %3161 = vmatprep.subr.mxu0 0.0
    %3162 = vmatpush1.msra.mxu0 0.0
    %3163 = vmatprep.subr.mxu0 0.0
    %3164 = vmatpush1.msra.mxu0 0.0
    %3165 = vmatprep.subr.mxu0 0.0
    %3166 = vmatpush1.msra.mxu0 0.0
    %3167 = vmatprep.subr.mxu0 0.0
    %3168 = vmatpush1.msra.mxu0 0.0
    %3169 = vmatprep.subr.mxu0 0.0
    %3170 = vmatpush1.msra.mxu0 0.0
    %3171 = vmatprep.subr.mxu0 0.0
    %3172 = vmatpush1.msra.mxu0 0.0
    %3173 = vmatprep.subr.mxu0 0.0
    %3174 = vmatpush1.msra.mxu0 0.0
    %3175 = vmatprep.subr.mxu0 0.0
    %3176 = vmatpush1.msra.mxu0 0.0
    %3177 = vmatprep.subr.mxu0 0.0
    %3178 = vmatpush1.msra.mxu0 0.0
    %3179 = vmatprep.subr.mxu0 0.0
    %3180 = vmatpush1.msra.mxu0 0.0
    %3181 = vmatprep.subr.mxu0 0.0
    %3182 = vmatpush1.msra.mxu0 0.0
    %3183 = vmatprep.subr.mxu0 0.0
    %3184 = vmatpush1.msra.mxu0 0.0
    %3185 = vmatprep.subr.mxu0 0.0
    %3186 = vmatpush1.msra.mxu0 0.0
    %3187 = vmatprep.subr.mxu0 0.0
    %3188 = vmatpush1.msra.mxu0 0.0
    %3189 = vmatprep.subr.mxu0 0.0
    %3190 = vmatpush1.msra.mxu0 0.0
    %3191 = vmatprep.subr.mxu0 0.0
    %3192 = vmatpush1.msra.mxu0 0.0
    %3193 = vmatprep.subr.mxu0 0.0
    %3194 = vmatpush1.msra.mxu0 0.0
    %3195 = vmatprep.mubr.f32.mxu0 0.0
    %3196 = vmatmul.mubr.f32.gmra.mrb[0].mxu0 %v3129
    %v3197 = vpop.f32.mrb[0].mxu0
    %v3198 = vadd.f32 0.0, %v3197
    %v3199 = vpop.f32.mrb[0].mxu0
    %3200 = vdwg.mxu0
    %3201 = vrot.lane.b32.xlu0 %v2046, 64
    %v3202 = vpop.permute.xlu0 %3201
    %v3205 = vsel %vm236, %v2743, 0
    %3207 = vmatprep.subr.mxu0 0.0
    %3208 = vmatpush1.msra.mxu0 %v3202
    %3209 = vmatprep.subr.mxu0 0.0
    %3210 = vmatpush1.msra.mxu0 0.0
    %3211 = vmatprep.subr.mxu0 0.0
    %3212 = vmatpush1.msra.mxu0 0.0
    %3213 = vmatprep.subr.mxu0 0.0
    %3214 = vmatpush1.msra.mxu0 0.0
    %3215 = vmatprep.subr.mxu0 0.0
    %3216 = vmatpush1.msra.mxu0 0.0
    %3217 = vmatprep.subr.mxu0 0.0
    %3218 = vmatpush1.msra.mxu0 0.0
    %3219 = vmatprep.subr.mxu0 0.0
    %3220 = vmatpush1.msra.mxu0 0.0
    %3221 = vmatprep.subr.mxu0 0.0
    %3222 = vmatpush1.msra.mxu0 0.0
    %3223 = vmatprep.subr.mxu0 0.0
    %3224 = vmatpush1.msra.mxu0 0.0
    %3225 = vmatprep.subr.mxu0 0.0
    %3226 = vmatpush1.msra.mxu0 0.0
    %3227 = vmatprep.subr.mxu0 0.0
    %3228 = vmatpush1.msra.mxu0 0.0
    %3229 = vmatprep.subr.mxu0 0.0
    %3230 = vmatpush1.msra.mxu0 0.0
    %3231 = vmatprep.subr.mxu0 0.0
    %3232 = vmatpush1.msra.mxu0 0.0
    %3233 = vmatprep.subr.mxu0 0.0
    %3234 = vmatpush1.msra.mxu0 0.0
    %3235 = vmatprep.subr.mxu0 0.0
    %3236 = vmatpush1.msra.mxu0 0.0
    %3237 = vmatprep.subr.mxu0 0.0
    %3238 = vmatpush1.msra.mxu0 0.0
    %3239 = vmatprep.subr.mxu0 0.0
    %3240 = vmatpush1.msra.mxu0 0.0
    %3241 = vmatprep.subr.mxu0 0.0
    %3242 = vmatpush1.msra.mxu0 0.0
    %3243 = vmatprep.subr.mxu0 0.0
    %3244 = vmatpush1.msra.mxu0 0.0
    %3245 = vmatprep.subr.mxu0 0.0
    %3246 = vmatpush1.msra.mxu0 0.0
    %3247 = vmatprep.subr.mxu0 0.0
    %3248 = vmatpush1.msra.mxu0 0.0
    %3249 = vmatprep.subr.mxu0 0.0
    %3250 = vmatpush1.msra.mxu0 0.0
    %3251 = vmatprep.subr.mxu0 0.0
    %3252 = vmatpush1.msra.mxu0 0.0
    %3253 = vmatprep.subr.mxu0 0.0
    %3254 = vmatpush1.msra.mxu0 0.0
    %3255 = vmatprep.subr.mxu0 0.0
    %3256 = vmatpush1.msra.mxu0 0.0
    %3257 = vmatprep.subr.mxu0 0.0
    %3258 = vmatpush1.msra.mxu0 0.0
    %3259 = vmatprep.subr.mxu0 0.0
    %3260 = vmatpush1.msra.mxu0 0.0
    %3261 = vmatprep.subr.mxu0 0.0
    %3262 = vmatpush1.msra.mxu0 0.0
    %3263 = vmatprep.subr.mxu0 0.0
    %3264 = vmatpush1.msra.mxu0 0.0
    %3265 = vmatprep.subr.mxu0 0.0
    %3266 = vmatpush1.msra.mxu0 0.0
    %3267 = vmatprep.subr.mxu0 0.0
    %3268 = vmatpush1.msra.mxu0 0.0
    %3269 = vmatprep.subr.mxu0 0.0
    %3270 = vmatpush1.msra.mxu0 0.0
    %3271 = vmatprep.mubr.f32.mxu0 0.0
    %3272 = vmatmul.mubr.f32.gmra.mrb[0].mxu0 %v3205
    %v3273 = vpop.f32.mrb[0].mxu0
    %v3274 = vadd.f32 0.0, %v3273
    %v3275 = vpop.f32.mrb[0].mxu0
    %3276 = vdwg.mxu0
    %3277 = vrot.lane.b32.xlu0 %v2048, 64
    %v3278 = vpop.permute.xlu0 %3277
    %v3281 = vsel %vm236, %v2744, 0
    %3283 = vmatprep.subr.mxu0 0.0
    %3284 = vmatpush1.msra.mxu0 %v3278
    %3285 = vmatprep.subr.mxu0 0.0
    %3286 = vmatpush1.msra.mxu0 0.0
    %3287 = vmatprep.subr.mxu0 0.0
    %3288 = vmatpush1.msra.mxu0 0.0
    %3289 = vmatprep.subr.mxu0 0.0
    %3290 = vmatpush1.msra.mxu0 0.0
    %3291 = vmatprep.subr.mxu0 0.0
    %3292 = vmatpush1.msra.mxu0 0.0
    %3293 = vmatprep.subr.mxu0 0.0
    %3294 = vmatpush1.msra.mxu0 0.0
    %3295 = vmatprep.subr.mxu0 0.0
    %3296 = vmatpush1.msra.mxu0 0.0
    %3297 = vmatprep.subr.mxu0 0.0
    %3298 = vmatpush1.msra.mxu0 0.0
    %3299 = vmatprep.subr.mxu0 0.0
    %3300 = vmatpush1.msra.mxu0 0.0
    %3301 = vmatprep.subr.mxu0 0.0
    %3302 = vmatpush1.msra.mxu0 0.0
    %3303 = vmatprep.subr.mxu0 0.0
    %3304 = vmatpush1.msra.mxu0 0.0
    %3305 = vmatprep.subr.mxu0 0.0
    %3306 = vmatpush1.msra.mxu0 0.0
    %3307 = vmatprep.subr.mxu0 0.0
    %3308 = vmatpush1.msra.mxu0 0.0
    %3309 = vmatprep.subr.mxu0 0.0
    %3310 = vmatpush1.msra.mxu0 0.0
    %3311 = vmatprep.subr.mxu0 0.0
    %3312 = vmatpush1.msra.mxu0 0.0
    %3313 = vmatprep.subr.mxu0 0.0
    %3314 = vmatpush1.msra.mxu0 0.0
    %3315 = vmatprep.subr.mxu0 0.0
    %3316 = vmatpush1.msra.mxu0 0.0
    %3317 = vmatprep.subr.mxu0 0.0
    %3318 = vmatpush1.msra.mxu0 0.0
    %3319 = vmatprep.subr.mxu0 0.0
    %3320 = vmatpush1.msra.mxu0 0.0
    %3321 = vmatprep.subr.mxu0 0.0
    %3322 = vmatpush1.msra.mxu0 0.0
    %3323 = vmatprep.subr.mxu0 0.0
    %3324 = vmatpush1.msra.mxu0 0.0
    %3325 = vmatprep.subr.mxu0 0.0
    %3326 = vmatpush1.msra.mxu0 0.0
    %3327 = vmatprep.subr.mxu0 0.0
    %3328 = vmatpush1.msra.mxu0 0.0
    %3329 = vmatprep.subr.mxu0 0.0
    %3330 = vmatpush1.msra.mxu0 0.0
    %3331 = vmatprep.subr.mxu0 0.0
    %3332 = vmatpush1.msra.mxu0 0.0
    %3333 = vmatprep.subr.mxu0 0.0
    %3334 = vmatpush1.msra.mxu0 0.0
    %3335 = vmatprep.subr.mxu0 0.0
    %3336 = vmatpush1.msra.mxu0 0.0
    %3337 = vmatprep.subr.mxu0 0.0
    %3338 = vmatpush1.msra.mxu0 0.0
    %3339 = vmatprep.subr.mxu0 0.0
    %3340 = vmatpush1.msra.mxu0 0.0
    %3341 = vmatprep.subr.mxu0 0.0
    %3342 = vmatpush1.msra.mxu0 0.0
    %3343 = vmatprep.subr.mxu0 0.0
    %3344 = vmatpush1.msra.mxu0 0.0
    %3345 = vmatprep.subr.mxu0 0.0
    %3346 = vmatpush1.msra.mxu0 0.0
    %3347 = vmatprep.mubr.f32.mxu0 0.0
    %3348 = vmatmul.mubr.f32.gmra.mrb[0].mxu0 %v3281
    %v3349 = vpop.f32.mrb[0].mxu0
    %v3350 = vadd.f32 0.0, %v3349
    %v3351 = vpop.f32.mrb[0].mxu0
    %3352 = vdwg.mxu0
    %3355 = vrot.lane.b32.xlu0 %v2970, 8
    %v3356 = vpop.permute.xlu0 %3355
    %3357 = vrot.lane.b32.xlu0 %v3046, 8
    %v3358 = vpop.permute.xlu0 %3357
    %3363 = vrot.lane.b32.xlu0 %v3122, 16
    %v3364 = vpop.permute.xlu0 %3363
    %3365 = vrot.lane.b32.xlu0 %v3198, 16
    %v3366 = vpop.permute.xlu0 %3365
    %3371 = vrot.lane.b32.xlu0 %v3274, 24
    %v3372 = vpop.permute.xlu0 %3371
    %3373 = vrot.lane.b32.xlu0 %v3350, 24
    %v3374 = vpop.permute.xlu0 %3373
    %v3377 = vsel %vm236, %v2818, %v3356
    %v3378 = vsel %vm236, %v2894, %v3358
    %v3379 = vsel %vm45, %v3377, %v3364
    %v3380 = vsel %vm45, %v3378, %v3366
    %v3381 = vsel %vm1567, %v3379, %v3372
    %v3382 = vsel %vm1567, %v3380, %v3374
    %s3383 = scalar_lea.vmem %s5, 32
    %v3384 = vld [vmem:[%s3383] sm:$0xff]
    %v3385 = vld [vmem:[%s3383 + $0x8] sm:$0xff]
    %v3386 = vld [vmem:[%s3383 + $0x10] sm:$0xff]
    %v3387 = vld [vmem:[%s3383 + $0x18] sm:$0xff]
    %s3388 = scalar_lea.vmem %s6, 8
    %v3389 = vld [vmem:[%s3388] sm:$0x1]
    %v3390 = vlaneseq
    %v3391 = vshrl.u32 %v3390, 7
    %v3392 = vsub.s32 0, %v3391
    %v3393 = vrot.slane %v3389, %v3392
    %v3395 = vsel %vm138, %v3381, 0
    %v3398 = vsel %vm138, %v3382, 0
    %3400 = vmatprep.subr.mxu0 0.0
    %3401 = vmatpush1.msra.mxu0 %v3384
    %3402 = vmatprep.subr.mxu0 0.0
    %3403 = vmatpush1.msra.mxu0 %v3385
    %3404 = vmatprep.subr.mxu0 0.0
    %3405 = vmatpush1.msra.mxu0 %v3386
    %3406 = vmatprep.subr.mxu0 0.0
    %3407 = vmatpush1.msra.mxu0 %v3387
    %3408 = vmatprep.subr.mxu0 0.0
    %3409 = vmatpush1.msra.mxu0 0.0
    %3410 = vmatprep.subr.mxu0 0.0
    %3411 = vmatpush1.msra.mxu0 0.0
    %3412 = vmatprep.subr.mxu0 0.0
    %3413 = vmatpush1.msra.mxu0 0.0
    %3414 = vmatprep.subr.mxu0 0.0
    %3415 = vmatpush1.msra.mxu0 0.0
    %3416 = vmatprep.subr.mxu0 0.0
    %3417 = vmatpush1.msra.mxu0 0.0
    %3418 = vmatprep.subr.mxu0 0.0
    %3419 = vmatpush1.msra.mxu0 0.0
    %3420 = vmatprep.subr.mxu0 0.0
    %3421 = vmatpush1.msra.mxu0 0.0
    %3422 = vmatprep.subr.mxu0 0.0
    %3423 = vmatpush1.msra.mxu0 0.0
    %3424 = vmatprep.subr.mxu0 0.0
    %3425 = vmatpush1.msra.mxu0 0.0
    %3426 = vmatprep.subr.mxu0 0.0
    %3427 = vmatpush1.msra.mxu0 0.0
    %3428 = vmatprep.subr.mxu0 0.0
    %3429 = vmatpush1.msra.mxu0 0.0
    %3430 = vmatprep.subr.mxu0 0.0
    %3431 = vmatpush1.msra.mxu0 0.0
    %3432 = vmatprep.subr.mxu0 0.0
    %3433 = vmatpush1.msra.mxu0 0.0
    %3434 = vmatprep.subr.mxu0 0.0
    %3435 = vmatpush1.msra.mxu0 0.0
    %3436 = vmatprep.subr.mxu0 0.0
    %3437 = vmatpush1.msra.mxu0 0.0
    %3438 = vmatprep.subr.mxu0 0.0
    %3439 = vmatpush1.msra.mxu0 0.0
    %3440 = vmatprep.subr.mxu0 0.0
    %3441 = vmatpush1.msra.mxu0 0.0
    %3442 = vmatprep.subr.mxu0 0.0
    %3443 = vmatpush1.msra.mxu0 0.0
    %3444 = vmatprep.subr.mxu0 0.0
    %3445 = vmatpush1.msra.mxu0 0.0
    %3446 = vmatprep.subr.mxu0 0.0
    %3447 = vmatpush1.msra.mxu0 0.0
    %3448 = vmatprep.subr.mxu0 0.0
    %3449 = vmatpush1.msra.mxu0 0.0
    %3450 = vmatprep.subr.mxu0 0.0
    %3451 = vmatpush1.msra.mxu0 0.0
    %3452 = vmatprep.subr.mxu0 0.0
    %3453 = vmatpush1.msra.mxu0 0.0
    %3454 = vmatprep.subr.mxu0 0.0
    %3455 = vmatpush1.msra.mxu0 0.0
    %3456 = vmatprep.subr.mxu0 0.0
    %3457 = vmatpush1.msra.mxu0 0.0
    %3458 = vmatprep.subr.mxu0 0.0
    %3459 = vmatpush1.msra.mxu0 0.0
    %3460 = vmatprep.subr.mxu0 0.0
    %3461 = vmatpush1.msra.mxu0 0.0
    %3462 = vmatprep.subr.mxu0 0.0
    %3463 = vmatpush1.msra.mxu0 0.0
    %3464 = vmatprep.mubr.f32.mxu0 0.0
    %3465 = vmatmul.mubr.f32.gmra.mrb[0].mxu0 %v3395
    %v3466 = vpop.f32.mrb[0].mxu0
    %v3467 = vadd.f32 %v3393, %v3466
    %v3468 = vpop.f32.mrb[0].mxu0
    %3469 = vmatprep.mubr.f32.mxu0 0.0
    %3470 = vmatmul.mubr.f32.gmra.mrb[0].mxu0 %v3398
    %v3471 = vpop.f32.mrb[0].mxu0
    %v3472 = vadd.f32 %v3393, %v3471
    %v3473 = vpop.f32.mrb[0].mxu0
    %3474 = vdwg.mxu0
    %v3475 = vadd.f32 %v1939, %v3467
    %v3476 = vadd.f32 %v1940, %v3472
    %v3477 = vld [vmem:[%s3388 + $0x1] sm:$0x1]
    %v3478 = vld [vmem:[%s3388 + $0x2] sm:$0x1]
    %v3479 = vsel %vm138, %v3475, 0.0
    %3480 = vadd.xlane.f32.xlu0 %v3479
    %v3481 = vpop.xlane.xlu0 %3480
    %v3482 = vsel %vm138, %v3476, 0.0
    %3483 = vadd.xlane.f32.xlu0 %v3482
    %v3484 = vpop.xlane.xlu0 %3483
    %v3485 = vmul.f32 %v3481, %v1670
    %v3486 = vmul.f32 %v3484, %v1670
    %v3487 = vmul.f32 %v3475, %v3475
    %v3488 = vmul.f32 %v3476, %v3476
    %v3489 = vsel %vm138, %v3487, 0.0
    %3490 = vadd.xlane.f32.xlu0 %v3489
    %v3491 = vpop.xlane.xlu0 %3490
    %v3492 = vsel %vm138, %v3488, 0.0
    %3493 = vadd.xlane.f32.xlu0 %v3492
    %v3494 = vpop.xlane.xlu0 %3493
    %v3495 = vmul.f32 %v3491, %v1670
    %v3496 = vmul.f32 %v3494, %v1670
    %v3497 = vmul.f32 %v3485, %v3485
    %v3498 = vmul.f32 %v3486, %v3486
    %v3499 = vsub.f32 %v3495, %v3497
    %v3500 = vsub.f32 %v3496, %v3498
    %v3501 = vsub.f32 %v3475, %v3485
    %v3502 = vsub.f32 %v3476, %v3486
    %v3503 = vadd.f32 %v3499, 1e-05
    %v3504 = vadd.f32 %v3500, 1e-05
    %v3505 = vrsqrt.pop %v3503
    %v3506 = vrsqrt.pop %v3504
    %v3507 = vmul.f32 %v3501, %v3505
    %v3508 = vmul.f32 %v3502, %v3506
    %v3509 = vlaneseq
    %v3510 = vshrl.u32 %v3509, 7
    %v3511 = vsub.s32 0, %v3510
    %v3512 = vrot.slane %v3477, %v3511
    %v3513 = vmul.f32 %v3507, %v3512
    %v3514 = vmul.f32 %v3508, %v3512
    %v3515 = vlaneseq
    %v3516 = vshrl.u32 %v3515, 7
    %v3517 = vsub.s32 0, %v3516
    %v3518 = vrot.slane %v3478, %v3517
    %v3519 = vadd.f32 %v3513, %v3518
    %v3520 = vadd.f32 %v3514, %v3518
    %s3521 = scalar_lea.vmem %s7, 32
    %v3522 = vld [vmem:[%s3521] sm:$0xff]
    %v3523 = vld [vmem:[%s3521 + $0x8] sm:$0xff]
    %v3524 = vld [vmem:[%s3521 + $0x10] sm:$0xff]
    %v3525 = vld [vmem:[%s3521 + $0x18] sm:$0xff]
    %v3526 = vld [vmem:[%s8 + $0x1] sm:$0x1]
    %v3527 = vlaneseq
    %v3528 = vshrl.u32 %v3527, 7
    %v3529 = vsub.s32 0, %v3528
    %v3530 = vrot.slane %v3526, %v3529
    %v3532 = vsel %vm138, %v3519, 0
    %v3535 = vsel %vm138, %v3520, 0
    %3537 = vmatprep.subr.mxu0 0.0
    %3538 = vmatpush1.msra.mxu0 %v3522
    %3539 = vmatprep.subr.mxu0 0.0
    %3540 = vmatpush1.msra.mxu0 %v3523
    %3541 = vmatprep.subr.mxu0 0.0
    %3542 = vmatpush1.msra.mxu0 %v3524
    %3543 = vmatprep.subr.mxu0 0.0
    %3544 = vmatpush1.msra.mxu0 %v3525
    %3545 = vmatprep.subr.mxu0 0.0
    %3546 = vmatpush1.msra.mxu0 0.0
    %3547 = vmatprep.subr.mxu0 0.0
    %3548 = vmatpush1.msra.mxu0 0.0
    %3549 = vmatprep.subr.mxu0 0.0
    %3550 = vmatpush1.msra.mxu0 0.0
    %3551 = vmatprep.subr.mxu0 0.0
    %3552 = vmatpush1.msra.mxu0 0.0
    %3553 = vmatprep.subr.mxu0 0.0
    %3554 = vmatpush1.msra.mxu0 0.0
    %3555 = vmatprep.subr.mxu0 0.0
    %3556 = vmatpush1.msra.mxu0 0.0
    %3557 = vmatprep.subr.mxu0 0.0
    %3558 = vmatpush1.msra.mxu0 0.0
    %3559 = vmatprep.subr.mxu0 0.0
    %3560 = vmatpush1.msra.mxu0 0.0
    %3561 = vmatprep.subr.mxu0 0.0
    %3562 = vmatpush1.msra.mxu0 0.0
    %3563 = vmatprep.subr.mxu0 0.0
    %3564 = vmatpush1.msra.mxu0 0.0
    %3565 = vmatprep.subr.mxu0 0.0
    %3566 = vmatpush1.msra.mxu0 0.0
    %3567 = vmatprep.subr.mxu0 0.0
    %3568 = vmatpush1.msra.mxu0 0.0
    %3569 = vmatprep.subr.mxu0 0.0
    %3570 = vmatpush1.msra.mxu0 0.0
    %3571 = vmatprep.subr.mxu0 0.0
    %3572 = vmatpush1.msra.mxu0 0.0
    %3573 = vmatprep.subr.mxu0 0.0
    %3574 = vmatpush1.msra.mxu0 0.0
    %3575 = vmatprep.subr.mxu0 0.0
    %3576 = vmatpush1.msra.mxu0 0.0
    %3577 = vmatprep.subr.mxu0 0.0
    %3578 = vmatpush1.msra.mxu0 0.0
    %3579 = vmatprep.subr.mxu0 0.0
    %3580 = vmatpush1.msra.mxu0 0.0
    %3581 = vmatprep.subr.mxu0 0.0
    %3582 = vmatpush1.msra.mxu0 0.0
    %3583 = vmatprep.subr.mxu0 0.0
    %3584 = vmatpush1.msra.mxu0 0.0
    %3585 = vmatprep.subr.mxu0 0.0
    %3586 = vmatpush1.msra.mxu0 0.0
    %3587 = vmatprep.subr.mxu0 0.0
    %3588 = vmatpush1.msra.mxu0 0.0
    %3589 = vmatprep.subr.mxu0 0.0
    %3590 = vmatpush1.msra.mxu0 0.0
    %3591 = vmatprep.subr.mxu0 0.0
    %3592 = vmatpush1.msra.mxu0 0.0
    %3593 = vmatprep.subr.mxu0 0.0
    %3594 = vmatpush1.msra.mxu0 0.0
    %3595 = vmatprep.subr.mxu0 0.0
    %3596 = vmatpush1.msra.mxu0 0.0
    %3597 = vmatprep.subr.mxu0 0.0
    %3598 = vmatpush1.msra.mxu0 0.0
    %3599 = vmatprep.subr.mxu0 0.0
    %3600 = vmatpush1.msra.mxu0 0.0
    %3601 = vmatprep.mubr.f32.mxu0 0.0
    %3602 = vmatmul.mubr.f32.gmra.mrb[0].mxu0 %v3532
    %v3603 = vpop.f32.mrb[0].mxu0
    %v3604 = vadd.f32 %v3530, %v3603
    %v3605 = vpop.f32.mrb[0].mxu0
    %3606 = vmatprep.mubr.f32.mxu0 0.0
    %3607 = vmatmul.mubr.f32.gmra.mrb[0].mxu0 %v3535
    %v3608 = vpop.f32.mrb[0].mxu0
    %v3609 = vadd.f32 %v3530, %v3608
    %v3610 = vpop.f32.mrb[0].mxu0
    %3611 = vdwg.mxu0
    %v3612 = vmax.f32 %v3604, 0.0
    %v3613 = vmax.f32 %v3609, 0.0
    %s3614 = scalar_lea.vmem %s9, 128
    %v3615 = vld [vmem:[%s3614] sm:$0xff]
    %v3616 = vld [vmem:[%s3614 + $0x8] sm:$0xff]
    %v3617 = vld [vmem:[%s3614 + $0x10] sm:$0xff]
    %v3618 = vld [vmem:[%s3614 + $0x18] sm:$0xff]
    %v3619 = vld [vmem:[%s3614 + $0x20] sm:$0xff]
    %v3620 = vld [vmem:[%s3614 + $0x28] sm:$0xff]
    %v3621 = vld [vmem:[%s3614 + $0x30] sm:$0xff]
    %v3622 = vld [vmem:[%s3614 + $0x38] sm:$0xff]
    %v3623 = vld [vmem:[%s3614 + $0x40] sm:$0xff]
    %v3624 = vld [vmem:[%s3614 + $0x48] sm:$0xff]
    %v3625 = vld [vmem:[%s3614 + $0x50] sm:$0xff]
    %v3626 = vld [vmem:[%s3614 + $0x58] sm:$0xff]
    %v3627 = vld [vmem:[%s3614 + $0x60] sm:$0xff]
    %v3628 = vld [vmem:[%s3614 + $0x68] sm:$0xff]
    %v3629 = vld [vmem:[%s3614 + $0x70] sm:$0xff]
    %v3630 = vld [vmem:[%s3614 + $0x78] sm:$0xff]
    %v3631 = vld [vmem:[%s3388 + $0x5] sm:$0x1]
    %v3632 = vlaneseq
    %v3633 = vshrl.u32 %v3632, 7
    %v3634 = vsub.s32 0, %v3633
    %v3635 = vrot.slane %v3631, %v3634
    %3636 = vmatprep.subr.mxu0 0.0
    %3637 = vmatpush1.msra.mxu0 %v3615
    %3638 = vmatprep.subr.mxu0 0.0
    %3639 = vmatpush1.msra.mxu0 %v3616
    %3640 = vmatprep.subr.mxu0 0.0
    %3641 = vmatpush1.msra.mxu0 %v3617
    %3642 = vmatprep.subr.mxu0 0.0
    %3643 = vmatpush1.msra.mxu0 %v3618
    %3644 = vmatprep.subr.mxu0 0.0
    %3645 = vmatpush1.msra.mxu0 %v3619
    %3646 = vmatprep.subr.mxu0 0.0
    %3647 = vmatpush1.msra.mxu0 %v3620
    %3648 = vmatprep.subr.mxu0 0.0
    %3649 = vmatpush1.msra.mxu0 %v3621
    %3650 = vmatprep.subr.mxu0 0.0
    %3651 = vmatpush1.msra.mxu0 %v3622
    %3652 = vmatprep.subr.mxu0 0.0
    %3653 = vmatpush1.msra.mxu0 %v3623
    %3654 = vmatprep.subr.mxu0 0.0
    %3655 = vmatpush1.msra.mxu0 %v3624
    %3656 = vmatprep.subr.mxu0 0.0
    %3657 = vmatpush1.msra.mxu0 %v3625
    %3658 = vmatprep.subr.mxu0 0.0
    %3659 = vmatpush1.msra.mxu0 %v3626
    %3660 = vmatprep.subr.mxu0 0.0
    %3661 = vmatpush1.msra.mxu0 %v3627
    %3662 = vmatprep.subr.mxu0 0.0
    %3663 = vmatpush1.msra.mxu0 %v3628
    %3664 = vmatprep.subr.mxu0 0.0
    %3665 = vmatpush1.msra.mxu0 %v3629
    %3666 = vmatprep.subr.mxu0 0.0
    %3667 = vmatpush1.msra.mxu0 %v3630
    %3668 = vmatprep.subr.mxu0 0.0
    %3669 = vmatpush1.msra.mxu0 0.0
    %3670 = vmatprep.subr.mxu0 0.0
    %3671 = vmatpush1.msra.mxu0 0.0
    %3672 = vmatprep.subr.mxu0 0.0
    %3673 = vmatpush1.msra.mxu0 0.0
    %3674 = vmatprep.subr.mxu0 0.0
    %3675 = vmatpush1.msra.mxu0 0.0
    %3676 = vmatprep.subr.mxu0 0.0
    %3677 = vmatpush1.msra.mxu0 0.0
    %3678 = vmatprep.subr.mxu0 0.0
    %3679 = vmatpush1.msra.mxu0 0.0
    %3680 = vmatprep.subr.mxu0 0.0
    %3681 = vmatpush1.msra.mxu0 0.0
    %3682 = vmatprep.subr.mxu0 0.0
    %3683 = vmatpush1.msra.mxu0 0.0
    %3684 = vmatprep.subr.mxu0 0.0
    %3685 = vmatpush1.msra.mxu0 0.0
    %3686 = vmatprep.subr.mxu0 0.0
    %3687 = vmatpush1.msra.mxu0 0.0
    %3688 = vmatprep.subr.mxu0 0.0
    %3689 = vmatpush1.msra.mxu0 0.0
    %3690 = vmatprep.subr.mxu0 0.0
    %3691 = vmatpush1.msra.mxu0 0.0
    %3692 = vmatprep.subr.mxu0 0.0
    %3693 = vmatpush1.msra.mxu0 0.0
    %3694 = vmatprep.subr.mxu0 0.0
    %3695 = vmatpush1.msra.mxu0 0.0
    %3696 = vmatprep.subr.mxu0 0.0
    %3697 = vmatpush1.msra.mxu0 0.0
    %3698 = vmatprep.subr.mxu0 0.0
    %3699 = vmatpush1.msra.mxu0 0.0
    %3700 = vmatprep.mubr.f32.mxu0 0.0
    %3701 = vmatmul.mubr.f32.gmra.mrb[0].mxu0 %v3612
    %v3702 = vpop.f32.mrb[0].mxu0
    %v3703 = vadd.f32 %v3635, %v3702
    %v3704 = vpop.f32.mrb[0].mxu0
    %3705 = vmatprep.mubr.f32.mxu0 0.0
    %3706 = vmatmul.mubr.f32.gmra.mrb[0].mxu0 %v3613
    %v3707 = vpop.f32.mrb[0].mxu0
    %v3708 = vadd.f32 %v3635, %v3707
    %v3709 = vpop.f32.mrb[0].mxu0
    %3710 = vdwg.mxu0
    %v3711 = vadd.f32 %v3519, %v3703
    %v3712 = vadd.f32 %v3520, %v3708
    %v3713 = vld [vmem:[%s3388 + $0x3] sm:$0x1]
    %v3714 = vld [vmem:[%s3388 + $0x4] sm:$0x1]
    %v3715 = vsel %vm138, %v3711, 0.0
    %3716 = vadd.xlane.f32.xlu0 %v3715
    %v3717 = vpop.xlane.xlu0 %3716
    %v3718 = vsel %vm138, %v3712, 0.0
    %3719 = vadd.xlane.f32.xlu0 %v3718
    %v3720 = vpop.xlane.xlu0 %3719
    %v3721 = vmul.f32 %v3717, %v1670
    %v3722 = vmul.f32 %v3720, %v1670
    %v3723 = vmul.f32 %v3711, %v3711
    %v3724 = vmul.f32 %v3712, %v3712
    %v3725 = vsel %vm138, %v3723, 0.0
    %3726 = vadd.xlane.f32.xlu0 %v3725
    %v3727 = vpop.xlane.xlu0 %3726
    %v3728 = vsel %vm138, %v3724, 0.0
    %3729 = vadd.xlane.f32.xlu0 %v3728
    %v3730 = vpop.xlane.xlu0 %3729
    %v3731 = vmul.f32 %v3727, %v1670
    %v3732 = vmul.f32 %v3730, %v1670
    %v3733 = vmul.f32 %v3721, %v3721
    %v3734 = vmul.f32 %v3722, %v3722
    %v3735 = vsub.f32 %v3731, %v3733
    %v3736 = vsub.f32 %v3732, %v3734
    %v3737 = vsub.f32 %v3711, %v3721
    %v3738 = vsub.f32 %v3712, %v3722
    %v3739 = vadd.f32 %v3735, 1e-05
    %v3740 = vadd.f32 %v3736, 1e-05
    %v3741 = vrsqrt.pop %v3739
    %v3742 = vrsqrt.pop %v3740
    %v3743 = vmul.f32 %v3737, %v3741
    %v3744 = vmul.f32 %v3738, %v3742
    %v3745 = vlaneseq
    %v3746 = vshrl.u32 %v3745, 7
    %v3747 = vsub.s32 0, %v3746
    %v3748 = vrot.slane %v3713, %v3747
    %v3749 = vmul.f32 %v3743, %v3748
    %v3750 = vmul.f32 %v3744, %v3748
    %v3751 = vlaneseq
    %v3752 = vshrl.u32 %v3751, 7
    %v3753 = vsub.s32 0, %v3752
    %v3754 = vrot.slane %v3714, %v3753
    %v3755 = vadd.f32 %v3749, %v3754
    %v3756 = vadd.f32 %v3750, %v3754
    %v3757 = vsel %vm138, %v3755, 0.0
    %v3758 = vrot.slane %v3757, 4
    %v3759 = vadd.f32 %v3757, %v3758
    %v3760 = vrot.slane %v3759, 2
    %v3761 = vadd.f32 %v3759, %v3760
    %v3762 = vrot.slane %v3761, 1
    %v3763 = vadd.f32 %v3761, %v3762
    %v3764 = vsel %vm138, %v3756, 0.0
    %v3765 = vrot.slane %v3764, 4
    %v3766 = vadd.f32 %v3764, %v3765
    %v3767 = vrot.slane %v3766, 2
    %v3768 = vadd.f32 %v3766, %v3767
    %v3769 = vrot.slane %v3768, 1
    %v3770 = vadd.f32 %v3768, %v3769
    %vm3773 = vcmask 1041409
    %v3774 = vsel %vm3773, %v3770, %v3763
    %vm3776 = vcmask 1041408
    %v3777 = vsel %vm3776, %v3774, 0.0
    %v3778 = vld [vmem:[%s10] sm:$0xff]
    %v3779 = vld [vmem:[%s10 + $0x8] sm:$0xff]
    %v3780 = vld [vmem:[%s10 + $0x10] sm:$0xff]
    %v3781 = vld [vmem:[%s10 + $0x18] sm:$0xff]
    %v3782 = vld [vmem:[%s10 + $0x20] sm:$0x1]
    %v3783 = vlaneseq
    %v3784 = vshrl.u32 %v3783, 7
    %v3785 = vsub.s32 0, %v3784
    %v3786 = vrot.slane %v3782, %v3785
    %v3788 = vsel %vm138, %v3777, 0
    %3790 = vmatprep.subr.mxu0 0.0
    %3791 = vmatpush1.msra.mxu0 %v3778
    %3792 = vmatprep.subr.mxu0 0.0
    %3793 = vmatpush1.msra.mxu0 %v3779
    %3794 = vmatprep.subr.mxu0 0.0
    %3795 = vmatpush1.msra.mxu0 %v3780
    %3796 = vmatprep.subr.mxu0 0.0
    %3797 = vmatpush1.msra.mxu0 %v3781
    %3798 = vmatprep.subr.mxu0 0.0
    %3799 = vmatpush1.msra.mxu0 0.0
    %3800 = vmatprep.subr.mxu0 0.0
    %3801 = vmatpush1.msra.mxu0 0.0
    %3802 = vmatprep.subr.mxu0 0.0
    %3803 = vmatpush1.msra.mxu0 0.0
    %3804 = vmatprep.subr.mxu0 0.0
    %3805 = vmatpush1.msra.mxu0 0.0
    %3806 = vmatprep.subr.mxu0 0.0
    %3807 = vmatpush1.msra.mxu0 0.0
    %3808 = vmatprep.subr.mxu0 0.0
    %3809 = vmatpush1.msra.mxu0 0.0
    %3810 = vmatprep.subr.mxu0 0.0
    %3811 = vmatpush1.msra.mxu0 0.0
    %3812 = vmatprep.subr.mxu0 0.0
    %3813 = vmatpush1.msra.mxu0 0.0
    %3814 = vmatprep.subr.mxu0 0.0
    %3815 = vmatpush1.msra.mxu0 0.0
    %3816 = vmatprep.subr.mxu0 0.0
    %3817 = vmatpush1.msra.mxu0 0.0
    %3818 = vmatprep.subr.mxu0 0.0
    %3819 = vmatpush1.msra.mxu0 0.0
    %3820 = vmatprep.subr.mxu0 0.0
    %3821 = vmatpush1.msra.mxu0 0.0
    %3822 = vmatprep.subr.mxu0 0.0
    %3823 = vmatpush1.msra.mxu0 0.0
    %3824 = vmatprep.subr.mxu0 0.0
    %3825 = vmatpush1.msra.mxu0 0.0
    %3826 = vmatprep.subr.mxu0 0.0
    %3827 = vmatpush1.msra.mxu0 0.0
    %3828 = vmatprep.subr.mxu0 0.0
    %3829 = vmatpush1.msra.mxu0 0.0
    %3830 = vmatprep.subr.mxu0 0.0
    %3831 = vmatpush1.msra.mxu0 0.0
    %3832 = vmatprep.subr.mxu0 0.0
    %3833 = vmatpush1.msra.mxu0 0.0
    %3834 = vmatprep.subr.mxu0 0.0
    %3835 = vmatpush1.msra.mxu0 0.0
    %3836 = vmatprep.subr.mxu0 0.0
    %3837 = vmatpush1.msra.mxu0 0.0
    %3838 = vmatprep.subr.mxu0 0.0
    %3839 = vmatpush1.msra.mxu0 0.0
    %3840 = vmatprep.subr.mxu0 0.0
    %3841 = vmatpush1.msra.mxu0 0.0
    %3842 = vmatprep.subr.mxu0 0.0
    %3843 = vmatpush1.msra.mxu0 0.0
    %3844 = vmatprep.subr.mxu0 0.0
    %3845 = vmatpush1.msra.mxu0 0.0
    %3846 = vmatprep.subr.mxu0 0.0
    %3847 = vmatpush1.msra.mxu0 0.0
    %3848 = vmatprep.subr.mxu0 0.0
    %3849 = vmatpush1.msra.mxu0 0.0
    %3850 = vmatprep.subr.mxu0 0.0
    %3851 = vmatpush1.msra.mxu0 0.0
    %3852 = vmatprep.subr.mxu0 0.0
    %3853 = vmatpush1.msra.mxu0 0.0
    %3854 = vmatprep.mubr.f32.mxu0 0.0
    %3855 = vmatmul.mubr.f32.gmra.mrb[0].mxu0 %v3788
    %v3856 = vpop.f32.mrb[0].mxu0
    %v3857 = vadd.f32 %v3786, %v3856
    %v3858 = vpop.f32.mrb[0].mxu0
    %3859 = vdwg.mxu0
    %3860 = vst [vmem:[#allocation2] sm:$0xff] %v3857
    // Predicated region
    $region46: #{tpu_custom_call.1} parent=1 // pred_check
      _
    $region47: #{tpu_custom_call.1} parent=1 // pred_check_branch
      %3862 = sbr.rel (0) target = $region49
    $region48: #{tpu_custom_call.1} parent=1 // pred_region
      %s3864 = ssub.s32 128, 128
      %3865 = vsyncadd [#allocation3], %s3864
      %s3867 = sshll.u32 [#allocation2], 4
      %s3868 = int_to_ptr.vmem [resolvable:$true] %s3867
      %3870 = dma.vmem_to_hbm [thread:$0]  %s3868, 128, %s11, [#allocation3]
    $region49: #{tpu_custom_call.1} parent=1 // pred_fallthru
      _
    // Predicated region
    $region50: #{tpu_custom_call.1} parent=1 // pred_check
      _
    $region51: #{tpu_custom_call.1} parent=1 // pred_check_branch
      %3872 = sbr.rel (0) target = $region53
    $region52: #{tpu_custom_call.1} parent=1 // pred_region
      %3873 = dma.done [#allocation3], 128
    $region53: #{tpu_custom_call.1} parent=1 // pred_fallthru
      _
    %3874 = vsyncpa [#allocation3], 1

</llo_original>
